<compile_context>
chip_gen: v7x
topology: tpu7x:2x2x1
jax: 0.10.0
libtpu: 0.0.40
codegen_flags: <defaults>
</compile_context>

<pallas_src>
import functools

import numpy as np
import jax
import jax.numpy as jnp
from jax.experimental import pallas as pl
from jax.experimental.pallas import tpu as pltpu

EPS = 1e-5
HIDDEN = 1000        # fixed by the module definition
HIDDEN_PAD = 1024    # padded to a multiple of 128 for clean vreg layouts


def _make_kernel(apply_sigmoid: bool):
    def kernel(x_ref, w1_ref, b1_ref, w2_ref, b2_ref, w3_ref, b3_ref, o_ref):
        # fc1 (bn1 folded into rows, bn2 into columns) -> relu
        h = jnp.dot(x_ref[...].astype(jnp.bfloat16), w1_ref[...],
                    preferred_element_type=jnp.float32) + b1_ref[...]
        h = jnp.maximum(h, 0.0)

        # fc2 (bn3 folded into columns) -> relu   (dominant MXU work)
        h = jnp.dot(h.astype(jnp.bfloat16), w2_ref[...],
                    preferred_element_type=jnp.float32) + b2_ref[...]
        h = jnp.maximum(h, 0.0)

        # fc3: 1-wide output -> VPU multiply + lane reduce instead of MXU matmul.
        y = jnp.sum(h * w3_ref[...], axis=-1, keepdims=True) + b3_ref[...]
        if apply_sigmoid:  # static Python bool, resolved at trace time
            y = jax.nn.sigmoid(y)
        o_ref[...] = y.astype(o_ref.dtype)

    return kernel


def _fold_params(params):
    """Fold eval-mode BatchNorms into the Linear layers, pad HIDDEN -> 1024."""
    def bn_scale_shift(p):
        g, b, m, v = p
        s = g / jnp.sqrt(v + EPS)
        t = b - m * s
        return s, t

    s1, t1 = bn_scale_shift(params["bn1"])
    s2, t2 = bn_scale_shift(params["bn2"])
    s3, t3 = bn_scale_shift(params["bn3"])
    w1, b1 = params["fc1"]   # (F, 1000), (1000,)
    w2, b2 = params["fc2"]   # (1000, 1000), (1000,)
    w3, b3 = params["fc3"]   # (1000, 1), (1,)

    w1f = (s1[:, None] * w1) * s2[None, :]
    b1f = (t1 @ w1 + b1) * s2 + t2
    w2f = w2 * s3[None, :]
    b2f = b2 * s3 + t3

    pad = HIDDEN_PAD - HIDDEN
    w1f = jnp.pad(w1f, ((0, 0), (0, pad)))          # (F, 1024)
    b1f = jnp.pad(b1f, ((0, pad),))                 # (1024,)
    w2f = jnp.pad(w2f, ((0, pad), (0, pad)))        # (1024, 1024)
    b2f = jnp.pad(b2f, ((0, pad),))                 # (1024,)
    w3r = jnp.pad(w3[:, 0], ((0, pad),))            # (1024,)

    return (w1f.astype(jnp.bfloat16),
            b1f[None, :].astype(jnp.float32),
            w2f.astype(jnp.bfloat16),
            b2f[None, :].astype(jnp.float32),
            w3r[None, :].astype(jnp.float32),
            b3.reshape(1, 1).astype(jnp.float32))


@functools.partial(jax.jit, static_argnames=("apply_sigmoid",))
def tfmlp_forward(x_in, params, apply_sigmoid=False):
    """x_in: (B, ...) — flattened to (B, feat) like torch.flatten(start_dim=1)."""
    B = x_in.shape[0]
    x = x_in.reshape(B, -1).astype(jnp.float32)
    F = x.shape[1]

    w1f, b1f, w2f, b2f, w3r, b3 = _fold_params(params)

    # Batch tiling: weights stay VMEM-resident (constant block index); the
    # batch axis is "parallel" so megacore chips split the rows across cores.
    if B >= 1024:
        TB = 512            # per-step fc2 compute >> per-step grid overhead
    elif B >= 256:
        TB = 256
    else:
        TB = max(8, ((B + 7) // 8) * 8)   # whole (sublane-padded) batch, grid=1
    B_pad = pl.cdiv(B, TB) * TB
    if B_pad != B:
        x = jnp.pad(x, ((0, B_pad - B), (0, 0)))

    out = pl.pallas_call(
        _make_kernel(apply_sigmoid),
        out_shape=jax.ShapeDtypeStruct((B_pad, 1), jnp.float32),
        grid_spec=pltpu.PrefetchScalarGridSpec(
            num_scalar_prefetch=0,
            grid=(B_pad // TB,),
            in_specs=[
                pl.BlockSpec((TB, F), lambda i: (i, 0)),                  # x
                pl.BlockSpec((F, HIDDEN_PAD), lambda i: (0, 0)),          # W1'
                pl.BlockSpec((1, HIDDEN_PAD), lambda i: (0, 0)),          # b1'
                pl.BlockSpec((HIDDEN_PAD, HIDDEN_PAD), lambda i: (0, 0)), # W2'
                pl.BlockSpec((1, HIDDEN_PAD), lambda i: (0, 0)),          # b2'
                pl.BlockSpec((1, HIDDEN_PAD), lambda i: (0, 0)),          # w3 row
                pl.BlockSpec((1, 1), lambda i: (0, 0)),                   # b3
            ],
            out_specs=pl.BlockSpec((TB, 1), lambda i: (i, 0)),
        ),
        compiler_params=pltpu.CompilerParams(
            dimension_semantics=("parallel",),
            vmem_limit_bytes=32 << 20,
        ),
    )(x, w1f, b1f, w2f, b2f, w3r, b3)
    return out[:B]


def init_params(key, feat):
    ks = jax.random.split(key, 18)

    def linear(kw, kb, fan_in, fan_out):
        lim = 1.0 / np.sqrt(fan_in)
        w = jax.random.uniform(kw, (fan_in, fan_out), jnp.float32, -lim, lim)
        b = jax.random.uniform(kb, (fan_out,), jnp.float32, -lim, lim)
        return w, b

    def bn(kg, kb, km, kv, n):
        gamma = 1.0 + 0.1 * jax.random.normal(kg, (n,), jnp.float32)
        beta = 0.1 * jax.random.normal(kb, (n,), jnp.float32)
        mean = 0.1 * jax.random.normal(km, (n,), jnp.float32)
        var = jnp.abs(0.5 + 0.1 * jax.random.normal(kv, (n,), jnp.float32))
        return gamma, beta, mean, var

    return {
        "bn1": bn(ks[0], ks[1], ks[2], ks[3], feat),
        "fc1": linear(ks[4], ks[5], feat, HIDDEN),
        "bn2": bn(ks[6], ks[7], ks[8], ks[9], HIDDEN),
        "fc2": linear(ks[10], ks[11], HIDDEN, HIDDEN),
        "bn3": bn(ks[12], ks[13], ks[14], ks[15], HIDDEN),
        "fc3": linear(ks[16], ks[17], HIDDEN, 1),
    }


def reference_forward(x_in, params, apply_sigmoid=False):
    """Pure-JAX fp32 reference of the original (un-folded, un-padded) module."""
    B = x_in.shape[0]
    x = x_in.reshape(B, -1).astype(jnp.float32)

    def bn(h, p):
        g, b, m, v = p
        return (h - m) / jnp.sqrt(v + EPS) * g + b

    h = bn(x, params["bn1"])
    h = jnp.maximum(bn(h @ params["fc1"][0] + params["fc1"][1], params["bn2"]), 0.0)
    h = jnp.maximum(bn(h @ params["fc2"][0] + params["fc2"][1], params["bn3"]), 0.0)
    y = h @ params["fc3"][0] + params["fc3"][1]
    if apply_sigmoid:
        y = jax.nn.sigmoid(y)
    return y


if __name__ == "__main__":
    key = jax.random.PRNGKey(0)
    k_x, k_p = jax.random.split(key)

    # args.feat_size[1] == 32 ; input flattens (8, 4, 8) -> (8, 32)
    B, C, S = 8, 4, 8
    x_in = jax.random.normal(k_x, (B, C, S), jnp.float32)
    params = init_params(k_p, C * S)

    y = tfmlp_forward(x_in, params, apply_sigmoid=True)
    y = jax.block_until_ready(y)

    y_ref = reference_forward(x_in, params, apply_sigmoid=True)
    assert y.shape == (B, 1)
    # bf16 weights vs fp32 reference -> loosened tolerance (post-sigmoid error ~1e-3)
    np.testing.assert_allclose(np.asarray(y), np.asarray(y_ref), rtol=1e-2, atol=1e-2)

    print("KERNEL_OK")
</pallas_src>

<mosaic_0001>
module attributes {stable_mosaic.version = 11 : i64} {
  func.func @kernel(%arg0: i32, %arg1: memref<8x32xf32, #tpu.memory_space<vmem>>, %arg2: memref<32x1024xbf16, #tpu.memory_space<vmem>>, %arg3: memref<1x1024xf32, #tpu.memory_space<vmem>>, %arg4: memref<1024x1024xbf16, #tpu.memory_space<vmem>>, %arg5: memref<1x1024xf32, #tpu.memory_space<vmem>>, %arg6: memref<1x1024xf32, #tpu.memory_space<vmem>>, %arg7: memref<1x1xf32, #tpu.memory_space<vmem>>, %arg8: memref<8x1xf32, #tpu.memory_space<vmem>>) attributes {dimension_semantics = [#tpu.dimension_semantics<parallel>], iteration_bounds = array<i64: 1>, scalar_prefetch = 0 : i64, scratch_operands = 0 : i64, tpu.core_type = #tpu.core_type<tc>, window_params = [{transform_indices = @transform_0, window_bounds = array<i64: 8, 32>}, {pipeline_mode = #tpu.pipeline_mode<synchronous>, transform_indices = @transform_1, window_bounds = array<i64: 32, 1024>}, {pipeline_mode = #tpu.pipeline_mode<synchronous>, transform_indices = @transform_2, window_bounds = array<i64: 1, 1024>}, {pipeline_mode = #tpu.pipeline_mode<synchronous>, transform_indices = @transform_3, window_bounds = array<i64: 1024, 1024>}, {pipeline_mode = #tpu.pipeline_mode<synchronous>, transform_indices = @transform_4, window_bounds = array<i64: 1, 1024>}, {pipeline_mode = #tpu.pipeline_mode<synchronous>, transform_indices = @transform_5, window_bounds = array<i64: 1, 1024>}, {pipeline_mode = #tpu.pipeline_mode<synchronous>, transform_indices = @transform_6, window_bounds = array<i64: 1, 1>}, {transform_indices = @transform_7, window_bounds = array<i64: 8, 1>}]} {
    %c0 = arith.constant 0 : index
    %c0_0 = arith.constant 0 : index
    %0 = vector.load %arg1[%c0, %c0_0] : memref<8x32xf32, #tpu.memory_space<vmem>>, vector<8x32xf32>
    %1 = arith.truncf %0 : vector<8x32xf32> to vector<8x32xbf16>
    %c0_1 = arith.constant 0 : index
    %c0_2 = arith.constant 0 : index
    %2 = vector.load %arg2[%c0_1, %c0_2] : memref<32x1024xbf16, #tpu.memory_space<vmem>>, vector<32x1024xbf16>
    %cst = arith.constant dense<0.000000e+00> : vector<8x1024xf32>
    %3 = tpu.matmul %1, %2, %cst {dimension_numbers = #tpu.dot_dimension_numbers<[1], [0], [0], [1], [0, 0, 1, 1], [], []>} : vector<8x32xbf16>, vector<32x1024xbf16>, vector<8x1024xf32> -> vector<8x1024xf32>
    %c0_3 = arith.constant 0 : index
    %c0_4 = arith.constant 0 : index
    %4 = vector.load %arg3[%c0_3, %c0_4] : memref<1x1024xf32, #tpu.memory_space<vmem>>, vector<1x1024xf32>
    %5 = vector.broadcast %4 : vector<1x1024xf32> to vector<8x1024xf32>
    %6 = arith.addf %3, %5 : vector<8x1024xf32>
    %cst_5 = arith.constant 0.000000e+00 : f32
    %7 = vector.broadcast %cst_5 : f32 to vector<8x1024xf32>
    %8 = arith.maximumf %6, %7 : vector<8x1024xf32>
    %9 = arith.truncf %8 : vector<8x1024xf32> to vector<8x1024xbf16>
    %c0_6 = arith.constant 0 : index
    %c0_7 = arith.constant 0 : index
    %10 = vector.load %arg4[%c0_6, %c0_7] : memref<1024x1024xbf16, #tpu.memory_space<vmem>>, vector<1024x1024xbf16>
    %cst_8 = arith.constant dense<0.000000e+00> : vector<8x1024xf32>
    %11 = tpu.matmul %9, %10, %cst_8 {dimension_numbers = #tpu.dot_dimension_numbers<[1], [0], [0], [1], [0, 0, 1, 1], [], []>} : vector<8x1024xbf16>, vector<1024x1024xbf16>, vector<8x1024xf32> -> vector<8x1024xf32>
    %c0_9 = arith.constant 0 : index
    %c0_10 = arith.constant 0 : index
    %12 = vector.load %arg5[%c0_9, %c0_10] : memref<1x1024xf32, #tpu.memory_space<vmem>>, vector<1x1024xf32>
    %13 = vector.broadcast %12 : vector<1x1024xf32> to vector<8x1024xf32>
    %14 = arith.addf %11, %13 : vector<8x1024xf32>
    %cst_11 = arith.constant 0.000000e+00 : f32
    %15 = vector.broadcast %cst_11 : f32 to vector<8x1024xf32>
    %16 = arith.maximumf %14, %15 : vector<8x1024xf32>
    %c0_12 = arith.constant 0 : index
    %c0_13 = arith.constant 0 : index
    %17 = vector.load %arg6[%c0_12, %c0_13] : memref<1x1024xf32, #tpu.memory_space<vmem>>, vector<1x1024xf32>
    %18 = vector.broadcast %17 : vector<1x1024xf32> to vector<8x1024xf32>
    %19 = arith.mulf %16, %18 : vector<8x1024xf32>
    %cst_14 = arith.constant dense<0.000000e+00> : vector<8xf32>
    %20 = vector.multi_reduction <add>, %19, %cst_14 [1] : vector<8x1024xf32> to vector<8xf32>
    %21 = vector.shape_cast %20 : vector<8xf32> to vector<8x1xf32>
    %c0_15 = arith.constant 0 : index
    %c0_16 = arith.constant 0 : index
    %22 = vector.load %arg7[%c0_15, %c0_16] : memref<1x1xf32, #tpu.memory_space<vmem>>, vector<1x1xf32>
    %23 = vector.broadcast %22 : vector<1x1xf32> to vector<8x1xf32>
    %24 = arith.addf %21, %23 : vector<8x1xf32>
    %25 = arith.negf %24 : vector<8x1xf32>
    %26 = math.exp %25 : vector<8x1xf32>
    %cst_17 = arith.constant 1.000000e+00 : f32
    %27 = vector.broadcast %cst_17 : f32 to vector<8x1xf32>
    %28 = arith.addf %27, %26 : vector<8x1xf32>
    %29 = arith.divf %27, %28 : vector<8x1xf32>
    %c0_18 = arith.constant 0 : index
    %c0_19 = arith.constant 0 : index
    %30 = vector.load %arg8[%c0_18, %c0_19] : memref<8x1xf32, #tpu.memory_space<vmem>>, vector<8x1xf32>
    tpu.vector_store %arg8[%c0_18, %c0_19], %29 {strides = array<i32>} : memref<8x1xf32, #tpu.memory_space<vmem>>, vector<8x1xf32>,
    return
  }
  func.func @transform_0(%arg0: i32) -> (i32, i32) {
    %c0_i32 = arith.constant 0 : i32
    %c0_i32_0 = arith.constant 0 : i32
    return %arg0, %c0_i32 : i32, i32
  }
  func.func @transform_1(%arg0: i32) -> (i32, i32) {
    %c0_i32 = arith.constant 0 : i32
    %c0_i32_0 = arith.constant 0 : i32
    %c0_i32_1 = arith.constant 0 : i32
    return %c0_i32, %c0_i32_0 : i32, i32
  }
  func.func @transform_2(%arg0: i32) -> (i32, i32) {
    %c0_i32 = arith.constant 0 : i32
    %c0_i32_0 = arith.constant 0 : i32
    %c0_i32_1 = arith.constant 0 : i32
    return %c0_i32, %c0_i32_0 : i32, i32
  }
  func.func @transform_3(%arg0: i32) -> (i32, i32) {
    %c0_i32 = arith.constant 0 : i32
    %c0_i32_0 = arith.constant 0 : i32
    %c0_i32_1 = arith.constant 0 : i32
    return %c0_i32, %c0_i32_0 : i32, i32
  }
  func.func @transform_4(%arg0: i32) -> (i32, i32) {
    %c0_i32 = arith.constant 0 : i32
    %c0_i32_0 = arith.constant 0 : i32
    %c0_i32_1 = arith.constant 0 : i32
    return %c0_i32, %c0_i32_0 : i32, i32
  }
  func.func @transform_5(%arg0: i32) -> (i32, i32) {
    %c0_i32 = arith.constant 0 : i32
    %c0_i32_0 = arith.constant 0 : i32
    %c0_i32_1 = arith.constant 0 : i32
    return %c0_i32, %c0_i32_0 : i32, i32
  }
  func.func @transform_6(%arg0: i32) -> (i32, i32) {
    %c0_i32 = arith.constant 0 : i32
    %c0_i32_0 = arith.constant 0 : i32
    %c0_i32_1 = arith.constant 0 : i32
    return %c0_i32, %c0_i32_0 : i32, i32
  }
  func.func @transform_7(%arg0: i32) -> (i32, i32) {
    %c0_i32 = arith.constant 0 : i32
    %c0_i32_0 = arith.constant 0 : i32
    return %arg0, %c0_i32 : i32, i32
  }
}

</mosaic_0001>

<llo_original>
// kernel: tfmlp_forward.1
$region0: #{tfmlp_forward.1}
  #allocation0 [shape = 'u32[]', space=smem, size = 0x4, offset = 0x4, fixed_abs, tag = 'smem constant byte address 0x4 - core index']
  #allocation1 [shape = 'u32[144,128]{1,0:T(1,128)}', space=vmem, size = 0x12000, scoped, tag = 'internal scratch']
  #allocation2 [shape = 'f32[1,1]{1,0:T(1,128)S(1)}', space=vmem, size = 0x200, scoped, tag = 'scoped memory for tfmlp_forward.1']
  %s0 = inlined_call_operand.vmem [shape: f32[8,32], index: 0, kind: input, shape index: {}]
  %s1 = inlined_call_operand.vmem [shape: bf16[32,1024], index: 1, kind: input, shape index: {}]
  %s2 = inlined_call_operand.vmem [shape: f32[1,1024], index: 2, kind: input, shape index: {}]
  %s3 = inlined_call_operand.vmem [shape: bf16[1024,1024], index: 3, kind: input, shape index: {}]
  %s4 = inlined_call_operand.vmem [shape: f32[1,1024], index: 4, kind: input, shape index: {}]
  %s5 = inlined_call_operand.vmem [shape: f32[1,1024], index: 5, kind: input, shape index: {}]
  %s6 = inlined_call_operand.<no memory space> [shape: f32[1,1], index: 6, kind: input, shape index: {}]
  %s7 = inlined_call_operand.vmem [shape: f32[8,1], index: 7, kind: output, shape index: {}]
  %s8 = sld [smem:[#allocation0]]
  $region38: #{tfmlp_forward.1} parent=0
    _
  %s10 = ssub.s32 1, %s8
  %s11 = scalar_select 0, %s10, %s8
  %v12 = vstv %s6
  %13 = vst [vmem:[#allocation2] sm:$0x1] %v12
  // Predicated region
  $region2: #{tfmlp_forward.1} parent=0 // pred_check
    _
  $region3: #{tfmlp_forward.1} parent=0 // pred_check_branch
    %15 = sbr.rel (0) target = $region5
  $region4: #{tfmlp_forward.1} parent=0 // pred_region
    _
  $region5: #{tfmlp_forward.1} parent=0 // pred_fallthru
    _
  // Predicated region
  $region6: #{tfmlp_forward.1} parent=0 // pred_check
    _
  $region7: #{tfmlp_forward.1} parent=0 // pred_check_branch
    %17 = sbr.rel (0) target = $region9
  $region8: #{tfmlp_forward.1} parent=0 // pred_region
    _
  $region9: #{tfmlp_forward.1} parent=0 // pred_fallthru
    _
  // Predicated region
  $region10: #{tfmlp_forward.1} parent=0 // pred_check
    _
  $region11: #{tfmlp_forward.1} parent=0 // pred_check_branch
    %19 = sbr.rel (0) target = $region13
  $region12: #{tfmlp_forward.1} parent=0 // pred_region
    _
  $region13: #{tfmlp_forward.1} parent=0 // pred_fallthru
    _
  // Predicated region
  $region14: #{tfmlp_forward.1} parent=0 // pred_check
    _
  $region15: #{tfmlp_forward.1} parent=0 // pred_check_branch
    %21 = sbr.rel (0) target = $region17
  $region16: #{tfmlp_forward.1} parent=0 // pred_region
    _
  $region17: #{tfmlp_forward.1} parent=0 // pred_fallthru
    _
  // Predicated region
  $region18: #{tfmlp_forward.1} parent=0 // pred_check
    _
  $region19: #{tfmlp_forward.1} parent=0 // pred_check_branch
    %23 = sbr.rel (0) target = $region21
  $region20: #{tfmlp_forward.1} parent=0 // pred_region
    _
  $region21: #{tfmlp_forward.1} parent=0 // pred_fallthru
    _
  // Predicated region
  $region22: #{tfmlp_forward.1} parent=0 // pred_check
    _
  $region23: #{tfmlp_forward.1} parent=0 // pred_check_branch
    %25 = sbr.rel (0) target = $region25
  $region24: #{tfmlp_forward.1} parent=0 // pred_region
    _
  $region25: #{tfmlp_forward.1} parent=0 // pred_fallthru
    _
  // Predicated region
  $region26: #{tfmlp_forward.1} parent=0 // pred_check
    _
  $region27: #{tfmlp_forward.1} parent=0 // pred_check_branch
    %27 = sbr.rel (0) target = $region29
  $region28: #{tfmlp_forward.1} parent=0 // pred_region
    _
  $region29: #{tfmlp_forward.1} parent=0 // pred_fallthru
    _
  %v29 = vld [vmem:[%s0] sm:$0xff]
  %v30 = vpack.c.bf16 %v29, %v29
  %v31 = vld [vmem:[%s1] sm:$0xff]
  %v32 = vld [vmem:[%s1 + $0x8] sm:$0xff]
  %v33 = vld [vmem:[%s1 + $0x10] sm:$0xff]
  %v34 = vld [vmem:[%s1 + $0x18] sm:$0xff]
  %v35 = vld [vmem:[%s1 + $0x20] sm:$0xff]
  %v36 = vld [vmem:[%s1 + $0x28] sm:$0xff]
  %v37 = vld [vmem:[%s1 + $0x30] sm:$0xff]
  %v38 = vld [vmem:[%s1 + $0x38] sm:$0xff]
  %v39 = vld [vmem:[%s1 + $0x40] sm:$0xff]
  %v40 = vld [vmem:[%s1 + $0x48] sm:$0xff]
  %v41 = vld [vmem:[%s1 + $0x50] sm:$0xff]
  %v42 = vld [vmem:[%s1 + $0x58] sm:$0xff]
  %v43 = vld [vmem:[%s1 + $0x60] sm:$0xff]
  %v44 = vld [vmem:[%s1 + $0x68] sm:$0xff]
  %v45 = vld [vmem:[%s1 + $0x70] sm:$0xff]
  %v46 = vld [vmem:[%s1 + $0x78] sm:$0xff]
  %v47 = vld [vmem:[%s2] sm:$0xff]
  %v49 = vlaneseq
  %v50 = vshrl.u32 %v49, 7
  %v51 = vsub.s32 0, %v50
  %v52 = vrot.slane %v47, %v51
  %v53 = vlaneseq
  %v54 = vshrl.u32 %v53, 7
  %v55 = vsub.s32 1, %v54
  %v56 = vrot.slane %v47, %v55
  %v57 = vlaneseq
  %v58 = vshrl.u32 %v57, 7
  %v59 = vsub.s32 2, %v58
  %v60 = vrot.slane %v47, %v59
  %v61 = vlaneseq
  %v62 = vshrl.u32 %v61, 7
  %v63 = vsub.s32 3, %v62
  %v64 = vrot.slane %v47, %v63
  %v65 = vlaneseq
  %v66 = vshrl.u32 %v65, 7
  %v67 = vsub.s32 4, %v66
  %v68 = vrot.slane %v47, %v67
  %v69 = vlaneseq
  %v70 = vshrl.u32 %v69, 7
  %v71 = vsub.s32 5, %v70
  %v72 = vrot.slane %v47, %v71
  %v73 = vlaneseq
  %v74 = vshrl.u32 %v73, 7
  %v75 = vsub.s32 6, %v74
  %v76 = vrot.slane %v47, %v75
  %v77 = vlaneseq
  %v78 = vshrl.u32 %v77, 7
  %v79 = vsub.s32 7, %v78
  %v80 = vrot.slane %v47, %v79
  %v105 = vunpack.c.l.b16 %v31
  %v106 = vunpack.c.h.b16 %v31
  %v107 = vunpack.c.l.b16 %v32
  %v108 = vunpack.c.h.b16 %v32
  %v109 = vunpack.c.l.b16 %v33
  %v110 = vunpack.c.h.b16 %v33
  %v111 = vunpack.c.l.b16 %v34
  %v112 = vunpack.c.h.b16 %v34
  %v113 = vunpack.c.l.b16 %v35
  %v114 = vunpack.c.h.b16 %v35
  %v115 = vunpack.c.l.b16 %v36
  %v116 = vunpack.c.h.b16 %v36
  %v117 = vunpack.c.l.b16 %v37
  %v118 = vunpack.c.h.b16 %v37
  %v119 = vunpack.c.l.b16 %v38
  %v120 = vunpack.c.h.b16 %v38
  %v121 = vunpack.c.l.b16 %v39
  %v122 = vunpack.c.h.b16 %v39
  %v123 = vunpack.c.l.b16 %v40
  %v124 = vunpack.c.h.b16 %v40
  %v125 = vunpack.c.l.b16 %v41
  %v126 = vunpack.c.h.b16 %v41
  %v127 = vunpack.c.l.b16 %v42
  %v128 = vunpack.c.h.b16 %v42
  %v129 = vunpack.c.l.b16 %v43
  %v130 = vunpack.c.h.b16 %v43
  %v131 = vunpack.c.l.b16 %v44
  %v132 = vunpack.c.h.b16 %v44
  %v133 = vunpack.c.l.b16 %v45
  %v134 = vunpack.c.h.b16 %v45
  %v135 = vunpack.c.l.b16 %v46
  %v136 = vunpack.c.h.b16 %v46
  %v137 = vpack.c.b16 %v113, %v105
  %v138 = vpack.c.b16 %v114, %v106
  %v139 = vpack.c.b16 %v115, %v107
  %v140 = vpack.c.b16 %v116, %v108
  %v141 = vpack.c.b16 %v117, %v109
  %v142 = vpack.c.b16 %v118, %v110
  %v143 = vpack.c.b16 %v119, %v111
  %v144 = vpack.c.b16 %v120, %v112
  %v145 = vpack.c.b16 %v129, %v121
  %v146 = vpack.c.b16 %v130, %v122
  %v147 = vpack.c.b16 %v131, %v123
  %v148 = vpack.c.b16 %v132, %v124
  %v149 = vpack.c.b16 %v133, %v125
  %v150 = vpack.c.b16 %v134, %v126
  %v151 = vpack.c.b16 %v135, %v127
  %v152 = vpack.c.b16 %v136, %v128
  %vm169 = vcmask 261120
  %v171 = vsel %vm169, %v30, 0
  %173 = vmatprep.subr.bf16.mxu0 %v138
  %174 = vmatpush1.bf16.msra.mxu0 %v137
  %175 = vmatprep.subr.bf16.mxu0 %v146
  %176 = vmatpush1.bf16.msra.mxu0 %v145
  %177 = vmatprep.subr.bf16.mxu0 0
  %178 = vmatpush1.bf16.msra.mxu0 0
  %179 = vmatprep.subr.bf16.mxu0 0
  %180 = vmatpush1.bf16.msra.mxu0 0
  %181 = vmatprep.subr.bf16.mxu0 0
  %182 = vmatpush1.bf16.msra.mxu0 0
  %183 = vmatprep.subr.bf16.mxu0 0
  %184 = vmatpush1.bf16.msra.mxu0 0
  %185 = vmatprep.subr.bf16.mxu0 0
  %186 = vmatpush1.bf16.msra.mxu0 0
  %187 = vmatprep.subr.bf16.mxu0 0
  %188 = vmatpush1.bf16.msra.mxu0 0
  %189 = vmatprep.subr.bf16.mxu0 0
  %190 = vmatpush1.bf16.msra.mxu0 0
  %191 = vmatprep.subr.bf16.mxu0 0
  %192 = vmatpush1.bf16.msra.mxu0 0
  %193 = vmatprep.subr.bf16.mxu0 0
  %194 = vmatpush1.bf16.msra.mxu0 0
  %195 = vmatprep.subr.bf16.mxu0 0
  %196 = vmatpush1.bf16.msra.mxu0 0
  %197 = vmatprep.subr.bf16.mxu0 0
  %198 = vmatpush1.bf16.msra.mxu0 0
  %199 = vmatprep.subr.bf16.mxu0 0
  %200 = vmatpush1.bf16.msra.mxu0 0
  %201 = vmatprep.subr.bf16.mxu0 0
  %202 = vmatpush1.bf16.msra.mxu0 0
  %203 = vmatprep.subr.bf16.mxu0 0
  %204 = vmatpush1.bf16.msra.mxu0 0
  %205 = vmatprep.mubr.bf16.mxu0 0
  %206 = vmatmul.mubr.bf16.gmra.mrb[0].mxu0 %v171
  %v207 = vpop.f32.mrb[0].mxu0
  %v208 = vadd.f32 %v52, %v207
  %v209 = vpop.f32.mrb[0].mxu0
  %v210 = vadd.f32 %v56, %v209
  %v211 = vpop.f32.mrb[0].mxu0
  %v212 = vpop.f32.mrb[0].mxu0
  %213 = vdwg.mxu0
  %214 = vmatprep.subr.bf16.mxu0 %v140
  %215 = vmatpush1.bf16.msra.mxu0 %v139
  %216 = vmatprep.subr.bf16.mxu0 %v148
  %217 = vmatpush1.bf16.msra.mxu0 %v147
  %218 = vmatprep.subr.bf16.mxu0 0
  %219 = vmatpush1.bf16.msra.mxu0 0
  %220 = vmatprep.subr.bf16.mxu0 0
  %221 = vmatpush1.bf16.msra.mxu0 0
  %222 = vmatprep.subr.bf16.mxu0 0
  %223 = vmatpush1.bf16.msra.mxu0 0
  %224 = vmatprep.subr.bf16.mxu0 0
  %225 = vmatpush1.bf16.msra.mxu0 0
  %226 = vmatprep.subr.bf16.mxu0 0
  %227 = vmatpush1.bf16.msra.mxu0 0
  %228 = vmatprep.subr.bf16.mxu0 0
  %229 = vmatpush1.bf16.msra.mxu0 0
  %230 = vmatprep.subr.bf16.mxu0 0
  %231 = vmatpush1.bf16.msra.mxu0 0
  %232 = vmatprep.subr.bf16.mxu0 0
  %233 = vmatpush1.bf16.msra.mxu0 0
  %234 = vmatprep.subr.bf16.mxu0 0
  %235 = vmatpush1.bf16.msra.mxu0 0
  %236 = vmatprep.subr.bf16.mxu0 0
  %237 = vmatpush1.bf16.msra.mxu0 0
  %238 = vmatprep.subr.bf16.mxu0 0
  %239 = vmatpush1.bf16.msra.mxu0 0
  %240 = vmatprep.subr.bf16.mxu0 0
  %241 = vmatpush1.bf16.msra.mxu0 0
  %242 = vmatprep.subr.bf16.mxu0 0
  %243 = vmatpush1.bf16.msra.mxu0 0
  %244 = vmatprep.subr.bf16.mxu0 0
  %245 = vmatpush1.bf16.msra.mxu0 0
  %246 = vmatprep.mubr.bf16.mxu0 0
  %247 = vmatmul.mubr.bf16.gmra.mrb[0].mxu0 %v171
  %v248 = vpop.f32.mrb[0].mxu0
  %v249 = vadd.f32 %v60, %v248
  %v250 = vpop.f32.mrb[0].mxu0
  %v251 = vadd.f32 %v64, %v250
  %v252 = vpop.f32.mrb[0].mxu0
  %v253 = vpop.f32.mrb[0].mxu0
  %254 = vdwg.mxu0
  %255 = vmatprep.subr.bf16.mxu0 %v142
  %256 = vmatpush1.bf16.msra.mxu0 %v141
  %257 = vmatprep.subr.bf16.mxu0 %v150
  %258 = vmatpush1.bf16.msra.mxu0 %v149
  %259 = vmatprep.subr.bf16.mxu0 0
  %260 = vmatpush1.bf16.msra.mxu0 0
  %261 = vmatprep.subr.bf16.mxu0 0
  %262 = vmatpush1.bf16.msra.mxu0 0
  %263 = vmatprep.subr.bf16.mxu0 0
  %264 = vmatpush1.bf16.msra.mxu0 0
  %265 = vmatprep.subr.bf16.mxu0 0
  %266 = vmatpush1.bf16.msra.mxu0 0
  %267 = vmatprep.subr.bf16.mxu0 0
  %268 = vmatpush1.bf16.msra.mxu0 0
  %269 = vmatprep.subr.bf16.mxu0 0
  %270 = vmatpush1.bf16.msra.mxu0 0
  %271 = vmatprep.subr.bf16.mxu0 0
  %272 = vmatpush1.bf16.msra.mxu0 0
  %273 = vmatprep.subr.bf16.mxu0 0
  %274 = vmatpush1.bf16.msra.mxu0 0
  %275 = vmatprep.subr.bf16.mxu0 0
  %276 = vmatpush1.bf16.msra.mxu0 0
  %277 = vmatprep.subr.bf16.mxu0 0
  %278 = vmatpush1.bf16.msra.mxu0 0
  %279 = vmatprep.subr.bf16.mxu0 0
  %280 = vmatpush1.bf16.msra.mxu0 0
  %281 = vmatprep.subr.bf16.mxu0 0
  %282 = vmatpush1.bf16.msra.mxu0 0
  %283 = vmatprep.subr.bf16.mxu0 0
  %284 = vmatpush1.bf16.msra.mxu0 0
  %285 = vmatprep.subr.bf16.mxu0 0
  %286 = vmatpush1.bf16.msra.mxu0 0
  %287 = vmatprep.mubr.bf16.mxu0 0
  %288 = vmatmul.mubr.bf16.gmra.mrb[0].mxu0 %v171
  %v289 = vpop.f32.mrb[0].mxu0
  %v290 = vadd.f32 %v68, %v289
  %v291 = vpop.f32.mrb[0].mxu0
  %v292 = vadd.f32 %v72, %v291
  %v293 = vpop.f32.mrb[0].mxu0
  %v294 = vpop.f32.mrb[0].mxu0
  %295 = vdwg.mxu0
  %296 = vmatprep.subr.bf16.mxu0 %v144
  %297 = vmatpush1.bf16.msra.mxu0 %v143
  %298 = vmatprep.subr.bf16.mxu0 %v152
  %299 = vmatpush1.bf16.msra.mxu0 %v151
  %300 = vmatprep.subr.bf16.mxu0 0
  %301 = vmatpush1.bf16.msra.mxu0 0
  %302 = vmatprep.subr.bf16.mxu0 0
  %303 = vmatpush1.bf16.msra.mxu0 0
  %304 = vmatprep.subr.bf16.mxu0 0
  %305 = vmatpush1.bf16.msra.mxu0 0
  %306 = vmatprep.subr.bf16.mxu0 0
  %307 = vmatpush1.bf16.msra.mxu0 0
  %308 = vmatprep.subr.bf16.mxu0 0
  %309 = vmatpush1.bf16.msra.mxu0 0
  %310 = vmatprep.subr.bf16.mxu0 0
  %311 = vmatpush1.bf16.msra.mxu0 0
  %312 = vmatprep.subr.bf16.mxu0 0
  %313 = vmatpush1.bf16.msra.mxu0 0
  %314 = vmatprep.subr.bf16.mxu0 0
  %315 = vmatpush1.bf16.msra.mxu0 0
  %316 = vmatprep.subr.bf16.mxu0 0
  %317 = vmatpush1.bf16.msra.mxu0 0
  %318 = vmatprep.subr.bf16.mxu0 0
  %319 = vmatpush1.bf16.msra.mxu0 0
  %320 = vmatprep.subr.bf16.mxu0 0
  %321 = vmatpush1.bf16.msra.mxu0 0
  %322 = vmatprep.subr.bf16.mxu0 0
  %323 = vmatpush1.bf16.msra.mxu0 0
  %324 = vmatprep.subr.bf16.mxu0 0
  %325 = vmatpush1.bf16.msra.mxu0 0
  %326 = vmatprep.subr.bf16.mxu0 0
  %327 = vmatpush1.bf16.msra.mxu0 0
  %328 = vmatprep.mubr.bf16.mxu0 0
  %329 = vmatmul.mubr.bf16.gmra.mrb[0].mxu0 %v171
  %v330 = vpop.f32.mrb[0].mxu0
  %v331 = vadd.f32 %v76, %v330
  %v332 = vpop.f32.mrb[0].mxu0
  %v333 = vadd.f32 %v80, %v332
  %v334 = vpop.f32.mrb[0].mxu0
  %v335 = vpop.f32.mrb[0].mxu0
  %336 = vdwg.mxu0
  %v337 = vmax.f32 %v208, 0.0
  %v338 = vmax.f32 %v210, 0.0
  %v339 = vmax.f32 %v249, 0.0
  %v340 = vmax.f32 %v251, 0.0
  %v341 = vmax.f32 %v290, 0.0
  %v342 = vmax.f32 %v292, 0.0
  %v343 = vmax.f32 %v331, 0.0
  %v344 = vmax.f32 %v333, 0.0
  %v345 = vpack.c.bf16 %v337, %v337
  %v346 = vpack.c.bf16 %v338, %v338
  %v347 = vpack.c.bf16 %v339, %v339
  %v348 = vpack.c.bf16 %v340, %v340
  %v349 = vpack.c.bf16 %v341, %v341
  %v350 = vpack.c.bf16 %v342, %v342
  %v351 = vpack.c.bf16 %v343, %v343
  %v352 = vpack.c.bf16 %v344, %v344
  %v353 = vld [vmem:[%s3] sm:$0xff]
  %v354 = vld [vmem:[%s3 + $0x8] sm:$0xff]
  %v355 = vld [vmem:[%s3 + $0x10] sm:$0xff]
  %v356 = vld [vmem:[%s3 + $0x18] sm:$0xff]
  %v357 = vld [vmem:[%s3 + $0x20] sm:$0xff]
  %v358 = vld [vmem:[%s3 + $0x28] sm:$0xff]
  %v359 = vld [vmem:[%s3 + $0x30] sm:$0xff]
  %v360 = vld [vmem:[%s3 + $0x38] sm:$0xff]
  %v361 = vld [vmem:[%s3 + $0x40] sm:$0xff]
  %v362 = vld [vmem:[%s3 + $0x48] sm:$0xff]
  %v363 = vld [vmem:[%s3 + $0x50] sm:$0xff]
  %v364 = vld [vmem:[%s3 + $0x58] sm:$0xff]
  %v365 = vld [vmem:[%s3 + $0x60] sm:$0xff]
  %v366 = vld [vmem:[%s3 + $0x68] sm:$0xff]
  %v367 = vld [vmem:[%s3 + $0x70] sm:$0xff]
  %v368 = vld [vmem:[%s3 + $0x78] sm:$0xff]
  %v369 = vld [vmem:[%s3 + $0x80] sm:$0xff]
  %v370 = vld [vmem:[%s3 + $0x88] sm:$0xff]
  %v371 = vld [vmem:[%s3 + $0x90] sm:$0xff]
  %v372 = vld [vmem:[%s3 + $0x98] sm:$0xff]
  %v373 = vld [vmem:[%s3 + $0xa0] sm:$0xff]
  %v374 = vld [vmem:[%s3 + $0xa8] sm:$0xff]
  %v375 = vld [vmem:[%s3 + $0xb0] sm:$0xff]
  %v376 = vld [vmem:[%s3 + $0xb8] sm:$0xff]
  %v377 = vld [vmem:[%s3 + $0xc0] sm:$0xff]
  %v378 = vld [vmem:[%s3 + $0xc8] sm:$0xff]
  %v379 = vld [vmem:[%s3 + $0xd0] sm:$0xff]
  %v380 = vld [vmem:[%s3 + $0xd8] sm:$0xff]
  %v381 = vld [vmem:[%s3 + $0xe0] sm:$0xff]
  %v382 = vld [vmem:[%s3 + $0xe8] sm:$0xff]
  %v383 = vld [vmem:[%s3 + $0xf0] sm:$0xff]
  %v384 = vld [vmem:[%s3 + $0xf8] sm:$0xff]
  %v385 = vld [vmem:[%s3 + $0x100] sm:$0xff]
  %v386 = vld [vmem:[%s3 + $0x108] sm:$0xff]
  %v387 = vld [vmem:[%s3 + $0x110] sm:$0xff]
  %v388 = vld [vmem:[%s3 + $0x118] sm:$0xff]
  %v389 = vld [vmem:[%s3 + $0x120] sm:$0xff]
  %v390 = vld [vmem:[%s3 + $0x128] sm:$0xff]
  %v391 = vld [vmem:[%s3 + $0x130] sm:$0xff]
  %v392 = vld [vmem:[%s3 + $0x138] sm:$0xff]
  %v393 = vld [vmem:[%s3 + $0x140] sm:$0xff]
  %v394 = vld [vmem:[%s3 + $0x148] sm:$0xff]
  %v395 = vld [vmem:[%s3 + $0x150] sm:$0xff]
  %v396 = vld [vmem:[%s3 + $0x158] sm:$0xff]
  %v397 = vld [vmem:[%s3 + $0x160] sm:$0xff]
  %v398 = vld [vmem:[%s3 + $0x168] sm:$0xff]
  %v399 = vld [vmem:[%s3 + $0x170] sm:$0xff]
  %v400 = vld [vmem:[%s3 + $0x178] sm:$0xff]
  %v401 = vld [vmem:[%s3 + $0x180] sm:$0xff]
  %v402 = vld [vmem:[%s3 + $0x188] sm:$0xff]
  %v403 = vld [vmem:[%s3 + $0x190] sm:$0xff]
  %v404 = vld [vmem:[%s3 + $0x198] sm:$0xff]
  %v405 = vld [vmem:[%s3 + $0x1a0] sm:$0xff]
  %v406 = vld [vmem:[%s3 + $0x1a8] sm:$0xff]
  %v407 = vld [vmem:[%s3 + $0x1b0] sm:$0xff]
  %v408 = vld [vmem:[%s3 + $0x1b8] sm:$0xff]
  %v409 = vld [vmem:[%s3 + $0x1c0] sm:$0xff]
  %v410 = vld [vmem:[%s3 + $0x1c8] sm:$0xff]
  %v411 = vld [vmem:[%s3 + $0x1d0] sm:$0xff]
  %v412 = vld [vmem:[%s3 + $0x1d8] sm:$0xff]
  %v413 = vld [vmem:[%s3 + $0x1e0] sm:$0xff]
  %v414 = vld [vmem:[%s3 + $0x1e8] sm:$0xff]
  %v415 = vld [vmem:[%s3 + $0x1f0] sm:$0xff]
  %v416 = vld [vmem:[%s3 + $0x1f8] sm:$0xff]
  %v417 = vld [vmem:[%s3 + $0x200] sm:$0xff]
  %v418 = vld [vmem:[%s3 + $0x208] sm:$0xff]
  %v419 = vld [vmem:[%s3 + $0x210] sm:$0xff]
  %v420 = vld [vmem:[%s3 + $0x218] sm:$0xff]
  %v421 = vld [vmem:[%s3 + $0x220] sm:$0xff]
  %v422 = vld [vmem:[%s3 + $0x228] sm:$0xff]
  %v423 = vld [vmem:[%s3 + $0x230] sm:$0xff]
  %v424 = vld [vmem:[%s3 + $0x238] sm:$0xff]
  %v425 = vld [vmem:[%s3 + $0x240] sm:$0xff]
  %v426 = vld [vmem:[%s3 + $0x248] sm:$0xff]
  %v427 = vld [vmem:[%s3 + $0x250] sm:$0xff]
  %v428 = vld [vmem:[%s3 + $0x258] sm:$0xff]
  %v429 = vld [vmem:[%s3 + $0x260] sm:$0xff]
  %v430 = vld [vmem:[%s3 + $0x268] sm:$0xff]
  %v431 = vld [vmem:[%s3 + $0x270] sm:$0xff]
  %v432 = vld [vmem:[%s3 + $0x278] sm:$0xff]
  %v433 = vld [vmem:[%s3 + $0x280] sm:$0xff]
  %v434 = vld [vmem:[%s3 + $0x288] sm:$0xff]
  %v435 = vld [vmem:[%s3 + $0x290] sm:$0xff]
  %v436 = vld [vmem:[%s3 + $0x298] sm:$0xff]
  %v437 = vld [vmem:[%s3 + $0x2a0] sm:$0xff]
  %v438 = vld [vmem:[%s3 + $0x2a8] sm:$0xff]
  %v439 = vld [vmem:[%s3 + $0x2b0] sm:$0xff]
  %v440 = vld [vmem:[%s3 + $0x2b8] sm:$0xff]
  %v441 = vld [vmem:[%s3 + $0x2c0] sm:$0xff]
  %v442 = vld [vmem:[%s3 + $0x2c8] sm:$0xff]
  %v443 = vld [vmem:[%s3 + $0x2d0] sm:$0xff]
  %v444 = vld [vmem:[%s3 + $0x2d8] sm:$0xff]
  %v445 = vld [vmem:[%s3 + $0x2e0] sm:$0xff]
  %v446 = vld [vmem:[%s3 + $0x2e8] sm:$0xff]
  %v447 = vld [vmem:[%s3 + $0x2f0] sm:$0xff]
  %v448 = vld [vmem:[%s3 + $0x2f8] sm:$0xff]
  %v449 = vld [vmem:[%s3 + $0x300] sm:$0xff]
  %v450 = vld [vmem:[%s3 + $0x308] sm:$0xff]
  %v451 = vld [vmem:[%s3 + $0x310] sm:$0xff]
  %v452 = vld [vmem:[%s3 + $0x318] sm:$0xff]
  %v453 = vld [vmem:[%s3 + $0x320] sm:$0xff]
  %v454 = vld [vmem:[%s3 + $0x328] sm:$0xff]
  %v455 = vld [vmem:[%s3 + $0x330] sm:$0xff]
  %v456 = vld [vmem:[%s3 + $0x338] sm:$0xff]
  %v457 = vld [vmem:[%s3 + $0x340] sm:$0xff]
  %v458 = vld [vmem:[%s3 + $0x348] sm:$0xff]
  %v459 = vld [vmem:[%s3 + $0x350] sm:$0xff]
  %v460 = vld [vmem:[%s3 + $0x358] sm:$0xff]
  %v461 = vld [vmem:[%s3 + $0x360] sm:$0xff]
  %v462 = vld [vmem:[%s3 + $0x368] sm:$0xff]
  %v463 = vld [vmem:[%s3 + $0x370] sm:$0xff]
  %v464 = vld [vmem:[%s3 + $0x378] sm:$0xff]
  %v465 = vld [vmem:[%s3 + $0x380] sm:$0xff]
  %v466 = vld [vmem:[%s3 + $0x388] sm:$0xff]
  %v467 = vld [vmem:[%s3 + $0x390] sm:$0xff]
  %v468 = vld [vmem:[%s3 + $0x398] sm:$0xff]
  %v469 = vld [vmem:[%s3 + $0x3a0] sm:$0xff]
  %v470 = vld [vmem:[%s3 + $0x3a8] sm:$0xff]
  %v471 = vld [vmem:[%s3 + $0x3b0] sm:$0xff]
  %v472 = vld [vmem:[%s3 + $0x3b8] sm:$0xff]
  %v473 = vld [vmem:[%s3 + $0x3c0] sm:$0xff]
  %v474 = vld [vmem:[%s3 + $0x3c8] sm:$0xff]
  %v475 = vld [vmem:[%s3 + $0x3d0] sm:$0xff]
  %v476 = vld [vmem:[%s3 + $0x3d8] sm:$0xff]
  %v477 = vld [vmem:[%s3 + $0x3e0] sm:$0xff]
  %v478 = vld [vmem:[%s3 + $0x3e8] sm:$0xff]
  %v479 = vld [vmem:[%s3 + $0x3f0] sm:$0xff]
  %v480 = vld [vmem:[%s3 + $0x3f8] sm:$0xff]
  %v481 = vld [vmem:[%s3 + $0x400] sm:$0xff]
  %v482 = vld [vmem:[%s3 + $0x408] sm:$0xff]
  %v483 = vld [vmem:[%s3 + $0x410] sm:$0xff]
  %v484 = vld [vmem:[%s3 + $0x418] sm:$0xff]
  %v485 = vld [vmem:[%s3 + $0x420] sm:$0xff]
  %v486 = vld [vmem:[%s3 + $0x428] sm:$0xff]
  %v487 = vld [vmem:[%s3 + $0x430] sm:$0xff]
  %v488 = vld [vmem:[%s3 + $0x438] sm:$0xff]
  %v489 = vld [vmem:[%s3 + $0x440] sm:$0xff]
  %v490 = vld [vmem:[%s3 + $0x448] sm:$0xff]
  %v491 = vld [vmem:[%s3 + $0x450] sm:$0xff]
  %v492 = vld [vmem:[%s3 + $0x458] sm:$0xff]
  %v493 = vld [vmem:[%s3 + $0x460] sm:$0xff]
  %v494 = vld [vmem:[%s3 + $0x468] sm:$0xff]
  %v495 = vld [vmem:[%s3 + $0x470] sm:$0xff]
  %v496 = vld [vmem:[%s3 + $0x478] sm:$0xff]
  %v497 = vld [vmem:[%s3 + $0x480] sm:$0xff]
  %v498 = vld [vmem:[%s3 + $0x488] sm:$0xff]
  %v499 = vld [vmem:[%s3 + $0x490] sm:$0xff]
  %v500 = vld [vmem:[%s3 + $0x498] sm:$0xff]
  %v501 = vld [vmem:[%s3 + $0x4a0] sm:$0xff]
  %v502 = vld [vmem:[%s3 + $0x4a8] sm:$0xff]
  %v503 = vld [vmem:[%s3 + $0x4b0] sm:$0xff]
  %v504 = vld [vmem:[%s3 + $0x4b8] sm:$0xff]
  %v505 = vld [vmem:[%s3 + $0x4c0] sm:$0xff]
  %v506 = vld [vmem:[%s3 + $0x4c8] sm:$0xff]
  %v507 = vld [vmem:[%s3 + $0x4d0] sm:$0xff]
  %v508 = vld [vmem:[%s3 + $0x4d8] sm:$0xff]
  %v509 = vld [vmem:[%s3 + $0x4e0] sm:$0xff]
  %v510 = vld [vmem:[%s3 + $0x4e8] sm:$0xff]
  %v511 = vld [vmem:[%s3 + $0x4f0] sm:$0xff]
  %v512 = vld [vmem:[%s3 + $0x4f8] sm:$0xff]
  %v513 = vld [vmem:[%s3 + $0x500] sm:$0xff]
  %v514 = vld [vmem:[%s3 + $0x508] sm:$0xff]
  %v515 = vld [vmem:[%s3 + $0x510] sm:$0xff]
  %v516 = vld [vmem:[%s3 + $0x518] sm:$0xff]
  %v517 = vld [vmem:[%s3 + $0x520] sm:$0xff]
  %v518 = vld [vmem:[%s3 + $0x528] sm:$0xff]
  %v519 = vld [vmem:[%s3 + $0x530] sm:$0xff]
  %v520 = vld [vmem:[%s3 + $0x538] sm:$0xff]
  %v521 = vld [vmem:[%s3 + $0x540] sm:$0xff]
  %v522 = vld [vmem:[%s3 + $0x548] sm:$0xff]
  %v523 = vld [vmem:[%s3 + $0x550] sm:$0xff]
  %v524 = vld [vmem:[%s3 + $0x558] sm:$0xff]
  %v525 = vld [vmem:[%s3 + $0x560] sm:$0xff]
  %v526 = vld [vmem:[%s3 + $0x568] sm:$0xff]
  %v527 = vld [vmem:[%s3 + $0x570] sm:$0xff]
  %v528 = vld [vmem:[%s3 + $0x578] sm:$0xff]
  %v529 = vld [vmem:[%s3 + $0x580] sm:$0xff]
  %v530 = vld [vmem:[%s3 + $0x588] sm:$0xff]
  %v531 = vld [vmem:[%s3 + $0x590] sm:$0xff]
  %v532 = vld [vmem:[%s3 + $0x598] sm:$0xff]
  %v533 = vld [vmem:[%s3 + $0x5a0] sm:$0xff]
  %v534 = vld [vmem:[%s3 + $0x5a8] sm:$0xff]
  %v535 = vld [vmem:[%s3 + $0x5b0] sm:$0xff]
  %v536 = vld [vmem:[%s3 + $0x5b8] sm:$0xff]
  %v537 = vld [vmem:[%s3 + $0x5c0] sm:$0xff]
  %v538 = vld [vmem:[%s3 + $0x5c8] sm:$0xff]
  %v539 = vld [vmem:[%s3 + $0x5d0] sm:$0xff]
  %v540 = vld [vmem:[%s3 + $0x5d8] sm:$0xff]
  %v541 = vld [vmem:[%s3 + $0x5e0] sm:$0xff]
  %v542 = vld [vmem:[%s3 + $0x5e8] sm:$0xff]
  %v543 = vld [vmem:[%s3 + $0x5f0] sm:$0xff]
  %v544 = vld [vmem:[%s3 + $0x5f8] sm:$0xff]
  %v545 = vld [vmem:[%s3 + $0x600] sm:$0xff]
  %v546 = vld [vmem:[%s3 + $0x608] sm:$0xff]
  %v547 = vld [vmem:[%s3 + $0x610] sm:$0xff]
  %v548 = vld [vmem:[%s3 + $0x618] sm:$0xff]
  %v549 = vld [vmem:[%s3 + $0x620] sm:$0xff]
  %v550 = vld [vmem:[%s3 + $0x628] sm:$0xff]
  %v551 = vld [vmem:[%s3 + $0x630] sm:$0xff]
  %v552 = vld [vmem:[%s3 + $0x638] sm:$0xff]
  %v553 = vld [vmem:[%s3 + $0x640] sm:$0xff]
  %v554 = vld [vmem:[%s3 + $0x648] sm:$0xff]
  %v555 = vld [vmem:[%s3 + $0x650] sm:$0xff]
  %v556 = vld [vmem:[%s3 + $0x658] sm:$0xff]
  %v557 = vld [vmem:[%s3 + $0x660] sm:$0xff]
  %v558 = vld [vmem:[%s3 + $0x668] sm:$0xff]
  %v559 = vld [vmem:[%s3 + $0x670] sm:$0xff]
  %v560 = vld [vmem:[%s3 + $0x678] sm:$0xff]
  %v561 = vld [vmem:[%s3 + $0x680] sm:$0xff]
  %v562 = vld [vmem:[%s3 + $0x688] sm:$0xff]
  %v563 = vld [vmem:[%s3 + $0x690] sm:$0xff]
  %v564 = vld [vmem:[%s3 + $0x698] sm:$0xff]
  %v565 = vld [vmem:[%s3 + $0x6a0] sm:$0xff]
  %v566 = vld [vmem:[%s3 + $0x6a8] sm:$0xff]
  %v567 = vld [vmem:[%s3 + $0x6b0] sm:$0xff]
  %v568 = vld [vmem:[%s3 + $0x6b8] sm:$0xff]
  %v569 = vld [vmem:[%s3 + $0x6c0] sm:$0xff]
  %v570 = vld [vmem:[%s3 + $0x6c8] sm:$0xff]
  %v571 = vld [vmem:[%s3 + $0x6d0] sm:$0xff]
  %v572 = vld [vmem:[%s3 + $0x6d8] sm:$0xff]
  %v573 = vld [vmem:[%s3 + $0x6e0] sm:$0xff]
  %v574 = vld [vmem:[%s3 + $0x6e8] sm:$0xff]
  %v575 = vld [vmem:[%s3 + $0x6f0] sm:$0xff]
  %v576 = vld [vmem:[%s3 + $0x6f8] sm:$0xff]
  %v577 = vld [vmem:[%s3 + $0x700] sm:$0xff]
  %v578 = vld [vmem:[%s3 + $0x708] sm:$0xff]
  %v579 = vld [vmem:[%s3 + $0x710] sm:$0xff]
  %v580 = vld [vmem:[%s3 + $0x718] sm:$0xff]
  %v581 = vld [vmem:[%s3 + $0x720] sm:$0xff]
  %v582 = vld [vmem:[%s3 + $0x728] sm:$0xff]
  %v583 = vld [vmem:[%s3 + $0x730] sm:$0xff]
  %v584 = vld [vmem:[%s3 + $0x738] sm:$0xff]
  %v585 = vld [vmem:[%s3 + $0x740] sm:$0xff]
  %v586 = vld [vmem:[%s3 + $0x748] sm:$0xff]
  %v587 = vld [vmem:[%s3 + $0x750] sm:$0xff]
  %v588 = vld [vmem:[%s3 + $0x758] sm:$0xff]
  %v589 = vld [vmem:[%s3 + $0x760] sm:$0xff]
  %v590 = vld [vmem:[%s3 + $0x768] sm:$0xff]
  %v591 = vld [vmem:[%s3 + $0x770] sm:$0xff]
  %v592 = vld [vmem:[%s3 + $0x778] sm:$0xff]
  %v593 = vld [vmem:[%s3 + $0x780] sm:$0xff]
  %v594 = vld [vmem:[%s3 + $0x788] sm:$0xff]
  %v595 = vld [vmem:[%s3 + $0x790] sm:$0xff]
  %v596 = vld [vmem:[%s3 + $0x798] sm:$0xff]
  %v597 = vld [vmem:[%s3 + $0x7a0] sm:$0xff]
  %v598 = vld [vmem:[%s3 + $0x7a8] sm:$0xff]
  %v599 = vld [vmem:[%s3 + $0x7b0] sm:$0xff]
  %v600 = vld [vmem:[%s3 + $0x7b8] sm:$0xff]
  %v601 = vld [vmem:[%s3 + $0x7c0] sm:$0xff]
  %v602 = vld [vmem:[%s3 + $0x7c8] sm:$0xff]
  %v603 = vld [vmem:[%s3 + $0x7d0] sm:$0xff]
  %v604 = vld [vmem:[%s3 + $0x7d8] sm:$0xff]
  %v605 = vld [vmem:[%s3 + $0x7e0] sm:$0xff]
  %v606 = vld [vmem:[%s3 + $0x7e8] sm:$0xff]
  %v607 = vld [vmem:[%s3 + $0x7f0] sm:$0xff]
  %v608 = vld [vmem:[%s3 + $0x7f8] sm:$0xff]
  %v609 = vld [vmem:[%s3 + $0x800] sm:$0xff]
  %v610 = vld [vmem:[%s3 + $0x808] sm:$0xff]
  %v611 = vld [vmem:[%s3 + $0x810] sm:$0xff]
  %v612 = vld [vmem:[%s3 + $0x818] sm:$0xff]
  %v613 = vld [vmem:[%s3 + $0x820] sm:$0xff]
  %v614 = vld [vmem:[%s3 + $0x828] sm:$0xff]
  %v615 = vld [vmem:[%s3 + $0x830] sm:$0xff]
  %v616 = vld [vmem:[%s3 + $0x838] sm:$0xff]
  %v617 = vld [vmem:[%s3 + $0x840] sm:$0xff]
  %v618 = vld [vmem:[%s3 + $0x848] sm:$0xff]
  %v619 = vld [vmem:[%s3 + $0x850] sm:$0xff]
  %v620 = vld [vmem:[%s3 + $0x858] sm:$0xff]
  %v621 = vld [vmem:[%s3 + $0x860] sm:$0xff]
  %v622 = vld [vmem:[%s3 + $0x868] sm:$0xff]
  %v623 = vld [vmem:[%s3 + $0x870] sm:$0xff]
  %v624 = vld [vmem:[%s3 + $0x878] sm:$0xff]
  %v625 = vld [vmem:[%s3 + $0x880] sm:$0xff]
  %v626 = vld [vmem:[%s3 + $0x888] sm:$0xff]
  %v627 = vld [vmem:[%s3 + $0x890] sm:$0xff]
  %v628 = vld [vmem:[%s3 + $0x898] sm:$0xff]
  %v629 = vld [vmem:[%s3 + $0x8a0] sm:$0xff]
  %v630 = vld [vmem:[%s3 + $0x8a8] sm:$0xff]
  %v631 = vld [vmem:[%s3 + $0x8b0] sm:$0xff]
  %v632 = vld [vmem:[%s3 + $0x8b8] sm:$0xff]
  %v633 = vld [vmem:[%s3 + $0x8c0] sm:$0xff]
  %v634 = vld [vmem:[%s3 + $0x8c8] sm:$0xff]
  %v635 = vld [vmem:[%s3 + $0x8d0] sm:$0xff]
  %v636 = vld [vmem:[%s3 + $0x8d8] sm:$0xff]
  %v637 = vld [vmem:[%s3 + $0x8e0] sm:$0xff]
  %v638 = vld [vmem:[%s3 + $0x8e8] sm:$0xff]
  %v639 = vld [vmem:[%s3 + $0x8f0] sm:$0xff]
  %v640 = vld [vmem:[%s3 + $0x8f8] sm:$0xff]
  %v641 = vld [vmem:[%s3 + $0x900] sm:$0xff]
  %v642 = vld [vmem:[%s3 + $0x908] sm:$0xff]
  %v643 = vld [vmem:[%s3 + $0x910] sm:$0xff]
  %v644 = vld [vmem:[%s3 + $0x918] sm:$0xff]
  %v645 = vld [vmem:[%s3 + $0x920] sm:$0xff]
  %v646 = vld [vmem:[%s3 + $0x928] sm:$0xff]
  %v647 = vld [vmem:[%s3 + $0x930] sm:$0xff]
  %v648 = vld [vmem:[%s3 + $0x938] sm:$0xff]
  %v649 = vld [vmem:[%s3 + $0x940] sm:$0xff]
  %v650 = vld [vmem:[%s3 + $0x948] sm:$0xff]
  %v651 = vld [vmem:[%s3 + $0x950] sm:$0xff]
  %v652 = vld [vmem:[%s3 + $0x958] sm:$0xff]
  %v653 = vld [vmem:[%s3 + $0x960] sm:$0xff]
  %v654 = vld [vmem:[%s3 + $0x968] sm:$0xff]
  %v655 = vld [vmem:[%s3 + $0x970] sm:$0xff]
  %v656 = vld [vmem:[%s3 + $0x978] sm:$0xff]
  %v657 = vld [vmem:[%s3 + $0x980] sm:$0xff]
  %v658 = vld [vmem:[%s3 + $0x988] sm:$0xff]
  %v659 = vld [vmem:[%s3 + $0x990] sm:$0xff]
  %v660 = vld [vmem:[%s3 + $0x998] sm:$0xff]
  %v661 = vld [vmem:[%s3 + $0x9a0] sm:$0xff]
  %v662 = vld [vmem:[%s3 + $0x9a8] sm:$0xff]
  %v663 = vld [vmem:[%s3 + $0x9b0] sm:$0xff]
  %v664 = vld [vmem:[%s3 + $0x9b8] sm:$0xff]
  %v665 = vld [vmem:[%s3 + $0x9c0] sm:$0xff]
  %v666 = vld [vmem:[%s3 + $0x9c8] sm:$0xff]
  %v667 = vld [vmem:[%s3 + $0x9d0] sm:$0xff]
  %v668 = vld [vmem:[%s3 + $0x9d8] sm:$0xff]
  %v669 = vld [vmem:[%s3 + $0x9e0] sm:$0xff]
  %v670 = vld [vmem:[%s3 + $0x9e8] sm:$0xff]
  %v671 = vld [vmem:[%s3 + $0x9f0] sm:$0xff]
  %v672 = vld [vmem:[%s3 + $0x9f8] sm:$0xff]
  %v673 = vld [vmem:[%s3 + $0xa00] sm:$0xff]
  %v674 = vld [vmem:[%s3 + $0xa08] sm:$0xff]
  %v675 = vld [vmem:[%s3 + $0xa10] sm:$0xff]
  %v676 = vld [vmem:[%s3 + $0xa18] sm:$0xff]
  %v677 = vld [vmem:[%s3 + $0xa20] sm:$0xff]
  %v678 = vld [vmem:[%s3 + $0xa28] sm:$0xff]
  %v679 = vld [vmem:[%s3 + $0xa30] sm:$0xff]
  %v680 = vld [vmem:[%s3 + $0xa38] sm:$0xff]
  %v681 = vld [vmem:[%s3 + $0xa40] sm:$0xff]
  %v682 = vld [vmem:[%s3 + $0xa48] sm:$0xff]
  %v683 = vld [vmem:[%s3 + $0xa50] sm:$0xff]
  %v684 = vld [vmem:[%s3 + $0xa58] sm:$0xff]
  %v685 = vld [vmem:[%s3 + $0xa60] sm:$0xff]
  %v686 = vld [vmem:[%s3 + $0xa68] sm:$0xff]
  %v687 = vld [vmem:[%s3 + $0xa70] sm:$0xff]
  %v688 = vld [vmem:[%s3 + $0xa78] sm:$0xff]
  %v689 = vld [vmem:[%s3 + $0xa80] sm:$0xff]
  %v690 = vld [vmem:[%s3 + $0xa88] sm:$0xff]
  %v691 = vld [vmem:[%s3 + $0xa90] sm:$0xff]
  %v692 = vld [vmem:[%s3 + $0xa98] sm:$0xff]
  %v693 = vld [vmem:[%s3 + $0xaa0] sm:$0xff]
  %v694 = vld [vmem:[%s3 + $0xaa8] sm:$0xff]
  %v695 = vld [vmem:[%s3 + $0xab0] sm:$0xff]
  %v696 = vld [vmem:[%s3 + $0xab8] sm:$0xff]
  %v697 = vld [vmem:[%s3 + $0xac0] sm:$0xff]
  %v698 = vld [vmem:[%s3 + $0xac8] sm:$0xff]
  %v699 = vld [vmem:[%s3 + $0xad0] sm:$0xff]
  %v700 = vld [vmem:[%s3 + $0xad8] sm:$0xff]
  %v701 = vld [vmem:[%s3 + $0xae0] sm:$0xff]
  %v702 = vld [vmem:[%s3 + $0xae8] sm:$0xff]
  %v703 = vld [vmem:[%s3 + $0xaf0] sm:$0xff]
  %v704 = vld [vmem:[%s3 + $0xaf8] sm:$0xff]
  %v705 = vld [vmem:[%s3 + $0xb00] sm:$0xff]
  %v706 = vld [vmem:[%s3 + $0xb08] sm:$0xff]
  %v707 = vld [vmem:[%s3 + $0xb10] sm:$0xff]
  %v708 = vld [vmem:[%s3 + $0xb18] sm:$0xff]
  %v709 = vld [vmem:[%s3 + $0xb20] sm:$0xff]
  %v710 = vld [vmem:[%s3 + $0xb28] sm:$0xff]
  %v711 = vld [vmem:[%s3 + $0xb30] sm:$0xff]
  %v712 = vld [vmem:[%s3 + $0xb38] sm:$0xff]
  %v713 = vld [vmem:[%s3 + $0xb40] sm:$0xff]
  %v714 = vld [vmem:[%s3 + $0xb48] sm:$0xff]
  %v715 = vld [vmem:[%s3 + $0xb50] sm:$0xff]
  %v716 = vld [vmem:[%s3 + $0xb58] sm:$0xff]
  %v717 = vld [vmem:[%s3 + $0xb60] sm:$0xff]
  %v718 = vld [vmem:[%s3 + $0xb68] sm:$0xff]
  %v719 = vld [vmem:[%s3 + $0xb70] sm:$0xff]
  %v720 = vld [vmem:[%s3 + $0xb78] sm:$0xff]
  %v721 = vld [vmem:[%s3 + $0xb80] sm:$0xff]
  %v722 = vld [vmem:[%s3 + $0xb88] sm:$0xff]
  %v723 = vld [vmem:[%s3 + $0xb90] sm:$0xff]
  %v724 = vld [vmem:[%s3 + $0xb98] sm:$0xff]
  %v725 = vld [vmem:[%s3 + $0xba0] sm:$0xff]
  %v726 = vld [vmem:[%s3 + $0xba8] sm:$0xff]
  %v727 = vld [vmem:[%s3 + $0xbb0] sm:$0xff]
  %v728 = vld [vmem:[%s3 + $0xbb8] sm:$0xff]
  %v729 = vld [vmem:[%s3 + $0xbc0] sm:$0xff]
  %v730 = vld [vmem:[%s3 + $0xbc8] sm:$0xff]
  %v731 = vld [vmem:[%s3 + $0xbd0] sm:$0xff]
  %v732 = vld [vmem:[%s3 + $0xbd8] sm:$0xff]
  %v733 = vld [vmem:[%s3 + $0xbe0] sm:$0xff]
  %v734 = vld [vmem:[%s3 + $0xbe8] sm:$0xff]
  %v735 = vld [vmem:[%s3 + $0xbf0] sm:$0xff]
  %v736 = vld [vmem:[%s3 + $0xbf8] sm:$0xff]
  %v737 = vld [vmem:[%s3 + $0xc00] sm:$0xff]
  %v738 = vld [vmem:[%s3 + $0xc08] sm:$0xff]
  %v739 = vld [vmem:[%s3 + $0xc10] sm:$0xff]
  %v740 = vld [vmem:[%s3 + $0xc18] sm:$0xff]
  %v741 = vld [vmem:[%s3 + $0xc20] sm:$0xff]
  %v742 = vld [vmem:[%s3 + $0xc28] sm:$0xff]
  %v743 = vld [vmem:[%s3 + $0xc30] sm:$0xff]
  %v744 = vld [vmem:[%s3 + $0xc38] sm:$0xff]
  %v745 = vld [vmem:[%s3 + $0xc40] sm:$0xff]
  %v746 = vld [vmem:[%s3 + $0xc48] sm:$0xff]
  %v747 = vld [vmem:[%s3 + $0xc50] sm:$0xff]
  %v748 = vld [vmem:[%s3 + $0xc58] sm:$0xff]
  %v749 = vld [vmem:[%s3 + $0xc60] sm:$0xff]
  %v750 = vld [vmem:[%s3 + $0xc68] sm:$0xff]
  %v751 = vld [vmem:[%s3 + $0xc70] sm:$0xff]
  %v752 = vld [vmem:[%s3 + $0xc78] sm:$0xff]
  %v753 = vld [vmem:[%s3 + $0xc80] sm:$0xff]
  %v754 = vld [vmem:[%s3 + $0xc88] sm:$0xff]
  %v755 = vld [vmem:[%s3 + $0xc90] sm:$0xff]
  %v756 = vld [vmem:[%s3 + $0xc98] sm:$0xff]
  %v757 = vld [vmem:[%s3 + $0xca0] sm:$0xff]
  %v758 = vld [vmem:[%s3 + $0xca8] sm:$0xff]
  %v759 = vld [vmem:[%s3 + $0xcb0] sm:$0xff]
  %v760 = vld [vmem:[%s3 + $0xcb8] sm:$0xff]
  %v761 = vld [vmem:[%s3 + $0xcc0] sm:$0xff]
  %v762 = vld [vmem:[%s3 + $0xcc8] sm:$0xff]
  %v763 = vld [vmem:[%s3 + $0xcd0] sm:$0xff]
  %v764 = vld [vmem:[%s3 + $0xcd8] sm:$0xff]
  %v765 = vld [vmem:[%s3 + $0xce0] sm:$0xff]
  %v766 = vld [vmem:[%s3 + $0xce8] sm:$0xff]
  %v767 = vld [vmem:[%s3 + $0xcf0] sm:$0xff]
  %v768 = vld [vmem:[%s3 + $0xcf8] sm:$0xff]
  %v769 = vld [vmem:[%s3 + $0xd00] sm:$0xff]
  %v770 = vld [vmem:[%s3 + $0xd08] sm:$0xff]
  %v771 = vld [vmem:[%s3 + $0xd10] sm:$0xff]
  %v772 = vld [vmem:[%s3 + $0xd18] sm:$0xff]
  %v773 = vld [vmem:[%s3 + $0xd20] sm:$0xff]
  %v774 = vld [vmem:[%s3 + $0xd28] sm:$0xff]
  %v775 = vld [vmem:[%s3 + $0xd30] sm:$0xff]
  %v776 = vld [vmem:[%s3 + $0xd38] sm:$0xff]
  %v777 = vld [vmem:[%s3 + $0xd40] sm:$0xff]
  %v778 = vld [vmem:[%s3 + $0xd48] sm:$0xff]
  %v779 = vld [vmem:[%s3 + $0xd50] sm:$0xff]
  %v780 = vld [vmem:[%s3 + $0xd58] sm:$0xff]
  %v781 = vld [vmem:[%s3 + $0xd60] sm:$0xff]
  %v782 = vld [vmem:[%s3 + $0xd68] sm:$0xff]
  %v783 = vld [vmem:[%s3 + $0xd70] sm:$0xff]
  %v784 = vld [vmem:[%s3 + $0xd78] sm:$0xff]
  %v785 = vld [vmem:[%s3 + $0xd80] sm:$0xff]
  %v786 = vld [vmem:[%s3 + $0xd88] sm:$0xff]
  %v787 = vld [vmem:[%s3 + $0xd90] sm:$0xff]
  %v788 = vld [vmem:[%s3 + $0xd98] sm:$0xff]
  %v789 = vld [vmem:[%s3 + $0xda0] sm:$0xff]
  %v790 = vld [vmem:[%s3 + $0xda8] sm:$0xff]
  %v791 = vld [vmem:[%s3 + $0xdb0] sm:$0xff]
  %v792 = vld [vmem:[%s3 + $0xdb8] sm:$0xff]
  %v793 = vld [vmem:[%s3 + $0xdc0] sm:$0xff]
  %v794 = vld [vmem:[%s3 + $0xdc8] sm:$0xff]
  %v795 = vld [vmem:[%s3 + $0xdd0] sm:$0xff]
  %v796 = vld [vmem:[%s3 + $0xdd8] sm:$0xff]
  %v797 = vld [vmem:[%s3 + $0xde0] sm:$0xff]
  %v798 = vld [vmem:[%s3 + $0xde8] sm:$0xff]
  %v799 = vld [vmem:[%s3 + $0xdf0] sm:$0xff]
  %v800 = vld [vmem:[%s3 + $0xdf8] sm:$0xff]
  %v801 = vld [vmem:[%s3 + $0xe00] sm:$0xff]
  %v802 = vld [vmem:[%s3 + $0xe08] sm:$0xff]
  %v803 = vld [vmem:[%s3 + $0xe10] sm:$0xff]
  %v804 = vld [vmem:[%s3 + $0xe18] sm:$0xff]
  %v805 = vld [vmem:[%s3 + $0xe20] sm:$0xff]
  %v806 = vld [vmem:[%s3 + $0xe28] sm:$0xff]
  %v807 = vld [vmem:[%s3 + $0xe30] sm:$0xff]
  %v808 = vld [vmem:[%s3 + $0xe38] sm:$0xff]
  %v809 = vld [vmem:[%s3 + $0xe40] sm:$0xff]
  %v810 = vld [vmem:[%s3 + $0xe48] sm:$0xff]
  %v811 = vld [vmem:[%s3 + $0xe50] sm:$0xff]
  %v812 = vld [vmem:[%s3 + $0xe58] sm:$0xff]
  %v813 = vld [vmem:[%s3 + $0xe60] sm:$0xff]
  %v814 = vld [vmem:[%s3 + $0xe68] sm:$0xff]
  %v815 = vld [vmem:[%s3 + $0xe70] sm:$0xff]
  %v816 = vld [vmem:[%s3 + $0xe78] sm:$0xff]
  %v817 = vld [vmem:[%s3 + $0xe80] sm:$0xff]
  %v818 = vld [vmem:[%s3 + $0xe88] sm:$0xff]
  %v819 = vld [vmem:[%s3 + $0xe90] sm:$0xff]
  %v820 = vld [vmem:[%s3 + $0xe98] sm:$0xff]
  %v821 = vld [vmem:[%s3 + $0xea0] sm:$0xff]
  %v822 = vld [vmem:[%s3 + $0xea8] sm:$0xff]
  %v823 = vld [vmem:[%s3 + $0xeb0] sm:$0xff]
  %v824 = vld [vmem:[%s3 + $0xeb8] sm:$0xff]
  %v825 = vld [vmem:[%s3 + $0xec0] sm:$0xff]
  %v826 = vld [vmem:[%s3 + $0xec8] sm:$0xff]
  %v827 = vld [vmem:[%s3 + $0xed0] sm:$0xff]
  %v828 = vld [vmem:[%s3 + $0xed8] sm:$0xff]
  %v829 = vld [vmem:[%s3 + $0xee0] sm:$0xff]
  %v830 = vld [vmem:[%s3 + $0xee8] sm:$0xff]
  %v831 = vld [vmem:[%s3 + $0xef0] sm:$0xff]
  %v832 = vld [vmem:[%s3 + $0xef8] sm:$0xff]
  %v833 = vld [vmem:[%s3 + $0xf00] sm:$0xff]
  %v834 = vld [vmem:[%s3 + $0xf08] sm:$0xff]
  %v835 = vld [vmem:[%s3 + $0xf10] sm:$0xff]
  %v836 = vld [vmem:[%s3 + $0xf18] sm:$0xff]
  %v837 = vld [vmem:[%s3 + $0xf20] sm:$0xff]
  %v838 = vld [vmem:[%s3 + $0xf28] sm:$0xff]
  %v839 = vld [vmem:[%s3 + $0xf30] sm:$0xff]
  %v840 = vld [vmem:[%s3 + $0xf38] sm:$0xff]
  %v841 = vld [vmem:[%s3 + $0xf40] sm:$0xff]
  %v842 = vld [vmem:[%s3 + $0xf48] sm:$0xff]
  %v843 = vld [vmem:[%s3 + $0xf50] sm:$0xff]
  %v844 = vld [vmem:[%s3 + $0xf58] sm:$0xff]
  %v845 = vld [vmem:[%s3 + $0xf60] sm:$0xff]
  %v846 = vld [vmem:[%s3 + $0xf68] sm:$0xff]
  %v847 = vld [vmem:[%s3 + $0xf70] sm:$0xff]
  %v848 = vld [vmem:[%s3 + $0xf78] sm:$0xff]
  %v849 = vld [vmem:[%s3 + $0xf80] sm:$0xff]
  %v850 = vld [vmem:[%s3 + $0xf88] sm:$0xff]
  %v851 = vld [vmem:[%s3 + $0xf90] sm:$0xff]
  %v852 = vld [vmem:[%s3 + $0xf98] sm:$0xff]
  %v853 = vld [vmem:[%s3 + $0xfa0] sm:$0xff]
  %v854 = vld [vmem:[%s3 + $0xfa8] sm:$0xff]
  %v855 = vld [vmem:[%s3 + $0xfb0] sm:$0xff]
  %v856 = vld [vmem:[%s3 + $0xfb8] sm:$0xff]
  %v857 = vld [vmem:[%s3 + $0xfc0] sm:$0xff]
  %v858 = vld [vmem:[%s3 + $0xfc8] sm:$0xff]
  %v859 = vld [vmem:[%s3 + $0xfd0] sm:$0xff]
  %v860 = vld [vmem:[%s3 + $0xfd8] sm:$0xff]
  %v861 = vld [vmem:[%s3 + $0xfe0] sm:$0xff]
  %v862 = vld [vmem:[%s3 + $0xfe8] sm:$0xff]
  %v863 = vld [vmem:[%s3 + $0xff0] sm:$0xff]
  %v864 = vld [vmem:[%s3 + $0xff8] sm:$0xff]
  %v865 = vld [vmem:[%s4] sm:$0xff]
  %v867 = vlaneseq
  %v868 = vshrl.u32 %v867, 7
  %v869 = vsub.s32 0, %v868
  %v870 = vrot.slane %v865, %v869
  %v871 = vlaneseq
  %v872 = vshrl.u32 %v871, 7
  %v873 = vsub.s32 1, %v872
  %v874 = vrot.slane %v865, %v873
  %v875 = vlaneseq
  %v876 = vshrl.u32 %v875, 7
  %v877 = vsub.s32 2, %v876
  %v878 = vrot.slane %v865, %v877
  %v879 = vlaneseq
  %v880 = vshrl.u32 %v879, 7
  %v881 = vsub.s32 3, %v880
  %v882 = vrot.slane %v865, %v881
  %v883 = vlaneseq
  %v884 = vshrl.u32 %v883, 7
  %v885 = vsub.s32 4, %v884
  %v886 = vrot.slane %v865, %v885
  %v887 = vlaneseq
  %v888 = vshrl.u32 %v887, 7
  %v889 = vsub.s32 5, %v888
  %v890 = vrot.slane %v865, %v889
  %v891 = vlaneseq
  %v892 = vshrl.u32 %v891, 7
  %v893 = vsub.s32 6, %v892
  %v894 = vrot.slane %v865, %v893
  %v895 = vlaneseq
  %v896 = vshrl.u32 %v895, 7
  %v897 = vsub.s32 7, %v896
  %v898 = vrot.slane %v865, %v897
  %v1419 = vunpack.c.l.b16 %v353
  %v1420 = vunpack.c.h.b16 %v353
  %v1421 = vunpack.c.l.b16 %v354
  %v1422 = vunpack.c.h.b16 %v354
  %v1423 = vunpack.c.l.b16 %v355
  %v1424 = vunpack.c.h.b16 %v355
  %v1425 = vunpack.c.l.b16 %v356
  %v1426 = vunpack.c.h.b16 %v356
  %v1427 = vunpack.c.l.b16 %v357
  %v1428 = vunpack.c.h.b16 %v357
  %v1429 = vunpack.c.l.b16 %v358
  %v1430 = vunpack.c.h.b16 %v358
  %v1431 = vunpack.c.l.b16 %v359
  %v1432 = vunpack.c.h.b16 %v359
  %v1433 = vunpack.c.l.b16 %v360
  %v1434 = vunpack.c.h.b16 %v360
  %v1435 = vunpack.c.l.b16 %v361
  %v1436 = vunpack.c.h.b16 %v361
  %v1437 = vunpack.c.l.b16 %v362
  %v1438 = vunpack.c.h.b16 %v362
  %v1439 = vunpack.c.l.b16 %v363
  %v1440 = vunpack.c.h.b16 %v363
  %v1441 = vunpack.c.l.b16 %v364
  %v1442 = vunpack.c.h.b16 %v364
  %v1443 = vunpack.c.l.b16 %v365
  %v1444 = vunpack.c.h.b16 %v365
  %v1445 = vunpack.c.l.b16 %v366
  %v1446 = vunpack.c.h.b16 %v366
  %v1447 = vunpack.c.l.b16 %v367
  %v1448 = vunpack.c.h.b16 %v367
  %v1449 = vunpack.c.l.b16 %v368
  %v1450 = vunpack.c.h.b16 %v368
  %v1451 = vunpack.c.l.b16 %v369
  %v1452 = vunpack.c.h.b16 %v369
  %v1453 = vunpack.c.l.b16 %v370
  %v1454 = vunpack.c.h.b16 %v370
  %v1455 = vunpack.c.l.b16 %v371
  %v1456 = vunpack.c.h.b16 %v371
  %v1457 = vunpack.c.l.b16 %v372
  %v1458 = vunpack.c.h.b16 %v372
  %v1459 = vunpack.c.l.b16 %v373
  %v1460 = vunpack.c.h.b16 %v373
  %v1461 = vunpack.c.l.b16 %v374
  %v1462 = vunpack.c.h.b16 %v374
  %v1463 = vunpack.c.l.b16 %v375
  %v1464 = vunpack.c.h.b16 %v375
  %v1465 = vunpack.c.l.b16 %v376
  %v1466 = vunpack.c.h.b16 %v376
  %v1467 = vunpack.c.l.b16 %v377
  %v1468 = vunpack.c.h.b16 %v377
  %v1469 = vunpack.c.l.b16 %v378
  %v1470 = vunpack.c.h.b16 %v378
  %v1471 = vunpack.c.l.b16 %v379
  %v1472 = vunpack.c.h.b16 %v379
  %v1473 = vunpack.c.l.b16 %v380
  %v1474 = vunpack.c.h.b16 %v380
  %v1475 = vunpack.c.l.b16 %v381
  %v1476 = vunpack.c.h.b16 %v381
  %v1477 = vunpack.c.l.b16 %v382
  %v1478 = vunpack.c.h.b16 %v382
  %v1479 = vunpack.c.l.b16 %v383
  %v1480 = vunpack.c.h.b16 %v383
  %v1481 = vunpack.c.l.b16 %v384
  %v1482 = vunpack.c.h.b16 %v384
  %v1483 = vunpack.c.l.b16 %v385
  %v1484 = vunpack.c.h.b16 %v385
  %v1485 = vunpack.c.l.b16 %v386
  %v1486 = vunpack.c.h.b16 %v386
  %v1487 = vunpack.c.l.b16 %v387
  %v1488 = vunpack.c.h.b16 %v387
  %v1489 = vunpack.c.l.b16 %v388
  %v1490 = vunpack.c.h.b16 %v388
  %v1491 = vunpack.c.l.b16 %v389
  %v1492 = vunpack.c.h.b16 %v389
  %v1493 = vunpack.c.l.b16 %v390
  %v1494 = vunpack.c.h.b16 %v390
  %v1495 = vunpack.c.l.b16 %v391
  %v1496 = vunpack.c.h.b16 %v391
  %v1497 = vunpack.c.l.b16 %v392
  %v1498 = vunpack.c.h.b16 %v392
  %v1499 = vunpack.c.l.b16 %v393
  %v1500 = vunpack.c.h.b16 %v393
  %v1501 = vunpack.c.l.b16 %v394
  %v1502 = vunpack.c.h.b16 %v394
  %v1503 = vunpack.c.l.b16 %v395
  %v1504 = vunpack.c.h.b16 %v395
  %v1505 = vunpack.c.l.b16 %v396
  %v1506 = vunpack.c.h.b16 %v396
  %v1507 = vunpack.c.l.b16 %v397
  %v1508 = vunpack.c.h.b16 %v397
  %v1509 = vunpack.c.l.b16 %v398
  %v1510 = vunpack.c.h.b16 %v398
  %v1511 = vunpack.c.l.b16 %v399
  %v1512 = vunpack.c.h.b16 %v399
  %v1513 = vunpack.c.l.b16 %v400
  %v1514 = vunpack.c.h.b16 %v400
  %v1515 = vunpack.c.l.b16 %v401
  %v1516 = vunpack.c.h.b16 %v401
  %v1517 = vunpack.c.l.b16 %v402
  %v1518 = vunpack.c.h.b16 %v402
  %v1519 = vunpack.c.l.b16 %v403
  %v1520 = vunpack.c.h.b16 %v403
  %v1521 = vunpack.c.l.b16 %v404
  %v1522 = vunpack.c.h.b16 %v404
  %v1523 = vunpack.c.l.b16 %v405
  %v1524 = vunpack.c.h.b16 %v405
  %v1525 = vunpack.c.l.b16 %v406
  %v1526 = vunpack.c.h.b16 %v406
  %v1527 = vunpack.c.l.b16 %v407
  %v1528 = vunpack.c.h.b16 %v407
  %v1529 = vunpack.c.l.b16 %v408
  %v1530 = vunpack.c.h.b16 %v408
  %v1531 = vunpack.c.l.b16 %v409
  %v1532 = vunpack.c.h.b16 %v409
  %v1533 = vunpack.c.l.b16 %v410
  %v1534 = vunpack.c.h.b16 %v410
  %v1535 = vunpack.c.l.b16 %v411
  %v1536 = vunpack.c.h.b16 %v411
  %v1537 = vunpack.c.l.b16 %v412
  %v1538 = vunpack.c.h.b16 %v412
  %v1539 = vunpack.c.l.b16 %v413
  %v1540 = vunpack.c.h.b16 %v413
  %v1541 = vunpack.c.l.b16 %v414
  %v1542 = vunpack.c.h.b16 %v414
  %v1543 = vunpack.c.l.b16 %v415
  %v1544 = vunpack.c.h.b16 %v415
  %v1545 = vunpack.c.l.b16 %v416
  %v1546 = vunpack.c.h.b16 %v416
  %v1547 = vunpack.c.l.b16 %v417
  %v1548 = vunpack.c.h.b16 %v417
  %v1549 = vunpack.c.l.b16 %v418
  %v1550 = vunpack.c.h.b16 %v418
  %v1551 = vunpack.c.l.b16 %v419
  %v1552 = vunpack.c.h.b16 %v419
  %v1553 = vunpack.c.l.b16 %v420
  %v1554 = vunpack.c.h.b16 %v420
  %v1555 = vunpack.c.l.b16 %v421
  %v1556 = vunpack.c.h.b16 %v421
  %v1557 = vunpack.c.l.b16 %v422
  %v1558 = vunpack.c.h.b16 %v422
  %v1559 = vunpack.c.l.b16 %v423
  %v1560 = vunpack.c.h.b16 %v423
  %v1561 = vunpack.c.l.b16 %v424
  %v1562 = vunpack.c.h.b16 %v424
  %v1563 = vunpack.c.l.b16 %v425
  %v1564 = vunpack.c.h.b16 %v425
  %v1565 = vunpack.c.l.b16 %v426
  %v1566 = vunpack.c.h.b16 %v426
  %v1567 = vunpack.c.l.b16 %v427
  %v1568 = vunpack.c.h.b16 %v427
  %v1569 = vunpack.c.l.b16 %v428
  %v1570 = vunpack.c.h.b16 %v428
  %v1571 = vunpack.c.l.b16 %v429
  %v1572 = vunpack.c.h.b16 %v429
  %v1573 = vunpack.c.l.b16 %v430
  %v1574 = vunpack.c.h.b16 %v430
  %v1575 = vunpack.c.l.b16 %v431
  %v1576 = vunpack.c.h.b16 %v431
  %v1577 = vunpack.c.l.b16 %v432
  %v1578 = vunpack.c.h.b16 %v432
  %v1579 = vunpack.c.l.b16 %v433
  %v1580 = vunpack.c.h.b16 %v433
  %v1581 = vunpack.c.l.b16 %v434
  %v1582 = vunpack.c.h.b16 %v434
  %v1583 = vunpack.c.l.b16 %v435
  %v1584 = vunpack.c.h.b16 %v435
  %v1585 = vunpack.c.l.b16 %v436
  %v1586 = vunpack.c.h.b16 %v436
  %v1587 = vunpack.c.l.b16 %v437
  %v1588 = vunpack.c.h.b16 %v437
  %v1589 = vunpack.c.l.b16 %v438
  %v1590 = vunpack.c.h.b16 %v438
  %v1591 = vunpack.c.l.b16 %v439
  %v1592 = vunpack.c.h.b16 %v439
  %v1593 = vunpack.c.l.b16 %v440
  %v1594 = vunpack.c.h.b16 %v440
  %v1595 = vunpack.c.l.b16 %v441
  %v1596 = vunpack.c.h.b16 %v441
  %v1597 = vunpack.c.l.b16 %v442
  %v1598 = vunpack.c.h.b16 %v442
  %v1599 = vunpack.c.l.b16 %v443
  %v1600 = vunpack.c.h.b16 %v443
  %v1601 = vunpack.c.l.b16 %v444
  %v1602 = vunpack.c.h.b16 %v444
  %v1603 = vunpack.c.l.b16 %v445
  %v1604 = vunpack.c.h.b16 %v445
  %v1605 = vunpack.c.l.b16 %v446
  %v1606 = vunpack.c.h.b16 %v446
  %v1607 = vunpack.c.l.b16 %v447
  %v1608 = vunpack.c.h.b16 %v447
  %v1609 = vunpack.c.l.b16 %v448
  %v1610 = vunpack.c.h.b16 %v448
  %v1611 = vunpack.c.l.b16 %v449
  %v1612 = vunpack.c.h.b16 %v449
  %v1613 = vunpack.c.l.b16 %v450
  %v1614 = vunpack.c.h.b16 %v450
  %v1615 = vunpack.c.l.b16 %v451
  %v1616 = vunpack.c.h.b16 %v451
  %v1617 = vunpack.c.l.b16 %v452
  %v1618 = vunpack.c.h.b16 %v452
  %v1619 = vunpack.c.l.b16 %v453
  %v1620 = vunpack.c.h.b16 %v453
  %v1621 = vunpack.c.l.b16 %v454
  %v1622 = vunpack.c.h.b16 %v454
  %v1623 = vunpack.c.l.b16 %v455
  %v1624 = vunpack.c.h.b16 %v455
  %v1625 = vunpack.c.l.b16 %v456
  %v1626 = vunpack.c.h.b16 %v456
  %v1627 = vunpack.c.l.b16 %v457
  %v1628 = vunpack.c.h.b16 %v457
  %v1629 = vunpack.c.l.b16 %v458
  %v1630 = vunpack.c.h.b16 %v458
  %v1631 = vunpack.c.l.b16 %v459
  %v1632 = vunpack.c.h.b16 %v459
  %v1633 = vunpack.c.l.b16 %v460
  %v1634 = vunpack.c.h.b16 %v460
  %v1635 = vunpack.c.l.b16 %v461
  %v1636 = vunpack.c.h.b16 %v461
  %v1637 = vunpack.c.l.b16 %v462
  %v1638 = vunpack.c.h.b16 %v462
  %v1639 = vunpack.c.l.b16 %v463
  %v1640 = vunpack.c.h.b16 %v463
  %v1641 = vunpack.c.l.b16 %v464
  %v1642 = vunpack.c.h.b16 %v464
  %v1643 = vunpack.c.l.b16 %v465
  %v1644 = vunpack.c.h.b16 %v465
  %v1645 = vunpack.c.l.b16 %v466
  %v1646 = vunpack.c.h.b16 %v466
  %v1647 = vunpack.c.l.b16 %v467
  %v1648 = vunpack.c.h.b16 %v467
  %v1649 = vunpack.c.l.b16 %v468
  %v1650 = vunpack.c.h.b16 %v468
  %v1651 = vunpack.c.l.b16 %v469
  %v1652 = vunpack.c.h.b16 %v469
  %v1653 = vunpack.c.l.b16 %v470
  %v1654 = vunpack.c.h.b16 %v470
  %v1655 = vunpack.c.l.b16 %v471
  %v1656 = vunpack.c.h.b16 %v471
  %v1657 = vunpack.c.l.b16 %v472
  %v1658 = vunpack.c.h.b16 %v472
  %v1659 = vunpack.c.l.b16 %v473
  %v1660 = vunpack.c.h.b16 %v473
  %v1661 = vunpack.c.l.b16 %v474
  %v1662 = vunpack.c.h.b16 %v474
  %v1663 = vunpack.c.l.b16 %v475
  %v1664 = vunpack.c.h.b16 %v475
  %v1665 = vunpack.c.l.b16 %v476
  %v1666 = vunpack.c.h.b16 %v476
  %v1667 = vunpack.c.l.b16 %v477
  %v1668 = vunpack.c.h.b16 %v477
  %v1669 = vunpack.c.l.b16 %v478
  %v1670 = vunpack.c.h.b16 %v478
  %v1671 = vunpack.c.l.b16 %v479
  %v1672 = vunpack.c.h.b16 %v479
  %v1673 = vunpack.c.l.b16 %v480
  %v1674 = vunpack.c.h.b16 %v480
  %v1675 = vunpack.c.l.b16 %v481
  %v1676 = vunpack.c.h.b16 %v481
  %v1677 = vunpack.c.l.b16 %v482
  %v1678 = vunpack.c.h.b16 %v482
  %v1679 = vunpack.c.l.b16 %v483
  %v1680 = vunpack.c.h.b16 %v483
  %v1681 = vunpack.c.l.b16 %v484
  %v1682 = vunpack.c.h.b16 %v484
  %v1683 = vunpack.c.l.b16 %v485
  %v1684 = vunpack.c.h.b16 %v485
  %v1685 = vunpack.c.l.b16 %v486
  %v1686 = vunpack.c.h.b16 %v486
  %v1687 = vunpack.c.l.b16 %v487
  %v1688 = vunpack.c.h.b16 %v487
  %v1689 = vunpack.c.l.b16 %v488
  %v1690 = vunpack.c.h.b16 %v488
  %v1691 = vunpack.c.l.b16 %v489
  %v1692 = vunpack.c.h.b16 %v489
  %v1693 = vunpack.c.l.b16 %v490
  %v1694 = vunpack.c.h.b16 %v490
  %v1695 = vunpack.c.l.b16 %v491
  %v1696 = vunpack.c.h.b16 %v491
  %v1697 = vunpack.c.l.b16 %v492
  %v1698 = vunpack.c.h.b16 %v492
  %v1699 = vunpack.c.l.b16 %v493
  %v1700 = vunpack.c.h.b16 %v493
  %v1701 = vunpack.c.l.b16 %v494
  %v1702 = vunpack.c.h.b16 %v494
  %v1703 = vunpack.c.l.b16 %v495
  %v1704 = vunpack.c.h.b16 %v495
  %v1705 = vunpack.c.l.b16 %v496
  %v1706 = vunpack.c.h.b16 %v496
  %v1707 = vunpack.c.l.b16 %v497
  %v1708 = vunpack.c.h.b16 %v497
  %v1709 = vunpack.c.l.b16 %v498
  %v1710 = vunpack.c.h.b16 %v498
  %v1711 = vunpack.c.l.b16 %v499
  %v1712 = vunpack.c.h.b16 %v499
  %v1713 = vunpack.c.l.b16 %v500
  %v1714 = vunpack.c.h.b16 %v500
  %v1715 = vunpack.c.l.b16 %v501
  %v1716 = vunpack.c.h.b16 %v501
  %v1717 = vunpack.c.l.b16 %v502
  %v1718 = vunpack.c.h.b16 %v502
  %v1719 = vunpack.c.l.b16 %v503
  %v1720 = vunpack.c.h.b16 %v503
  %v1721 = vunpack.c.l.b16 %v504
  %v1722 = vunpack.c.h.b16 %v504
  %v1723 = vunpack.c.l.b16 %v505
  %v1724 = vunpack.c.h.b16 %v505
  %v1725 = vunpack.c.l.b16 %v506
  %v1726 = vunpack.c.h.b16 %v506
  %v1727 = vunpack.c.l.b16 %v507
  %v1728 = vunpack.c.h.b16 %v507
  %v1729 = vunpack.c.l.b16 %v508
  %v1730 = vunpack.c.h.b16 %v508
  %v1731 = vunpack.c.l.b16 %v509
  %v1732 = vunpack.c.h.b16 %v509
  %v1733 = vunpack.c.l.b16 %v510
  %v1734 = vunpack.c.h.b16 %v510
  %v1735 = vunpack.c.l.b16 %v511
  %v1736 = vunpack.c.h.b16 %v511
  %v1737 = vunpack.c.l.b16 %v512
  %v1738 = vunpack.c.h.b16 %v512
  %v1739 = vunpack.c.l.b16 %v513
  %v1740 = vunpack.c.h.b16 %v513
  %v1741 = vunpack.c.l.b16 %v514
  %v1742 = vunpack.c.h.b16 %v514
  %v1743 = vunpack.c.l.b16 %v515
  %v1744 = vunpack.c.h.b16 %v515
  %v1745 = vunpack.c.l.b16 %v516
  %v1746 = vunpack.c.h.b16 %v516
  %v1747 = vunpack.c.l.b16 %v517
  %v1748 = vunpack.c.h.b16 %v517
  %v1749 = vunpack.c.l.b16 %v518
  %v1750 = vunpack.c.h.b16 %v518
  %v1751 = vunpack.c.l.b16 %v519
  %v1752 = vunpack.c.h.b16 %v519
  %v1753 = vunpack.c.l.b16 %v520
  %v1754 = vunpack.c.h.b16 %v520
  %v1755 = vunpack.c.l.b16 %v521
  %v1756 = vunpack.c.h.b16 %v521
  %v1757 = vunpack.c.l.b16 %v522
  %v1758 = vunpack.c.h.b16 %v522
  %v1759 = vunpack.c.l.b16 %v523
  %v1760 = vunpack.c.h.b16 %v523
  %v1761 = vunpack.c.l.b16 %v524
  %v1762 = vunpack.c.h.b16 %v524
  %v1763 = vunpack.c.l.b16 %v525
  %v1764 = vunpack.c.h.b16 %v525
  %v1765 = vunpack.c.l.b16 %v526
  %v1766 = vunpack.c.h.b16 %v526
  %v1767 = vunpack.c.l.b16 %v527
  %v1768 = vunpack.c.h.b16 %v527
  %v1769 = vunpack.c.l.b16 %v528
  %v1770 = vunpack.c.h.b16 %v528
  %v1771 = vunpack.c.l.b16 %v529
  %v1772 = vunpack.c.h.b16 %v529
  %v1773 = vunpack.c.l.b16 %v530
  %v1774 = vunpack.c.h.b16 %v530
  %v1775 = vunpack.c.l.b16 %v531
  %v1776 = vunpack.c.h.b16 %v531
  %v1777 = vunpack.c.l.b16 %v532
  %v1778 = vunpack.c.h.b16 %v532
  %v1779 = vunpack.c.l.b16 %v533
  %v1780 = vunpack.c.h.b16 %v533
  %v1781 = vunpack.c.l.b16 %v534
  %v1782 = vunpack.c.h.b16 %v534
  %v1783 = vunpack.c.l.b16 %v535
  %v1784 = vunpack.c.h.b16 %v535
  %v1785 = vunpack.c.l.b16 %v536
  %v1786 = vunpack.c.h.b16 %v536
  %v1787 = vunpack.c.l.b16 %v537
  %v1788 = vunpack.c.h.b16 %v537
  %v1789 = vunpack.c.l.b16 %v538
  %v1790 = vunpack.c.h.b16 %v538
  %v1791 = vunpack.c.l.b16 %v539
  %v1792 = vunpack.c.h.b16 %v539
  %v1793 = vunpack.c.l.b16 %v540
  %v1794 = vunpack.c.h.b16 %v540
  %v1795 = vunpack.c.l.b16 %v541
  %v1796 = vunpack.c.h.b16 %v541
  %v1797 = vunpack.c.l.b16 %v542
  %v1798 = vunpack.c.h.b16 %v542
  %v1799 = vunpack.c.l.b16 %v543
  %v1800 = vunpack.c.h.b16 %v543
  %v1801 = vunpack.c.l.b16 %v544
  %v1802 = vunpack.c.h.b16 %v544
  %v1803 = vunpack.c.l.b16 %v545
  %v1804 = vunpack.c.h.b16 %v545
  %v1805 = vunpack.c.l.b16 %v546
  %v1806 = vunpack.c.h.b16 %v546
  %v1807 = vunpack.c.l.b16 %v547
  %v1808 = vunpack.c.h.b16 %v547
  %v1809 = vunpack.c.l.b16 %v548
  %v1810 = vunpack.c.h.b16 %v548
  %v1811 = vunpack.c.l.b16 %v549
  %v1812 = vunpack.c.h.b16 %v549
  %v1813 = vunpack.c.l.b16 %v550
  %v1814 = vunpack.c.h.b16 %v550
  %v1815 = vunpack.c.l.b16 %v551
  %v1816 = vunpack.c.h.b16 %v551
  %v1817 = vunpack.c.l.b16 %v552
  %v1818 = vunpack.c.h.b16 %v552
  %v1819 = vunpack.c.l.b16 %v553
  %v1820 = vunpack.c.h.b16 %v553
  %v1821 = vunpack.c.l.b16 %v554
  %v1822 = vunpack.c.h.b16 %v554
  %v1823 = vunpack.c.l.b16 %v555
  %v1824 = vunpack.c.h.b16 %v555
  %v1825 = vunpack.c.l.b16 %v556
  %v1826 = vunpack.c.h.b16 %v556
  %v1827 = vunpack.c.l.b16 %v557
  %v1828 = vunpack.c.h.b16 %v557
  %v1829 = vunpack.c.l.b16 %v558
  %v1830 = vunpack.c.h.b16 %v558
  %v1831 = vunpack.c.l.b16 %v559
  %v1832 = vunpack.c.h.b16 %v559
  %v1833 = vunpack.c.l.b16 %v560
  %v1834 = vunpack.c.h.b16 %v560
  %v1835 = vunpack.c.l.b16 %v561
  %v1836 = vunpack.c.h.b16 %v561
  %v1837 = vunpack.c.l.b16 %v562
  %v1838 = vunpack.c.h.b16 %v562
  %v1839 = vunpack.c.l.b16 %v563
  %v1840 = vunpack.c.h.b16 %v563
  %v1841 = vunpack.c.l.b16 %v564
  %v1842 = vunpack.c.h.b16 %v564
  %v1843 = vunpack.c.l.b16 %v565
  %v1844 = vunpack.c.h.b16 %v565
  %v1845 = vunpack.c.l.b16 %v566
  %v1846 = vunpack.c.h.b16 %v566
  %v1847 = vunpack.c.l.b16 %v567
  %v1848 = vunpack.c.h.b16 %v567
  %v1849 = vunpack.c.l.b16 %v568
  %v1850 = vunpack.c.h.b16 %v568
  %v1851 = vunpack.c.l.b16 %v569
  %v1852 = vunpack.c.h.b16 %v569
  %v1853 = vunpack.c.l.b16 %v570
  %v1854 = vunpack.c.h.b16 %v570
  %v1855 = vunpack.c.l.b16 %v571
  %v1856 = vunpack.c.h.b16 %v571
  %v1857 = vunpack.c.l.b16 %v572
  %v1858 = vunpack.c.h.b16 %v572
  %v1859 = vunpack.c.l.b16 %v573
  %v1860 = vunpack.c.h.b16 %v573
  %v1861 = vunpack.c.l.b16 %v574
  %v1862 = vunpack.c.h.b16 %v574
  %v1863 = vunpack.c.l.b16 %v575
  %v1864 = vunpack.c.h.b16 %v575
  %v1865 = vunpack.c.l.b16 %v576
  %v1866 = vunpack.c.h.b16 %v576
  %v1867 = vunpack.c.l.b16 %v577
  %v1868 = vunpack.c.h.b16 %v577
  %v1869 = vunpack.c.l.b16 %v578
  %v1870 = vunpack.c.h.b16 %v578
  %v1871 = vunpack.c.l.b16 %v579
  %v1872 = vunpack.c.h.b16 %v579
  %v1873 = vunpack.c.l.b16 %v580
  %v1874 = vunpack.c.h.b16 %v580
  %v1875 = vunpack.c.l.b16 %v581
  %v1876 = vunpack.c.h.b16 %v581
  %v1877 = vunpack.c.l.b16 %v582
  %v1878 = vunpack.c.h.b16 %v582
  %v1879 = vunpack.c.l.b16 %v583
  %v1880 = vunpack.c.h.b16 %v583
  %v1881 = vunpack.c.l.b16 %v584
  %v1882 = vunpack.c.h.b16 %v584
  %v1883 = vunpack.c.l.b16 %v585
  %v1884 = vunpack.c.h.b16 %v585
  %v1885 = vunpack.c.l.b16 %v586
  %v1886 = vunpack.c.h.b16 %v586
  %v1887 = vunpack.c.l.b16 %v587
  %v1888 = vunpack.c.h.b16 %v587
  %v1889 = vunpack.c.l.b16 %v588
  %v1890 = vunpack.c.h.b16 %v588
  %v1891 = vunpack.c.l.b16 %v589
  %v1892 = vunpack.c.h.b16 %v589
  %v1893 = vunpack.c.l.b16 %v590
  %v1894 = vunpack.c.h.b16 %v590
  %v1895 = vunpack.c.l.b16 %v591
  %v1896 = vunpack.c.h.b16 %v591
  %v1897 = vunpack.c.l.b16 %v592
  %v1898 = vunpack.c.h.b16 %v592
  %v1899 = vunpack.c.l.b16 %v593
  %v1900 = vunpack.c.h.b16 %v593
  %v1901 = vunpack.c.l.b16 %v594
  %v1902 = vunpack.c.h.b16 %v594
  %v1903 = vunpack.c.l.b16 %v595
  %v1904 = vunpack.c.h.b16 %v595
  %v1905 = vunpack.c.l.b16 %v596
  %v1906 = vunpack.c.h.b16 %v596
  %v1907 = vunpack.c.l.b16 %v597
  %v1908 = vunpack.c.h.b16 %v597
  %v1909 = vunpack.c.l.b16 %v598
  %v1910 = vunpack.c.h.b16 %v598
  %v1911 = vunpack.c.l.b16 %v599
  %v1912 = vunpack.c.h.b16 %v599
  %v1913 = vunpack.c.l.b16 %v600
  %v1914 = vunpack.c.h.b16 %v600
  %v1915 = vunpack.c.l.b16 %v601
  %v1916 = vunpack.c.h.b16 %v601
  %v1917 = vunpack.c.l.b16 %v602
  %v1918 = vunpack.c.h.b16 %v602
  %v1919 = vunpack.c.l.b16 %v603
  %v1920 = vunpack.c.h.b16 %v603
  %v1921 = vunpack.c.l.b16 %v604
  %v1922 = vunpack.c.h.b16 %v604
  %v1923 = vunpack.c.l.b16 %v605
  %v1924 = vunpack.c.h.b16 %v605
  %v1925 = vunpack.c.l.b16 %v606
  %v1926 = vunpack.c.h.b16 %v606
  %v1927 = vunpack.c.l.b16 %v607
  %v1928 = vunpack.c.h.b16 %v607
  %v1929 = vunpack.c.l.b16 %v608
  %v1930 = vunpack.c.h.b16 %v608
  %v1931 = vunpack.c.l.b16 %v609
  %v1932 = vunpack.c.h.b16 %v609
  %v1933 = vunpack.c.l.b16 %v610
  %v1934 = vunpack.c.h.b16 %v610
  %v1935 = vunpack.c.l.b16 %v611
  %v1936 = vunpack.c.h.b16 %v611
  %v1937 = vunpack.c.l.b16 %v612
  %v1938 = vunpack.c.h.b16 %v612
  %v1939 = vunpack.c.l.b16 %v613
  %v1940 = vunpack.c.h.b16 %v613
  %v1941 = vunpack.c.l.b16 %v614
  %v1942 = vunpack.c.h.b16 %v614
  %v1943 = vunpack.c.l.b16 %v615
  %v1944 = vunpack.c.h.b16 %v615
  %v1945 = vunpack.c.l.b16 %v616
  %v1946 = vunpack.c.h.b16 %v616
  %v1947 = vunpack.c.l.b16 %v617
  %v1948 = vunpack.c.h.b16 %v617
  %v1949 = vunpack.c.l.b16 %v618
  %v1950 = vunpack.c.h.b16 %v618
  %v1951 = vunpack.c.l.b16 %v619
  %v1952 = vunpack.c.h.b16 %v619
  %v1953 = vunpack.c.l.b16 %v620
  %v1954 = vunpack.c.h.b16 %v620
  %v1955 = vunpack.c.l.b16 %v621
  %v1956 = vunpack.c.h.b16 %v621
  %v1957 = vunpack.c.l.b16 %v622
  %v1958 = vunpack.c.h.b16 %v622
  %v1959 = vunpack.c.l.b16 %v623
  %v1960 = vunpack.c.h.b16 %v623
  %v1961 = vunpack.c.l.b16 %v624
  %v1962 = vunpack.c.h.b16 %v624
  %v1963 = vunpack.c.l.b16 %v625
  %v1964 = vunpack.c.h.b16 %v625
  %v1965 = vunpack.c.l.b16 %v626
  %v1966 = vunpack.c.h.b16 %v626
  %v1967 = vunpack.c.l.b16 %v627
  %v1968 = vunpack.c.h.b16 %v627
  %v1969 = vunpack.c.l.b16 %v628
  %v1970 = vunpack.c.h.b16 %v628
  %v1971 = vunpack.c.l.b16 %v629
  %v1972 = vunpack.c.h.b16 %v629
  %v1973 = vunpack.c.l.b16 %v630
  %v1974 = vunpack.c.h.b16 %v630
  %v1975 = vunpack.c.l.b16 %v631
  %v1976 = vunpack.c.h.b16 %v631
  %v1977 = vunpack.c.l.b16 %v632
  %v1978 = vunpack.c.h.b16 %v632
  %v1979 = vunpack.c.l.b16 %v633
  %v1980 = vunpack.c.h.b16 %v633
  %v1981 = vunpack.c.l.b16 %v634
  %v1982 = vunpack.c.h.b16 %v634
  %v1983 = vunpack.c.l.b16 %v635
  %v1984 = vunpack.c.h.b16 %v635
  %v1985 = vunpack.c.l.b16 %v636
  %v1986 = vunpack.c.h.b16 %v636
  %v1987 = vunpack.c.l.b16 %v637
  %v1988 = vunpack.c.h.b16 %v637
  %v1989 = vunpack.c.l.b16 %v638
  %v1990 = vunpack.c.h.b16 %v638
  %v1991 = vunpack.c.l.b16 %v639
  %v1992 = vunpack.c.h.b16 %v639
  %v1993 = vunpack.c.l.b16 %v640
  %v1994 = vunpack.c.h.b16 %v640
  %v1995 = vunpack.c.l.b16 %v641
  %v1996 = vunpack.c.h.b16 %v641
  %v1997 = vunpack.c.l.b16 %v642
  %v1998 = vunpack.c.h.b16 %v642
  %v1999 = vunpack.c.l.b16 %v643
  %v2000 = vunpack.c.h.b16 %v643
  %v2001 = vunpack.c.l.b16 %v644
  %v2002 = vunpack.c.h.b16 %v644
  %v2003 = vunpack.c.l.b16 %v645
  %v2004 = vunpack.c.h.b16 %v645
  %v2005 = vunpack.c.l.b16 %v646
  %v2006 = vunpack.c.h.b16 %v646
  %v2007 = vunpack.c.l.b16 %v647
  %v2008 = vunpack.c.h.b16 %v647
  %v2009 = vunpack.c.l.b16 %v648
  %v2010 = vunpack.c.h.b16 %v648
  %v2011 = vunpack.c.l.b16 %v649
  %v2012 = vunpack.c.h.b16 %v649
  %v2013 = vunpack.c.l.b16 %v650
  %v2014 = vunpack.c.h.b16 %v650
  %v2015 = vunpack.c.l.b16 %v651
  %v2016 = vunpack.c.h.b16 %v651
  %v2017 = vunpack.c.l.b16 %v652
  %v2018 = vunpack.c.h.b16 %v652
  %v2019 = vunpack.c.l.b16 %v653
  %v2020 = vunpack.c.h.b16 %v653
  %v2021 = vunpack.c.l.b16 %v654
  %v2022 = vunpack.c.h.b16 %v654
  %v2023 = vunpack.c.l.b16 %v655
  %v2024 = vunpack.c.h.b16 %v655
  %v2025 = vunpack.c.l.b16 %v656
  %v2026 = vunpack.c.h.b16 %v656
  %v2027 = vunpack.c.l.b16 %v657
  %v2028 = vunpack.c.h.b16 %v657
  %v2029 = vunpack.c.l.b16 %v658
  %v2030 = vunpack.c.h.b16 %v658
  %v2031 = vunpack.c.l.b16 %v659
  %v2032 = vunpack.c.h.b16 %v659
  %v2033 = vunpack.c.l.b16 %v660
  %v2034 = vunpack.c.h.b16 %v660
  %v2035 = vunpack.c.l.b16 %v661
  %v2036 = vunpack.c.h.b16 %v661
  %v2037 = vunpack.c.l.b16 %v662
  %v2038 = vunpack.c.h.b16 %v662
  %v2039 = vunpack.c.l.b16 %v663
  %v2040 = vunpack.c.h.b16 %v663
  %v2041 = vunpack.c.l.b16 %v664
  %v2042 = vunpack.c.h.b16 %v664
  %v2043 = vunpack.c.l.b16 %v665
  %v2044 = vunpack.c.h.b16 %v665
  %v2045 = vunpack.c.l.b16 %v666
  %v2046 = vunpack.c.h.b16 %v666
  %v2047 = vunpack.c.l.b16 %v667
  %v2048 = vunpack.c.h.b16 %v667
  %v2049 = vunpack.c.l.b16 %v668
  %v2050 = vunpack.c.h.b16 %v668
  %v2051 = vunpack.c.l.b16 %v669
  %v2052 = vunpack.c.h.b16 %v669
  %v2053 = vunpack.c.l.b16 %v670
  %v2054 = vunpack.c.h.b16 %v670
  %v2055 = vunpack.c.l.b16 %v671
  %v2056 = vunpack.c.h.b16 %v671
  %v2057 = vunpack.c.l.b16 %v672
  %v2058 = vunpack.c.h.b16 %v672
  %v2059 = vunpack.c.l.b16 %v673
  %v2060 = vunpack.c.h.b16 %v673
  %v2061 = vunpack.c.l.b16 %v674
  %v2062 = vunpack.c.h.b16 %v674
  %v2063 = vunpack.c.l.b16 %v675
  %v2064 = vunpack.c.h.b16 %v675
  %v2065 = vunpack.c.l.b16 %v676
  %v2066 = vunpack.c.h.b16 %v676
  %v2067 = vunpack.c.l.b16 %v677
  %v2068 = vunpack.c.h.b16 %v677
  %v2069 = vunpack.c.l.b16 %v678
  %v2070 = vunpack.c.h.b16 %v678
  %v2071 = vunpack.c.l.b16 %v679
  %v2072 = vunpack.c.h.b16 %v679
  %v2073 = vunpack.c.l.b16 %v680
  %v2074 = vunpack.c.h.b16 %v680
  %v2075 = vunpack.c.l.b16 %v681
  %v2076 = vunpack.c.h.b16 %v681
  %v2077 = vunpack.c.l.b16 %v682
  %v2078 = vunpack.c.h.b16 %v682
  %v2079 = vunpack.c.l.b16 %v683
  %v2080 = vunpack.c.h.b16 %v683
  %v2081 = vunpack.c.l.b16 %v684
  %v2082 = vunpack.c.h.b16 %v684
  %v2083 = vunpack.c.l.b16 %v685
  %v2084 = vunpack.c.h.b16 %v685
  %v2085 = vunpack.c.l.b16 %v686
  %v2086 = vunpack.c.h.b16 %v686
  %v2087 = vunpack.c.l.b16 %v687
  %v2088 = vunpack.c.h.b16 %v687
  %v2089 = vunpack.c.l.b16 %v688
  %v2090 = vunpack.c.h.b16 %v688
  %v2091 = vunpack.c.l.b16 %v689
  %v2092 = vunpack.c.h.b16 %v689
  %v2093 = vunpack.c.l.b16 %v690
  %v2094 = vunpack.c.h.b16 %v690
  %v2095 = vunpack.c.l.b16 %v691
  %v2096 = vunpack.c.h.b16 %v691
  %v2097 = vunpack.c.l.b16 %v692
  %v2098 = vunpack.c.h.b16 %v692
  %v2099 = vunpack.c.l.b16 %v693
  %v2100 = vunpack.c.h.b16 %v693
  %v2101 = vunpack.c.l.b16 %v694
  %v2102 = vunpack.c.h.b16 %v694
  %v2103 = vunpack.c.l.b16 %v695
  %v2104 = vunpack.c.h.b16 %v695
  %v2105 = vunpack.c.l.b16 %v696
  %v2106 = vunpack.c.h.b16 %v696
  %v2107 = vunpack.c.l.b16 %v697
  %v2108 = vunpack.c.h.b16 %v697
  %v2109 = vunpack.c.l.b16 %v698
  %v2110 = vunpack.c.h.b16 %v698
  %v2111 = vunpack.c.l.b16 %v699
  %v2112 = vunpack.c.h.b16 %v699
  %v2113 = vunpack.c.l.b16 %v700
  %v2114 = vunpack.c.h.b16 %v700
  %v2115 = vunpack.c.l.b16 %v701
  %v2116 = vunpack.c.h.b16 %v701
  %v2117 = vunpack.c.l.b16 %v702
  %v2118 = vunpack.c.h.b16 %v702
  %v2119 = vunpack.c.l.b16 %v703
  %v2120 = vunpack.c.h.b16 %v703
  %v2121 = vunpack.c.l.b16 %v704
  %v2122 = vunpack.c.h.b16 %v704
  %v2123 = vunpack.c.l.b16 %v705
  %v2124 = vunpack.c.h.b16 %v705
  %v2125 = vunpack.c.l.b16 %v706
  %v2126 = vunpack.c.h.b16 %v706
  %v2127 = vunpack.c.l.b16 %v707
  %v2128 = vunpack.c.h.b16 %v707
  %v2129 = vunpack.c.l.b16 %v708
  %v2130 = vunpack.c.h.b16 %v708
  %v2131 = vunpack.c.l.b16 %v709
  %v2132 = vunpack.c.h.b16 %v709
  %v2133 = vunpack.c.l.b16 %v710
  %v2134 = vunpack.c.h.b16 %v710
  %v2135 = vunpack.c.l.b16 %v711
  %v2136 = vunpack.c.h.b16 %v711
  %v2137 = vunpack.c.l.b16 %v712
  %v2138 = vunpack.c.h.b16 %v712
  %v2139 = vunpack.c.l.b16 %v713
  %v2140 = vunpack.c.h.b16 %v713
  %v2141 = vunpack.c.l.b16 %v714
  %v2142 = vunpack.c.h.b16 %v714
  %v2143 = vunpack.c.l.b16 %v715
  %v2144 = vunpack.c.h.b16 %v715
  %v2145 = vunpack.c.l.b16 %v716
  %v2146 = vunpack.c.h.b16 %v716
  %v2147 = vunpack.c.l.b16 %v717
  %v2148 = vunpack.c.h.b16 %v717
  %v2149 = vunpack.c.l.b16 %v718
  %v2150 = vunpack.c.h.b16 %v718
  %v2151 = vunpack.c.l.b16 %v719
  %v2152 = vunpack.c.h.b16 %v719
  %v2153 = vunpack.c.l.b16 %v720
  %v2154 = vunpack.c.h.b16 %v720
  %v2155 = vunpack.c.l.b16 %v721
  %v2156 = vunpack.c.h.b16 %v721
  %v2157 = vunpack.c.l.b16 %v722
  %v2158 = vunpack.c.h.b16 %v722
  %v2159 = vunpack.c.l.b16 %v723
  %v2160 = vunpack.c.h.b16 %v723
  %v2161 = vunpack.c.l.b16 %v724
  %v2162 = vunpack.c.h.b16 %v724
  %v2163 = vunpack.c.l.b16 %v725
  %v2164 = vunpack.c.h.b16 %v725
  %v2165 = vunpack.c.l.b16 %v726
  %v2166 = vunpack.c.h.b16 %v726
  %v2167 = vunpack.c.l.b16 %v727
  %v2168 = vunpack.c.h.b16 %v727
  %v2169 = vunpack.c.l.b16 %v728
  %v2170 = vunpack.c.h.b16 %v728
  %v2171 = vunpack.c.l.b16 %v729
  %v2172 = vunpack.c.h.b16 %v729
  %v2173 = vunpack.c.l.b16 %v730
  %v2174 = vunpack.c.h.b16 %v730
  %v2175 = vunpack.c.l.b16 %v731
  %v2176 = vunpack.c.h.b16 %v731
  %v2177 = vunpack.c.l.b16 %v732
  %v2178 = vunpack.c.h.b16 %v732
  %v2179 = vunpack.c.l.b16 %v733
  %v2180 = vunpack.c.h.b16 %v733
  %v2181 = vunpack.c.l.b16 %v734
  %v2182 = vunpack.c.h.b16 %v734
  %v2183 = vunpack.c.l.b16 %v735
  %v2184 = vunpack.c.h.b16 %v735
  %v2185 = vunpack.c.l.b16 %v736
  %v2186 = vunpack.c.h.b16 %v736
  %v2187 = vunpack.c.l.b16 %v737
  %v2188 = vunpack.c.h.b16 %v737
  %v2189 = vunpack.c.l.b16 %v738
  %v2190 = vunpack.c.h.b16 %v738
  %v2191 = vunpack.c.l.b16 %v739
  %v2192 = vunpack.c.h.b16 %v739
  %v2193 = vunpack.c.l.b16 %v740
  %v2194 = vunpack.c.h.b16 %v740
  %v2195 = vunpack.c.l.b16 %v741
  %v2196 = vunpack.c.h.b16 %v741
  %v2197 = vunpack.c.l.b16 %v742
  %v2198 = vunpack.c.h.b16 %v742
  %v2199 = vunpack.c.l.b16 %v743
  %v2200 = vunpack.c.h.b16 %v743
  %v2201 = vunpack.c.l.b16 %v744
  %v2202 = vunpack.c.h.b16 %v744
  %v2203 = vunpack.c.l.b16 %v745
  %v2204 = vunpack.c.h.b16 %v745
  %v2205 = vunpack.c.l.b16 %v746
  %v2206 = vunpack.c.h.b16 %v746
  %v2207 = vunpack.c.l.b16 %v747
  %v2208 = vunpack.c.h.b16 %v747
  %v2209 = vunpack.c.l.b16 %v748
  %v2210 = vunpack.c.h.b16 %v748
  %v2211 = vunpack.c.l.b16 %v749
  %v2212 = vunpack.c.h.b16 %v749
  %v2213 = vunpack.c.l.b16 %v750
  %v2214 = vunpack.c.h.b16 %v750
  %v2215 = vunpack.c.l.b16 %v751
  %v2216 = vunpack.c.h.b16 %v751
  %v2217 = vunpack.c.l.b16 %v752
  %v2218 = vunpack.c.h.b16 %v752
  %v2219 = vunpack.c.l.b16 %v753
  %v2220 = vunpack.c.h.b16 %v753
  %v2221 = vunpack.c.l.b16 %v754
  %v2222 = vunpack.c.h.b16 %v754
  %v2223 = vunpack.c.l.b16 %v755
  %v2224 = vunpack.c.h.b16 %v755
  %v2225 = vunpack.c.l.b16 %v756
  %v2226 = vunpack.c.h.b16 %v756
  %v2227 = vunpack.c.l.b16 %v757
  %v2228 = vunpack.c.h.b16 %v757
  %v2229 = vunpack.c.l.b16 %v758
  %v2230 = vunpack.c.h.b16 %v758
  %v2231 = vunpack.c.l.b16 %v759
  %v2232 = vunpack.c.h.b16 %v759
  %v2233 = vunpack.c.l.b16 %v760
  %v2234 = vunpack.c.h.b16 %v760
  %v2235 = vunpack.c.l.b16 %v761
  %v2236 = vunpack.c.h.b16 %v761
  %v2237 = vunpack.c.l.b16 %v762
  %v2238 = vunpack.c.h.b16 %v762
  %v2239 = vunpack.c.l.b16 %v763
  %v2240 = vunpack.c.h.b16 %v763
  %v2241 = vunpack.c.l.b16 %v764
  %v2242 = vunpack.c.h.b16 %v764
  %v2243 = vunpack.c.l.b16 %v765
  %v2244 = vunpack.c.h.b16 %v765
  %v2245 = vunpack.c.l.b16 %v766
  %v2246 = vunpack.c.h.b16 %v766
  %v2247 = vunpack.c.l.b16 %v767
  %v2248 = vunpack.c.h.b16 %v767
  %v2249 = vunpack.c.l.b16 %v768
  %v2250 = vunpack.c.h.b16 %v768
  %v2251 = vunpack.c.l.b16 %v769
  %v2252 = vunpack.c.h.b16 %v769
  %v2253 = vunpack.c.l.b16 %v770
  %v2254 = vunpack.c.h.b16 %v770
  %v2255 = vunpack.c.l.b16 %v771
  %v2256 = vunpack.c.h.b16 %v771
  %v2257 = vunpack.c.l.b16 %v772
  %v2258 = vunpack.c.h.b16 %v772
  %v2259 = vunpack.c.l.b16 %v773
  %v2260 = vunpack.c.h.b16 %v773
  %v2261 = vunpack.c.l.b16 %v774
  %v2262 = vunpack.c.h.b16 %v774
  %v2263 = vunpack.c.l.b16 %v775
  %v2264 = vunpack.c.h.b16 %v775
  %v2265 = vunpack.c.l.b16 %v776
  %v2266 = vunpack.c.h.b16 %v776
  %v2267 = vunpack.c.l.b16 %v777
  %v2268 = vunpack.c.h.b16 %v777
  %v2269 = vunpack.c.l.b16 %v778
  %v2270 = vunpack.c.h.b16 %v778
  %v2271 = vunpack.c.l.b16 %v779
  %v2272 = vunpack.c.h.b16 %v779
  %v2273 = vunpack.c.l.b16 %v780
  %v2274 = vunpack.c.h.b16 %v780
  %v2275 = vunpack.c.l.b16 %v781
  %v2276 = vunpack.c.h.b16 %v781
  %v2277 = vunpack.c.l.b16 %v782
  %v2278 = vunpack.c.h.b16 %v782
  %v2279 = vunpack.c.l.b16 %v783
  %v2280 = vunpack.c.h.b16 %v783
  %v2281 = vunpack.c.l.b16 %v784
  %v2282 = vunpack.c.h.b16 %v784
  %v2283 = vunpack.c.l.b16 %v785
  %v2284 = vunpack.c.h.b16 %v785
  %v2285 = vunpack.c.l.b16 %v786
  %v2286 = vunpack.c.h.b16 %v786
  %v2287 = vunpack.c.l.b16 %v787
  %v2288 = vunpack.c.h.b16 %v787
  %v2289 = vunpack.c.l.b16 %v788
  %v2290 = vunpack.c.h.b16 %v788
  %v2291 = vunpack.c.l.b16 %v789
  %v2292 = vunpack.c.h.b16 %v789
  %v2293 = vunpack.c.l.b16 %v790
  %v2294 = vunpack.c.h.b16 %v790
  %v2295 = vunpack.c.l.b16 %v791
  %v2296 = vunpack.c.h.b16 %v791
  %v2297 = vunpack.c.l.b16 %v792
  %v2298 = vunpack.c.h.b16 %v792
  %v2299 = vunpack.c.l.b16 %v793
  %v2300 = vunpack.c.h.b16 %v793
  %v2301 = vunpack.c.l.b16 %v794
  %v2302 = vunpack.c.h.b16 %v794
  %v2303 = vunpack.c.l.b16 %v795
  %v2304 = vunpack.c.h.b16 %v795
  %v2305 = vunpack.c.l.b16 %v796
  %v2306 = vunpack.c.h.b16 %v796
  %v2307 = vunpack.c.l.b16 %v797
  %v2308 = vunpack.c.h.b16 %v797
  %v2309 = vunpack.c.l.b16 %v798
  %v2310 = vunpack.c.h.b16 %v798
  %v2311 = vunpack.c.l.b16 %v799
  %v2312 = vunpack.c.h.b16 %v799
  %v2313 = vunpack.c.l.b16 %v800
  %v2314 = vunpack.c.h.b16 %v800
  %v2315 = vunpack.c.l.b16 %v801
  %v2316 = vunpack.c.h.b16 %v801
  %v2317 = vunpack.c.l.b16 %v802
  %v2318 = vunpack.c.h.b16 %v802
  %v2319 = vunpack.c.l.b16 %v803
  %v2320 = vunpack.c.h.b16 %v803
  %v2321 = vunpack.c.l.b16 %v804
  %v2322 = vunpack.c.h.b16 %v804
  %v2323 = vunpack.c.l.b16 %v805
  %v2324 = vunpack.c.h.b16 %v805
  %v2325 = vunpack.c.l.b16 %v806
  %v2326 = vunpack.c.h.b16 %v806
  %v2327 = vunpack.c.l.b16 %v807
  %v2328 = vunpack.c.h.b16 %v807
  %v2329 = vunpack.c.l.b16 %v808
  %v2330 = vunpack.c.h.b16 %v808
  %v2331 = vunpack.c.l.b16 %v809
  %v2332 = vunpack.c.h.b16 %v809
  %v2333 = vunpack.c.l.b16 %v810
  %v2334 = vunpack.c.h.b16 %v810
  %v2335 = vunpack.c.l.b16 %v811
  %v2336 = vunpack.c.h.b16 %v811
  %v2337 = vunpack.c.l.b16 %v812
  %v2338 = vunpack.c.h.b16 %v812
  %v2339 = vunpack.c.l.b16 %v813
  %v2340 = vunpack.c.h.b16 %v813
  %v2341 = vunpack.c.l.b16 %v814
  %v2342 = vunpack.c.h.b16 %v814
  %v2343 = vunpack.c.l.b16 %v815
  %v2344 = vunpack.c.h.b16 %v815
  %v2345 = vunpack.c.l.b16 %v816
  %v2346 = vunpack.c.h.b16 %v816
  %v2347 = vunpack.c.l.b16 %v817
  %v2348 = vunpack.c.h.b16 %v817
  %v2349 = vunpack.c.l.b16 %v818
  %v2350 = vunpack.c.h.b16 %v818
  %v2351 = vunpack.c.l.b16 %v819
  %v2352 = vunpack.c.h.b16 %v819
  %v2353 = vunpack.c.l.b16 %v820
  %v2354 = vunpack.c.h.b16 %v820
  %v2355 = vunpack.c.l.b16 %v821
  %v2356 = vunpack.c.h.b16 %v821
  %v2357 = vunpack.c.l.b16 %v822
  %v2358 = vunpack.c.h.b16 %v822
  %v2359 = vunpack.c.l.b16 %v823
  %v2360 = vunpack.c.h.b16 %v823
  %v2361 = vunpack.c.l.b16 %v824
  %v2362 = vunpack.c.h.b16 %v824
  %v2363 = vunpack.c.l.b16 %v825
  %v2364 = vunpack.c.h.b16 %v825
  %v2365 = vunpack.c.l.b16 %v826
  %v2366 = vunpack.c.h.b16 %v826
  %v2367 = vunpack.c.l.b16 %v827
  %v2368 = vunpack.c.h.b16 %v827
  %v2369 = vunpack.c.l.b16 %v828
  %v2370 = vunpack.c.h.b16 %v828
  %v2371 = vunpack.c.l.b16 %v829
  %v2372 = vunpack.c.h.b16 %v829
  %v2373 = vunpack.c.l.b16 %v830
  %v2374 = vunpack.c.h.b16 %v830
  %v2375 = vunpack.c.l.b16 %v831
  %v2376 = vunpack.c.h.b16 %v831
  %v2377 = vunpack.c.l.b16 %v832
  %v2378 = vunpack.c.h.b16 %v832
  %v2379 = vunpack.c.l.b16 %v833
  %v2380 = vunpack.c.h.b16 %v833
  %v2381 = vunpack.c.l.b16 %v834
  %v2382 = vunpack.c.h.b16 %v834
  %v2383 = vunpack.c.l.b16 %v835
  %v2384 = vunpack.c.h.b16 %v835
  %v2385 = vunpack.c.l.b16 %v836
  %v2386 = vunpack.c.h.b16 %v836
  %v2387 = vunpack.c.l.b16 %v837
  %v2388 = vunpack.c.h.b16 %v837
  %v2389 = vunpack.c.l.b16 %v838
  %v2390 = vunpack.c.h.b16 %v838
  %v2391 = vunpack.c.l.b16 %v839
  %v2392 = vunpack.c.h.b16 %v839
  %v2393 = vunpack.c.l.b16 %v840
  %v2394 = vunpack.c.h.b16 %v840
  %v2395 = vunpack.c.l.b16 %v841
  %v2396 = vunpack.c.h.b16 %v841
  %v2397 = vunpack.c.l.b16 %v842
  %v2398 = vunpack.c.h.b16 %v842
  %v2399 = vunpack.c.l.b16 %v843
  %v2400 = vunpack.c.h.b16 %v843
  %v2401 = vunpack.c.l.b16 %v844
  %v2402 = vunpack.c.h.b16 %v844
  %v2403 = vunpack.c.l.b16 %v845
  %v2404 = vunpack.c.h.b16 %v845
  %v2405 = vunpack.c.l.b16 %v846
  %v2406 = vunpack.c.h.b16 %v846
  %v2407 = vunpack.c.l.b16 %v847
  %v2408 = vunpack.c.h.b16 %v847
  %v2409 = vunpack.c.l.b16 %v848
  %v2410 = vunpack.c.h.b16 %v848
  %v2411 = vunpack.c.l.b16 %v849
  %v2412 = vunpack.c.h.b16 %v849
  %v2413 = vunpack.c.l.b16 %v850
  %v2414 = vunpack.c.h.b16 %v850
  %v2415 = vunpack.c.l.b16 %v851
  %v2416 = vunpack.c.h.b16 %v851
  %v2417 = vunpack.c.l.b16 %v852
  %v2418 = vunpack.c.h.b16 %v852
  %v2419 = vunpack.c.l.b16 %v853
  %v2420 = vunpack.c.h.b16 %v853
  %v2421 = vunpack.c.l.b16 %v854
  %v2422 = vunpack.c.h.b16 %v854
  %v2423 = vunpack.c.l.b16 %v855
  %v2424 = vunpack.c.h.b16 %v855
  %v2425 = vunpack.c.l.b16 %v856
  %v2426 = vunpack.c.h.b16 %v856
  %v2427 = vunpack.c.l.b16 %v857
  %v2428 = vunpack.c.h.b16 %v857
  %v2429 = vunpack.c.l.b16 %v858
  %v2430 = vunpack.c.h.b16 %v858
  %v2431 = vunpack.c.l.b16 %v859
  %v2432 = vunpack.c.h.b16 %v859
  %v2433 = vunpack.c.l.b16 %v860
  %v2434 = vunpack.c.h.b16 %v860
  %v2435 = vunpack.c.l.b16 %v861
  %v2436 = vunpack.c.h.b16 %v861
  %v2437 = vunpack.c.l.b16 %v862
  %v2438 = vunpack.c.h.b16 %v862
  %v2439 = vunpack.c.l.b16 %v863
  %v2440 = vunpack.c.h.b16 %v863
  %v2441 = vunpack.c.l.b16 %v864
  %v2442 = vunpack.c.h.b16 %v864
  %v2443 = vpack.c.b16 %v1427, %v1419
  %v2444 = vpack.c.b16 %v1428, %v1420
  %v2445 = vpack.c.b16 %v1429, %v1421
  %v2446 = vpack.c.b16 %v1430, %v1422
  %v2447 = vpack.c.b16 %v1431, %v1423
  %v2448 = vpack.c.b16 %v1432, %v1424
  %v2449 = vpack.c.b16 %v1433, %v1425
  %v2450 = vpack.c.b16 %v1434, %v1426
  %v2451 = vpack.c.b16 %v1443, %v1435
  %v2452 = vpack.c.b16 %v1444, %v1436
  %v2453 = vpack.c.b16 %v1445, %v1437
  %v2454 = vpack.c.b16 %v1446, %v1438
  %v2455 = vpack.c.b16 %v1447, %v1439
  %v2456 = vpack.c.b16 %v1448, %v1440
  %v2457 = vpack.c.b16 %v1449, %v1441
  %v2458 = vpack.c.b16 %v1450, %v1442
  %v2459 = vpack.c.b16 %v1459, %v1451
  %v2460 = vpack.c.b16 %v1460, %v1452
  %v2461 = vpack.c.b16 %v1461, %v1453
  %v2462 = vpack.c.b16 %v1462, %v1454
  %v2463 = vpack.c.b16 %v1463, %v1455
  %v2464 = vpack.c.b16 %v1464, %v1456
  %v2465 = vpack.c.b16 %v1465, %v1457
  %v2466 = vpack.c.b16 %v1466, %v1458
  %v2467 = vpack.c.b16 %v1475, %v1467
  %v2468 = vpack.c.b16 %v1476, %v1468
  %v2469 = vpack.c.b16 %v1477, %v1469
  %v2470 = vpack.c.b16 %v1478, %v1470
  %v2471 = vpack.c.b16 %v1479, %v1471
  %v2472 = vpack.c.b16 %v1480, %v1472
  %v2473 = vpack.c.b16 %v1481, %v1473
  %v2474 = vpack.c.b16 %v1482, %v1474
  %v2475 = vpack.c.b16 %v1491, %v1483
  %v2476 = vpack.c.b16 %v1492, %v1484
  %v2477 = vpack.c.b16 %v1493, %v1485
  %v2478 = vpack.c.b16 %v1494, %v1486
  %v2479 = vpack.c.b16 %v1495, %v1487
  %v2480 = vpack.c.b16 %v1496, %v1488
  %v2481 = vpack.c.b16 %v1497, %v1489
  %v2482 = vpack.c.b16 %v1498, %v1490
  %v2483 = vpack.c.b16 %v1507, %v1499
  %v2484 = vpack.c.b16 %v1508, %v1500
  %v2485 = vpack.c.b16 %v1509, %v1501
  %v2486 = vpack.c.b16 %v1510, %v1502
  %v2487 = vpack.c.b16 %v1511, %v1503
  %v2488 = vpack.c.b16 %v1512, %v1504
  %v2489 = vpack.c.b16 %v1513, %v1505
  %v2490 = vpack.c.b16 %v1514, %v1506
  %v2491 = vpack.c.b16 %v1523, %v1515
  %v2492 = vpack.c.b16 %v1524, %v1516
  %v2493 = vpack.c.b16 %v1525, %v1517
  %v2494 = vpack.c.b16 %v1526, %v1518
  %v2495 = vpack.c.b16 %v1527, %v1519
  %v2496 = vpack.c.b16 %v1528, %v1520
  %v2497 = vpack.c.b16 %v1529, %v1521
  %v2498 = vpack.c.b16 %v1530, %v1522
  %v2499 = vpack.c.b16 %v1539, %v1531
  %v2500 = vpack.c.b16 %v1540, %v1532
  %v2501 = vpack.c.b16 %v1541, %v1533
  %v2502 = vpack.c.b16 %v1542, %v1534
  %v2503 = vpack.c.b16 %v1543, %v1535
  %v2504 = vpack.c.b16 %v1544, %v1536
  %v2505 = vpack.c.b16 %v1545, %v1537
  %v2506 = vpack.c.b16 %v1546, %v1538
  %v2507 = vpack.c.b16 %v1555, %v1547
  %v2508 = vpack.c.b16 %v1556, %v1548
  %v2509 = vpack.c.b16 %v1557, %v1549
  %v2510 = vpack.c.b16 %v1558, %v1550
  %v2511 = vpack.c.b16 %v1559, %v1551
  %v2512 = vpack.c.b16 %v1560, %v1552
  %v2513 = vpack.c.b16 %v1561, %v1553
  %v2514 = vpack.c.b16 %v1562, %v1554
  %v2515 = vpack.c.b16 %v1571, %v1563
  %v2516 = vpack.c.b16 %v1572, %v1564
  %v2517 = vpack.c.b16 %v1573, %v1565
  %v2518 = vpack.c.b16 %v1574, %v1566
  %v2519 = vpack.c.b16 %v1575, %v1567
  %v2520 = vpack.c.b16 %v1576, %v1568
  %v2521 = vpack.c.b16 %v1577, %v1569
  %v2522 = vpack.c.b16 %v1578, %v1570
  %v2523 = vpack.c.b16 %v1587, %v1579
  %v2524 = vpack.c.b16 %v1588, %v1580
  %v2525 = vpack.c.b16 %v1589, %v1581
  %v2526 = vpack.c.b16 %v1590, %v1582
  %v2527 = vpack.c.b16 %v1591, %v1583
  %v2528 = vpack.c.b16 %v1592, %v1584
  %v2529 = vpack.c.b16 %v1593, %v1585
  %v2530 = vpack.c.b16 %v1594, %v1586
  %v2531 = vpack.c.b16 %v1603, %v1595
  %v2532 = vpack.c.b16 %v1604, %v1596
  %v2533 = vpack.c.b16 %v1605, %v1597
  %v2534 = vpack.c.b16 %v1606, %v1598
  %v2535 = vpack.c.b16 %v1607, %v1599
  %v2536 = vpack.c.b16 %v1608, %v1600
  %v2537 = vpack.c.b16 %v1609, %v1601
  %v2538 = vpack.c.b16 %v1610, %v1602
  %v2539 = vpack.c.b16 %v1619, %v1611
  %v2540 = vpack.c.b16 %v1620, %v1612
  %v2541 = vpack.c.b16 %v1621, %v1613
  %v2542 = vpack.c.b16 %v1622, %v1614
  %v2543 = vpack.c.b16 %v1623, %v1615
  %v2544 = vpack.c.b16 %v1624, %v1616
  %v2545 = vpack.c.b16 %v1625, %v1617
  %v2546 = vpack.c.b16 %v1626, %v1618
  %v2547 = vpack.c.b16 %v1635, %v1627
  %v2548 = vpack.c.b16 %v1636, %v1628
  %v2549 = vpack.c.b16 %v1637, %v1629
  %v2550 = vpack.c.b16 %v1638, %v1630
  %v2551 = vpack.c.b16 %v1639, %v1631
  %v2552 = vpack.c.b16 %v1640, %v1632
  %v2553 = vpack.c.b16 %v1641, %v1633
  %v2554 = vpack.c.b16 %v1642, %v1634
  %v2555 = vpack.c.b16 %v1651, %v1643
  %v2556 = vpack.c.b16 %v1652, %v1644
  %v2557 = vpack.c.b16 %v1653, %v1645
  %v2558 = vpack.c.b16 %v1654, %v1646
  %v2559 = vpack.c.b16 %v1655, %v1647
  %v2560 = vpack.c.b16 %v1656, %v1648
  %v2561 = vpack.c.b16 %v1657, %v1649
  %v2562 = vpack.c.b16 %v1658, %v1650
  %v2563 = vpack.c.b16 %v1667, %v1659
  %v2564 = vpack.c.b16 %v1668, %v1660
  %v2565 = vpack.c.b16 %v1669, %v1661
  %v2566 = vpack.c.b16 %v1670, %v1662
  %v2567 = vpack.c.b16 %v1671, %v1663
  %v2568 = vpack.c.b16 %v1672, %v1664
  %v2569 = vpack.c.b16 %v1673, %v1665
  %v2570 = vpack.c.b16 %v1674, %v1666
  %v2571 = vpack.c.b16 %v1683, %v1675
  %v2572 = vpack.c.b16 %v1684, %v1676
  %v2573 = vpack.c.b16 %v1685, %v1677
  %v2574 = vpack.c.b16 %v1686, %v1678
  %v2575 = vpack.c.b16 %v1687, %v1679
  %v2576 = vpack.c.b16 %v1688, %v1680
  %v2577 = vpack.c.b16 %v1689, %v1681
  %v2578 = vpack.c.b16 %v1690, %v1682
  %v2579 = vpack.c.b16 %v1699, %v1691
  %v2580 = vpack.c.b16 %v1700, %v1692
  %v2581 = vpack.c.b16 %v1701, %v1693
  %v2582 = vpack.c.b16 %v1702, %v1694
  %v2583 = vpack.c.b16 %v1703, %v1695
  %v2584 = vpack.c.b16 %v1704, %v1696
  %v2585 = vpack.c.b16 %v1705, %v1697
  %v2586 = vpack.c.b16 %v1706, %v1698
  %v2587 = vpack.c.b16 %v1715, %v1707
  %v2588 = vpack.c.b16 %v1716, %v1708
  %v2589 = vpack.c.b16 %v1717, %v1709
  %v2590 = vpack.c.b16 %v1718, %v1710
  %v2591 = vpack.c.b16 %v1719, %v1711
  %v2592 = vpack.c.b16 %v1720, %v1712
  %v2593 = vpack.c.b16 %v1721, %v1713
  %v2594 = vpack.c.b16 %v1722, %v1714
  %v2595 = vpack.c.b16 %v1731, %v1723
  %v2596 = vpack.c.b16 %v1732, %v1724
  %v2597 = vpack.c.b16 %v1733, %v1725
  %v2598 = vpack.c.b16 %v1734, %v1726
  %v2599 = vpack.c.b16 %v1735, %v1727
  %v2600 = vpack.c.b16 %v1736, %v1728
  %v2601 = vpack.c.b16 %v1737, %v1729
  %v2602 = vpack.c.b16 %v1738, %v1730
  %v2603 = vpack.c.b16 %v1747, %v1739
  %v2604 = vpack.c.b16 %v1748, %v1740
  %v2605 = vpack.c.b16 %v1749, %v1741
  %v2606 = vpack.c.b16 %v1750, %v1742
  %v2607 = vpack.c.b16 %v1751, %v1743
  %v2608 = vpack.c.b16 %v1752, %v1744
  %v2609 = vpack.c.b16 %v1753, %v1745
  %v2610 = vpack.c.b16 %v1754, %v1746
  %v2611 = vpack.c.b16 %v1763, %v1755
  %v2612 = vpack.c.b16 %v1764, %v1756
  %v2613 = vpack.c.b16 %v1765, %v1757
  %v2614 = vpack.c.b16 %v1766, %v1758
  %v2615 = vpack.c.b16 %v1767, %v1759
  %v2616 = vpack.c.b16 %v1768, %v1760
  %v2617 = vpack.c.b16 %v1769, %v1761
  %v2618 = vpack.c.b16 %v1770, %v1762
  %v2619 = vpack.c.b16 %v1779, %v1771
  %v2620 = vpack.c.b16 %v1780, %v1772
  %v2621 = vpack.c.b16 %v1781, %v1773
  %v2622 = vpack.c.b16 %v1782, %v1774
  %v2623 = vpack.c.b16 %v1783, %v1775
  %v2624 = vpack.c.b16 %v1784, %v1776
  %v2625 = vpack.c.b16 %v1785, %v1777
  %v2626 = vpack.c.b16 %v1786, %v1778
  %v2627 = vpack.c.b16 %v1795, %v1787
  %v2628 = vpack.c.b16 %v1796, %v1788
  %v2629 = vpack.c.b16 %v1797, %v1789
  %v2630 = vpack.c.b16 %v1798, %v1790
  %v2631 = vpack.c.b16 %v1799, %v1791
  %v2632 = vpack.c.b16 %v1800, %v1792
  %v2633 = vpack.c.b16 %v1801, %v1793
  %v2634 = vpack.c.b16 %v1802, %v1794
  %v2635 = vpack.c.b16 %v1811, %v1803
  %v2636 = vpack.c.b16 %v1812, %v1804
  %v2637 = vpack.c.b16 %v1813, %v1805
  %v2638 = vpack.c.b16 %v1814, %v1806
  %v2639 = vpack.c.b16 %v1815, %v1807
  %v2640 = vpack.c.b16 %v1816, %v1808
  %v2641 = vpack.c.b16 %v1817, %v1809
  %v2642 = vpack.c.b16 %v1818, %v1810
  %v2643 = vpack.c.b16 %v1827, %v1819
  %v2644 = vpack.c.b16 %v1828, %v1820
  %v2645 = vpack.c.b16 %v1829, %v1821
  %v2646 = vpack.c.b16 %v1830, %v1822
  %v2647 = vpack.c.b16 %v1831, %v1823
  %v2648 = vpack.c.b16 %v1832, %v1824
  %v2649 = vpack.c.b16 %v1833, %v1825
  %v2650 = vpack.c.b16 %v1834, %v1826
  %v2651 = vpack.c.b16 %v1843, %v1835
  %v2652 = vpack.c.b16 %v1844, %v1836
  %v2653 = vpack.c.b16 %v1845, %v1837
  %v2654 = vpack.c.b16 %v1846, %v1838
  %v2655 = vpack.c.b16 %v1847, %v1839
  %v2656 = vpack.c.b16 %v1848, %v1840
  %v2657 = vpack.c.b16 %v1849, %v1841
  %v2658 = vpack.c.b16 %v1850, %v1842
  %v2659 = vpack.c.b16 %v1859, %v1851
  %v2660 = vpack.c.b16 %v1860, %v1852
  %v2661 = vpack.c.b16 %v1861, %v1853
  %v2662 = vpack.c.b16 %v1862, %v1854
  %v2663 = vpack.c.b16 %v1863, %v1855
  %v2664 = vpack.c.b16 %v1864, %v1856
  %v2665 = vpack.c.b16 %v1865, %v1857
  %v2666 = vpack.c.b16 %v1866, %v1858
  %v2667 = vpack.c.b16 %v1875, %v1867
  %v2668 = vpack.c.b16 %v1876, %v1868
  %v2669 = vpack.c.b16 %v1877, %v1869
  %v2670 = vpack.c.b16 %v1878, %v1870
  %v2671 = vpack.c.b16 %v1879, %v1871
  %v2672 = vpack.c.b16 %v1880, %v1872
  %v2673 = vpack.c.b16 %v1881, %v1873
  %v2674 = vpack.c.b16 %v1882, %v1874
  %v2675 = vpack.c.b16 %v1891, %v1883
  %v2676 = vpack.c.b16 %v1892, %v1884
  %v2677 = vpack.c.b16 %v1893, %v1885
  %v2678 = vpack.c.b16 %v1894, %v1886
  %v2679 = vpack.c.b16 %v1895, %v1887
  %v2680 = vpack.c.b16 %v1896, %v1888
  %v2681 = vpack.c.b16 %v1897, %v1889
  %v2682 = vpack.c.b16 %v1898, %v1890
  %v2683 = vpack.c.b16 %v1907, %v1899
  %v2684 = vpack.c.b16 %v1908, %v1900
  %v2685 = vpack.c.b16 %v1909, %v1901
  %v2686 = vpack.c.b16 %v1910, %v1902
  %v2687 = vpack.c.b16 %v1911, %v1903
  %v2688 = vpack.c.b16 %v1912, %v1904
  %v2689 = vpack.c.b16 %v1913, %v1905
  %v2690 = vpack.c.b16 %v1914, %v1906
  %v2691 = vpack.c.b16 %v1923, %v1915
  %v2692 = vpack.c.b16 %v1924, %v1916
  %v2693 = vpack.c.b16 %v1925, %v1917
  %v2694 = vpack.c.b16 %v1926, %v1918
  %v2695 = vpack.c.b16 %v1927, %v1919
  %v2696 = vpack.c.b16 %v1928, %v1920
  %v2697 = vpack.c.b16 %v1929, %v1921
  %v2698 = vpack.c.b16 %v1930, %v1922
  %v2699 = vpack.c.b16 %v1939, %v1931
  %v2700 = vpack.c.b16 %v1940, %v1932
  %v2701 = vpack.c.b16 %v1941, %v1933
  %v2702 = vpack.c.b16 %v1942, %v1934
  %v2703 = vpack.c.b16 %v1943, %v1935
  %v2704 = vpack.c.b16 %v1944, %v1936
  %v2705 = vpack.c.b16 %v1945, %v1937
  %v2706 = vpack.c.b16 %v1946, %v1938
  %v2707 = vpack.c.b16 %v1955, %v1947
  %v2708 = vpack.c.b16 %v1956, %v1948
  %v2709 = vpack.c.b16 %v1957, %v1949
  %v2710 = vpack.c.b16 %v1958, %v1950
  %v2711 = vpack.c.b16 %v1959, %v1951
  %v2712 = vpack.c.b16 %v1960, %v1952
  %v2713 = vpack.c.b16 %v1961, %v1953
  %v2714 = vpack.c.b16 %v1962, %v1954
  %v2715 = vpack.c.b16 %v1971, %v1963
  %v2716 = vpack.c.b16 %v1972, %v1964
  %v2717 = vpack.c.b16 %v1973, %v1965
  %v2718 = vpack.c.b16 %v1974, %v1966
  %v2719 = vpack.c.b16 %v1975, %v1967
  %v2720 = vpack.c.b16 %v1976, %v1968
  %v2721 = vpack.c.b16 %v1977, %v1969
  %v2722 = vpack.c.b16 %v1978, %v1970
  %v2723 = vpack.c.b16 %v1987, %v1979
  %v2724 = vpack.c.b16 %v1988, %v1980
  %v2725 = vpack.c.b16 %v1989, %v1981
  %v2726 = vpack.c.b16 %v1990, %v1982
  %v2727 = vpack.c.b16 %v1991, %v1983
  %v2728 = vpack.c.b16 %v1992, %v1984
  %v2729 = vpack.c.b16 %v1993, %v1985
  %v2730 = vpack.c.b16 %v1994, %v1986
  %v2731 = vpack.c.b16 %v2003, %v1995
  %v2732 = vpack.c.b16 %v2004, %v1996
  %v2733 = vpack.c.b16 %v2005, %v1997
  %v2734 = vpack.c.b16 %v2006, %v1998
  %v2735 = vpack.c.b16 %v2007, %v1999
  %v2736 = vpack.c.b16 %v2008, %v2000
  %v2737 = vpack.c.b16 %v2009, %v2001
  %v2738 = vpack.c.b16 %v2010, %v2002
  %v2739 = vpack.c.b16 %v2019, %v2011
  %v2740 = vpack.c.b16 %v2020, %v2012
  %v2741 = vpack.c.b16 %v2021, %v2013
  %v2742 = vpack.c.b16 %v2022, %v2014
  %v2743 = vpack.c.b16 %v2023, %v2015
  %v2744 = vpack.c.b16 %v2024, %v2016
  %v2745 = vpack.c.b16 %v2025, %v2017
  %v2746 = vpack.c.b16 %v2026, %v2018
  %v2747 = vpack.c.b16 %v2035, %v2027
  %v2748 = vpack.c.b16 %v2036, %v2028
  %v2749 = vpack.c.b16 %v2037, %v2029
  %v2750 = vpack.c.b16 %v2038, %v2030
  %v2751 = vpack.c.b16 %v2039, %v2031
  %v2752 = vpack.c.b16 %v2040, %v2032
  %v2753 = vpack.c.b16 %v2041, %v2033
  %v2754 = vpack.c.b16 %v2042, %v2034
  %v2755 = vpack.c.b16 %v2051, %v2043
  %v2756 = vpack.c.b16 %v2052, %v2044
  %v2757 = vpack.c.b16 %v2053, %v2045
  %v2758 = vpack.c.b16 %v2054, %v2046
  %v2759 = vpack.c.b16 %v2055, %v2047
  %v2760 = vpack.c.b16 %v2056, %v2048
  %v2761 = vpack.c.b16 %v2057, %v2049
  %v2762 = vpack.c.b16 %v2058, %v2050
  %v2763 = vpack.c.b16 %v2067, %v2059
  %v2764 = vpack.c.b16 %v2068, %v2060
  %v2765 = vpack.c.b16 %v2069, %v2061
  %v2766 = vpack.c.b16 %v2070, %v2062
  %v2767 = vpack.c.b16 %v2071, %v2063
  %v2768 = vpack.c.b16 %v2072, %v2064
  %v2769 = vpack.c.b16 %v2073, %v2065
  %v2770 = vpack.c.b16 %v2074, %v2066
  %v2771 = vpack.c.b16 %v2083, %v2075
  %v2772 = vpack.c.b16 %v2084, %v2076
  %v2773 = vpack.c.b16 %v2085, %v2077
  %v2774 = vpack.c.b16 %v2086, %v2078
  %v2775 = vpack.c.b16 %v2087, %v2079
  %v2776 = vpack.c.b16 %v2088, %v2080
  %v2777 = vpack.c.b16 %v2089, %v2081
  %v2778 = vpack.c.b16 %v2090, %v2082
  %v2779 = vpack.c.b16 %v2099, %v2091
  %v2780 = vpack.c.b16 %v2100, %v2092
  %v2781 = vpack.c.b16 %v2101, %v2093
  %v2782 = vpack.c.b16 %v2102, %v2094
  %v2783 = vpack.c.b16 %v2103, %v2095
  %v2784 = vpack.c.b16 %v2104, %v2096
  %v2785 = vpack.c.b16 %v2105, %v2097
  %v2786 = vpack.c.b16 %v2106, %v2098
  %v2787 = vpack.c.b16 %v2115, %v2107
  %v2788 = vpack.c.b16 %v2116, %v2108
  %v2789 = vpack.c.b16 %v2117, %v2109
  %v2790 = vpack.c.b16 %v2118, %v2110
  %v2791 = vpack.c.b16 %v2119, %v2111
  %v2792 = vpack.c.b16 %v2120, %v2112
  %v2793 = vpack.c.b16 %v2121, %v2113
  %v2794 = vpack.c.b16 %v2122, %v2114
  %v2795 = vpack.c.b16 %v2131, %v2123
  %v2796 = vpack.c.b16 %v2132, %v2124
  %v2797 = vpack.c.b16 %v2133, %v2125
  %v2798 = vpack.c.b16 %v2134, %v2126
  %v2799 = vpack.c.b16 %v2135, %v2127
  %v2800 = vpack.c.b16 %v2136, %v2128
  %v2801 = vpack.c.b16 %v2137, %v2129
  %v2802 = vpack.c.b16 %v2138, %v2130
  %v2803 = vpack.c.b16 %v2147, %v2139
  %v2804 = vpack.c.b16 %v2148, %v2140
  %v2805 = vpack.c.b16 %v2149, %v2141
  %v2806 = vpack.c.b16 %v2150, %v2142
  %v2807 = vpack.c.b16 %v2151, %v2143
  %v2808 = vpack.c.b16 %v2152, %v2144
  %v2809 = vpack.c.b16 %v2153, %v2145
  %v2810 = vpack.c.b16 %v2154, %v2146
  %v2811 = vpack.c.b16 %v2163, %v2155
  %v2812 = vpack.c.b16 %v2164, %v2156
  %v2813 = vpack.c.b16 %v2165, %v2157
  %v2814 = vpack.c.b16 %v2166, %v2158
  %v2815 = vpack.c.b16 %v2167, %v2159
  %v2816 = vpack.c.b16 %v2168, %v2160
  %v2817 = vpack.c.b16 %v2169, %v2161
  %v2818 = vpack.c.b16 %v2170, %v2162
  %v2819 = vpack.c.b16 %v2179, %v2171
  %v2820 = vpack.c.b16 %v2180, %v2172
  %v2821 = vpack.c.b16 %v2181, %v2173
  %v2822 = vpack.c.b16 %v2182, %v2174
  %v2823 = vpack.c.b16 %v2183, %v2175
  %v2824 = vpack.c.b16 %v2184, %v2176
  %v2825 = vpack.c.b16 %v2185, %v2177
  %v2826 = vpack.c.b16 %v2186, %v2178
  %v2827 = vpack.c.b16 %v2195, %v2187
  %v2828 = vpack.c.b16 %v2196, %v2188
  %v2829 = vpack.c.b16 %v2197, %v2189
  %v2830 = vpack.c.b16 %v2198, %v2190
  %v2831 = vpack.c.b16 %v2199, %v2191
  %v2832 = vpack.c.b16 %v2200, %v2192
  %v2833 = vpack.c.b16 %v2201, %v2193
  %v2834 = vpack.c.b16 %v2202, %v2194
  %v2835 = vpack.c.b16 %v2211, %v2203
  %v2836 = vpack.c.b16 %v2212, %v2204
  %v2837 = vpack.c.b16 %v2213, %v2205
  %v2838 = vpack.c.b16 %v2214, %v2206
  %v2839 = vpack.c.b16 %v2215, %v2207
  %v2840 = vpack.c.b16 %v2216, %v2208
  %v2841 = vpack.c.b16 %v2217, %v2209
  %v2842 = vpack.c.b16 %v2218, %v2210
  %v2843 = vpack.c.b16 %v2227, %v2219
  %v2844 = vpack.c.b16 %v2228, %v2220
  %v2845 = vpack.c.b16 %v2229, %v2221
  %v2846 = vpack.c.b16 %v2230, %v2222
  %v2847 = vpack.c.b16 %v2231, %v2223
  %v2848 = vpack.c.b16 %v2232, %v2224
  %v2849 = vpack.c.b16 %v2233, %v2225
  %v2850 = vpack.c.b16 %v2234, %v2226
  %v2851 = vpack.c.b16 %v2243, %v2235
  %v2852 = vpack.c.b16 %v2244, %v2236
  %v2853 = vpack.c.b16 %v2245, %v2237
  %v2854 = vpack.c.b16 %v2246, %v2238
  %v2855 = vpack.c.b16 %v2247, %v2239
  %v2856 = vpack.c.b16 %v2248, %v2240
  %v2857 = vpack.c.b16 %v2249, %v2241
  %v2858 = vpack.c.b16 %v2250, %v2242
  %v2859 = vpack.c.b16 %v2259, %v2251
  %v2860 = vpack.c.b16 %v2260, %v2252
  %v2861 = vpack.c.b16 %v2261, %v2253
  %v2862 = vpack.c.b16 %v2262, %v2254
  %v2863 = vpack.c.b16 %v2263, %v2255
  %v2864 = vpack.c.b16 %v2264, %v2256
  %v2865 = vpack.c.b16 %v2265, %v2257
  %v2866 = vpack.c.b16 %v2266, %v2258
  %v2867 = vpack.c.b16 %v2275, %v2267
  %v2868 = vpack.c.b16 %v2276, %v2268
  %v2869 = vpack.c.b16 %v2277, %v2269
  %v2870 = vpack.c.b16 %v2278, %v2270
  %v2871 = vpack.c.b16 %v2279, %v2271
  %v2872 = vpack.c.b16 %v2280, %v2272
  %v2873 = vpack.c.b16 %v2281, %v2273
  %v2874 = vpack.c.b16 %v2282, %v2274
  %v2875 = vpack.c.b16 %v2291, %v2283
  %v2876 = vpack.c.b16 %v2292, %v2284
  %v2877 = vpack.c.b16 %v2293, %v2285
  %v2878 = vpack.c.b16 %v2294, %v2286
  %v2879 = vpack.c.b16 %v2295, %v2287
  %v2880 = vpack.c.b16 %v2296, %v2288
  %v2881 = vpack.c.b16 %v2297, %v2289
  %v2882 = vpack.c.b16 %v2298, %v2290
  %v2883 = vpack.c.b16 %v2307, %v2299
  %v2884 = vpack.c.b16 %v2308, %v2300
  %v2885 = vpack.c.b16 %v2309, %v2301
  %v2886 = vpack.c.b16 %v2310, %v2302
  %v2887 = vpack.c.b16 %v2311, %v2303
  %v2888 = vpack.c.b16 %v2312, %v2304
  %v2889 = vpack.c.b16 %v2313, %v2305
  %v2890 = vpack.c.b16 %v2314, %v2306
  %v2891 = vpack.c.b16 %v2323, %v2315
  %v2892 = vpack.c.b16 %v2324, %v2316
  %v2893 = vpack.c.b16 %v2325, %v2317
  %v2894 = vpack.c.b16 %v2326, %v2318
  %v2895 = vpack.c.b16 %v2327, %v2319
  %v2896 = vpack.c.b16 %v2328, %v2320
  %v2897 = vpack.c.b16 %v2329, %v2321
  %v2898 = vpack.c.b16 %v2330, %v2322
  %v2899 = vpack.c.b16 %v2339, %v2331
  %v2900 = vpack.c.b16 %v2340, %v2332
  %v2901 = vpack.c.b16 %v2341, %v2333
  %v2902 = vpack.c.b16 %v2342, %v2334
  %v2903 = vpack.c.b16 %v2343, %v2335
  %v2904 = vpack.c.b16 %v2344, %v2336
  %v2905 = vpack.c.b16 %v2345, %v2337
  %v2906 = vpack.c.b16 %v2346, %v2338
  %v2907 = vpack.c.b16 %v2355, %v2347
  %v2908 = vpack.c.b16 %v2356, %v2348
  %v2909 = vpack.c.b16 %v2357, %v2349
  %v2910 = vpack.c.b16 %v2358, %v2350
  %v2911 = vpack.c.b16 %v2359, %v2351
  %v2912 = vpack.c.b16 %v2360, %v2352
  %v2913 = vpack.c.b16 %v2361, %v2353
  %v2914 = vpack.c.b16 %v2362, %v2354
  %v2915 = vpack.c.b16 %v2371, %v2363
  %v2916 = vpack.c.b16 %v2372, %v2364
  %v2917 = vpack.c.b16 %v2373, %v2365
  %v2918 = vpack.c.b16 %v2374, %v2366
  %v2919 = vpack.c.b16 %v2375, %v2367
  %v2920 = vpack.c.b16 %v2376, %v2368
  %v2921 = vpack.c.b16 %v2377, %v2369
  %v2922 = vpack.c.b16 %v2378, %v2370
  %v2923 = vpack.c.b16 %v2387, %v2379
  %v2924 = vpack.c.b16 %v2388, %v2380
  %v2925 = vpack.c.b16 %v2389, %v2381
  %v2926 = vpack.c.b16 %v2390, %v2382
  %v2927 = vpack.c.b16 %v2391, %v2383
  %v2928 = vpack.c.b16 %v2392, %v2384
  %v2929 = vpack.c.b16 %v2393, %v2385
  %v2930 = vpack.c.b16 %v2394, %v2386
  %v2931 = vpack.c.b16 %v2403, %v2395
  %v2932 = vpack.c.b16 %v2404, %v2396
  %v2933 = vpack.c.b16 %v2405, %v2397
  %v2934 = vpack.c.b16 %v2406, %v2398
  %v2935 = vpack.c.b16 %v2407, %v2399
  %v2936 = vpack.c.b16 %v2408, %v2400
  %v2937 = vpack.c.b16 %v2409, %v2401
  %v2938 = vpack.c.b16 %v2410, %v2402
  %v2939 = vpack.c.b16 %v2419, %v2411
  %v2940 = vpack.c.b16 %v2420, %v2412
  %v2941 = vpack.c.b16 %v2421, %v2413
  %v2942 = vpack.c.b16 %v2422, %v2414
  %v2943 = vpack.c.b16 %v2423, %v2415
  %v2944 = vpack.c.b16 %v2424, %v2416
  %v2945 = vpack.c.b16 %v2425, %v2417
  %v2946 = vpack.c.b16 %v2426, %v2418
  %v2947 = vpack.c.b16 %v2435, %v2427
  %v2948 = vpack.c.b16 %v2436, %v2428
  %v2949 = vpack.c.b16 %v2437, %v2429
  %v2950 = vpack.c.b16 %v2438, %v2430
  %v2951 = vpack.c.b16 %v2439, %v2431
  %v2952 = vpack.c.b16 %v2440, %v2432
  %v2953 = vpack.c.b16 %v2441, %v2433
  %v2954 = vpack.c.b16 %v2442, %v2434
  %3467 = vmatprep.subr.bf16.mxu0 %v2444
  %3468 = vmatpush1.bf16.msra.mxu0 %v2443
  %3469 = vmatprep.subr.bf16.mxu0 %v2452
  %3470 = vmatpush1.bf16.msra.mxu0 %v2451
  %3471 = vmatprep.subr.bf16.mxu0 %v2460
  %3472 = vmatpush1.bf16.msra.mxu0 %v2459
  %3473 = vmatprep.subr.bf16.mxu0 %v2468
  %3474 = vmatpush1.bf16.msra.mxu0 %v2467
  %3475 = vmatprep.subr.bf16.mxu0 %v2476
  %3476 = vmatpush1.bf16.msra.mxu0 %v2475
  %3477 = vmatprep.subr.bf16.mxu0 %v2484
  %3478 = vmatpush1.bf16.msra.mxu0 %v2483
  %3479 = vmatprep.subr.bf16.mxu0 %v2492
  %3480 = vmatpush1.bf16.msra.mxu0 %v2491
  %3481 = vmatprep.subr.bf16.mxu0 %v2500
  %3482 = vmatpush1.bf16.msra.mxu0 %v2499
  %3483 = vmatprep.subr.bf16.mxu0 %v2508
  %3484 = vmatpush1.bf16.msra.mxu0 %v2507
  %3485 = vmatprep.subr.bf16.mxu0 %v2516
  %3486 = vmatpush1.bf16.msra.mxu0 %v2515
  %3487 = vmatprep.subr.bf16.mxu0 %v2524
  %3488 = vmatpush1.bf16.msra.mxu0 %v2523
  %3489 = vmatprep.subr.bf16.mxu0 %v2532
  %3490 = vmatpush1.bf16.msra.mxu0 %v2531
  %3491 = vmatprep.subr.bf16.mxu0 %v2540
  %3492 = vmatpush1.bf16.msra.mxu0 %v2539
  %3493 = vmatprep.subr.bf16.mxu0 %v2548
  %3494 = vmatpush1.bf16.msra.mxu0 %v2547
  %3495 = vmatprep.subr.bf16.mxu0 %v2556
  %3496 = vmatpush1.bf16.msra.mxu0 %v2555
  %3497 = vmatprep.subr.bf16.mxu0 %v2564
  %3498 = vmatpush1.bf16.msra.mxu0 %v2563
  %3499 = vmatprep.mubr.bf16.mxu0 %v346
  %3500 = vmatmul.mubr.bf16.gmra.mrb[0].mxu0 %v345
  %v3501 = vpop.f32.mrb[0].mxu0
  %v3502 = vadd.f32 %v870, %v3501
  %v3503 = vpop.f32.mrb[0].mxu0
  %v3504 = vadd.f32 %v874, %v3503
  %v3505 = vpop.f32.mrb[0].mxu0
  %v3506 = vpop.f32.mrb[0].mxu0
  %3507 = vdwg.mxu0
  %3508 = vmatprep.subr.bf16.mxu0 %v2572
  %3509 = vmatpush1.bf16.msra.mxu0 %v2571
  %3510 = vmatprep.subr.bf16.mxu0 %v2580
  %3511 = vmatpush1.bf16.msra.mxu0 %v2579
  %3512 = vmatprep.subr.bf16.mxu0 %v2588
  %3513 = vmatpush1.bf16.msra.mxu0 %v2587
  %3514 = vmatprep.subr.bf16.mxu0 %v2596
  %3515 = vmatpush1.bf16.msra.mxu0 %v2595
  %3516 = vmatprep.subr.bf16.mxu0 %v2604
  %3517 = vmatpush1.bf16.msra.mxu0 %v2603
  %3518 = vmatprep.subr.bf16.mxu0 %v2612
  %3519 = vmatpush1.bf16.msra.mxu0 %v2611
  %3520 = vmatprep.subr.bf16.mxu0 %v2620
  %3521 = vmatpush1.bf16.msra.mxu0 %v2619
  %3522 = vmatprep.subr.bf16.mxu0 %v2628
  %3523 = vmatpush1.bf16.msra.mxu0 %v2627
  %3524 = vmatprep.subr.bf16.mxu0 %v2636
  %3525 = vmatpush1.bf16.msra.mxu0 %v2635
  %3526 = vmatprep.subr.bf16.mxu0 %v2644
  %3527 = vmatpush1.bf16.msra.mxu0 %v2643
  %3528 = vmatprep.subr.bf16.mxu0 %v2652
  %3529 = vmatpush1.bf16.msra.mxu0 %v2651
  %3530 = vmatprep.subr.bf16.mxu0 %v2660
  %3531 = vmatpush1.bf16.msra.mxu0 %v2659
  %3532 = vmatprep.subr.bf16.mxu0 %v2668
  %3533 = vmatpush1.bf16.msra.mxu0 %v2667
  %3534 = vmatprep.subr.bf16.mxu0 %v2676
  %3535 = vmatpush1.bf16.msra.mxu0 %v2675
  %3536 = vmatprep.subr.bf16.mxu0 %v2684
  %3537 = vmatpush1.bf16.msra.mxu0 %v2683
  %3538 = vmatprep.subr.bf16.mxu0 %v2692
  %3539 = vmatpush1.bf16.msra.mxu0 %v2691
  %3540 = vmatprep.mubr.bf16.mxu0 %v348
  %3541 = vmatmul.mubr.bf16.gmra.mrb[0].mxu0 %v347
  %v3542 = vpop.f32.mrb[0].mxu0
  %v3543 = vadd.f32 %v3502, %v3542
  %v3544 = vpop.f32.mrb[0].mxu0
  %v3545 = vadd.f32 %v3504, %v3544
  %v3546 = vpop.f32.mrb[0].mxu0
  %v3547 = vpop.f32.mrb[0].mxu0
  %3548 = vdwg.mxu0
  %3549 = vmatprep.subr.bf16.mxu0 %v2700
  %3550 = vmatpush1.bf16.msra.mxu0 %v2699
  %3551 = vmatprep.subr.bf16.mxu0 %v2708
  %3552 = vmatpush1.bf16.msra.mxu0 %v2707
  %3553 = vmatprep.subr.bf16.mxu0 %v2716
  %3554 = vmatpush1.bf16.msra.mxu0 %v2715
  %3555 = vmatprep.subr.bf16.mxu0 %v2724
  %3556 = vmatpush1.bf16.msra.mxu0 %v2723
  %3557 = vmatprep.subr.bf16.mxu0 %v2732
  %3558 = vmatpush1.bf16.msra.mxu0 %v2731
  %3559 = vmatprep.subr.bf16.mxu0 %v2740
  %3560 = vmatpush1.bf16.msra.mxu0 %v2739
  %3561 = vmatprep.subr.bf16.mxu0 %v2748
  %3562 = vmatpush1.bf16.msra.mxu0 %v2747
  %3563 = vmatprep.subr.bf16.mxu0 %v2756
  %3564 = vmatpush1.bf16.msra.mxu0 %v2755
  %3565 = vmatprep.subr.bf16.mxu0 %v2764
  %3566 = vmatpush1.bf16.msra.mxu0 %v2763
  %3567 = vmatprep.subr.bf16.mxu0 %v2772
  %3568 = vmatpush1.bf16.msra.mxu0 %v2771
  %3569 = vmatprep.subr.bf16.mxu0 %v2780
  %3570 = vmatpush1.bf16.msra.mxu0 %v2779
  %3571 = vmatprep.subr.bf16.mxu0 %v2788
  %3572 = vmatpush1.bf16.msra.mxu0 %v2787
  %3573 = vmatprep.subr.bf16.mxu0 %v2796
  %3574 = vmatpush1.bf16.msra.mxu0 %v2795
  %3575 = vmatprep.subr.bf16.mxu0 %v2804
  %3576 = vmatpush1.bf16.msra.mxu0 %v2803
  %3577 = vmatprep.subr.bf16.mxu0 %v2812
  %3578 = vmatpush1.bf16.msra.mxu0 %v2811
  %3579 = vmatprep.subr.bf16.mxu0 %v2820
  %3580 = vmatpush1.bf16.msra.mxu0 %v2819
  %3581 = vmatprep.mubr.bf16.mxu0 %v350
  %3582 = vmatmul.mubr.bf16.gmra.mrb[0].mxu0 %v349
  %v3583 = vpop.f32.mrb[0].mxu0
  %v3584 = vadd.f32 %v3543, %v3583
  %v3585 = vpop.f32.mrb[0].mxu0
  %v3586 = vadd.f32 %v3545, %v3585
  %v3587 = vpop.f32.mrb[0].mxu0
  %v3588 = vpop.f32.mrb[0].mxu0
  %3589 = vdwg.mxu0
  %3590 = vmatprep.subr.bf16.mxu0 %v2828
  %3591 = vmatpush1.bf16.msra.mxu0 %v2827
  %3592 = vmatprep.subr.bf16.mxu0 %v2836
  %3593 = vmatpush1.bf16.msra.mxu0 %v2835
  %3594 = vmatprep.subr.bf16.mxu0 %v2844
  %3595 = vmatpush1.bf16.msra.mxu0 %v2843
  %3596 = vmatprep.subr.bf16.mxu0 %v2852
  %3597 = vmatpush1.bf16.msra.mxu0 %v2851
  %3598 = vmatprep.subr.bf16.mxu0 %v2860
  %3599 = vmatpush1.bf16.msra.mxu0 %v2859
  %3600 = vmatprep.subr.bf16.mxu0 %v2868
  %3601 = vmatpush1.bf16.msra.mxu0 %v2867
  %3602 = vmatprep.subr.bf16.mxu0 %v2876
  %3603 = vmatpush1.bf16.msra.mxu0 %v2875
  %3604 = vmatprep.subr.bf16.mxu0 %v2884
  %3605 = vmatpush1.bf16.msra.mxu0 %v2883
  %3606 = vmatprep.subr.bf16.mxu0 %v2892
  %3607 = vmatpush1.bf16.msra.mxu0 %v2891
  %3608 = vmatprep.subr.bf16.mxu0 %v2900
  %3609 = vmatpush1.bf16.msra.mxu0 %v2899
  %3610 = vmatprep.subr.bf16.mxu0 %v2908
  %3611 = vmatpush1.bf16.msra.mxu0 %v2907
  %3612 = vmatprep.subr.bf16.mxu0 %v2916
  %3613 = vmatpush1.bf16.msra.mxu0 %v2915
  %3614 = vmatprep.subr.bf16.mxu0 %v2924
  %3615 = vmatpush1.bf16.msra.mxu0 %v2923
  %3616 = vmatprep.subr.bf16.mxu0 %v2932
  %3617 = vmatpush1.bf16.msra.mxu0 %v2931
  %3618 = vmatprep.subr.bf16.mxu0 %v2940
  %3619 = vmatpush1.bf16.msra.mxu0 %v2939
  %3620 = vmatprep.subr.bf16.mxu0 %v2948
  %3621 = vmatpush1.bf16.msra.mxu0 %v2947
  %3622 = vmatprep.mubr.bf16.mxu0 %v352
  %3623 = vmatmul.mubr.bf16.gmra.mrb[0].mxu0 %v351
  %v3624 = vpop.f32.mrb[0].mxu0
  %v3625 = vadd.f32 %v3584, %v3624
  %v3626 = vpop.f32.mrb[0].mxu0
  %v3627 = vadd.f32 %v3586, %v3626
  %v3628 = vpop.f32.mrb[0].mxu0
  %v3629 = vpop.f32.mrb[0].mxu0
  %3630 = vdwg.mxu0
  %3631 = vmatprep.subr.bf16.mxu0 %v2446
  %3632 = vmatpush1.bf16.msra.mxu0 %v2445
  %3633 = vmatprep.subr.bf16.mxu0 %v2454
  %3634 = vmatpush1.bf16.msra.mxu0 %v2453
  %3635 = vmatprep.subr.bf16.mxu0 %v2462
  %3636 = vmatpush1.bf16.msra.mxu0 %v2461
  %3637 = vmatprep.subr.bf16.mxu0 %v2470
  %3638 = vmatpush1.bf16.msra.mxu0 %v2469
  %3639 = vmatprep.subr.bf16.mxu0 %v2478
  %3640 = vmatpush1.bf16.msra.mxu0 %v2477
  %3641 = vmatprep.subr.bf16.mxu0 %v2486
  %3642 = vmatpush1.bf16.msra.mxu0 %v2485
  %3643 = vmatprep.subr.bf16.mxu0 %v2494
  %3644 = vmatpush1.bf16.msra.mxu0 %v2493
  %3645 = vmatprep.subr.bf16.mxu0 %v2502
  %3646 = vmatpush1.bf16.msra.mxu0 %v2501
  %3647 = vmatprep.subr.bf16.mxu0 %v2510
  %3648 = vmatpush1.bf16.msra.mxu0 %v2509
  %3649 = vmatprep.subr.bf16.mxu0 %v2518
  %3650 = vmatpush1.bf16.msra.mxu0 %v2517
  %3651 = vmatprep.subr.bf16.mxu0 %v2526
  %3652 = vmatpush1.bf16.msra.mxu0 %v2525
  %3653 = vmatprep.subr.bf16.mxu0 %v2534
  %3654 = vmatpush1.bf16.msra.mxu0 %v2533
  %3655 = vmatprep.subr.bf16.mxu0 %v2542
  %3656 = vmatpush1.bf16.msra.mxu0 %v2541
  %3657 = vmatprep.subr.bf16.mxu0 %v2550
  %3658 = vmatpush1.bf16.msra.mxu0 %v2549
  %3659 = vmatprep.subr.bf16.mxu0 %v2558
  %3660 = vmatpush1.bf16.msra.mxu0 %v2557
  %3661 = vmatprep.subr.bf16.mxu0 %v2566
  %3662 = vmatpush1.bf16.msra.mxu0 %v2565
  %3663 = vmatprep.mubr.bf16.mxu0 %v346
  %3664 = vmatmul.mubr.bf16.gmra.mrb[0].mxu0 %v345
  %v3665 = vpop.f32.mrb[0].mxu0
  %v3666 = vadd.f32 %v878, %v3665
  %v3667 = vpop.f32.mrb[0].mxu0
  %v3668 = vadd.f32 %v882, %v3667
  %v3669 = vpop.f32.mrb[0].mxu0
  %v3670 = vpop.f32.mrb[0].mxu0
  %3671 = vdwg.mxu0
  %3672 = vmatprep.subr.bf16.mxu0 %v2574
  %3673 = vmatpush1.bf16.msra.mxu0 %v2573
  %3674 = vmatprep.subr.bf16.mxu0 %v2582
  %3675 = vmatpush1.bf16.msra.mxu0 %v2581
  %3676 = vmatprep.subr.bf16.mxu0 %v2590
  %3677 = vmatpush1.bf16.msra.mxu0 %v2589
  %3678 = vmatprep.subr.bf16.mxu0 %v2598
  %3679 = vmatpush1.bf16.msra.mxu0 %v2597
  %3680 = vmatprep.subr.bf16.mxu0 %v2606
  %3681 = vmatpush1.bf16.msra.mxu0 %v2605
  %3682 = vmatprep.subr.bf16.mxu0 %v2614
  %3683 = vmatpush1.bf16.msra.mxu0 %v2613
  %3684 = vmatprep.subr.bf16.mxu0 %v2622
  %3685 = vmatpush1.bf16.msra.mxu0 %v2621
  %3686 = vmatprep.subr.bf16.mxu0 %v2630
  %3687 = vmatpush1.bf16.msra.mxu0 %v2629
  %3688 = vmatprep.subr.bf16.mxu0 %v2638
  %3689 = vmatpush1.bf16.msra.mxu0 %v2637
  %3690 = vmatprep.subr.bf16.mxu0 %v2646
  %3691 = vmatpush1.bf16.msra.mxu0 %v2645
  %3692 = vmatprep.subr.bf16.mxu0 %v2654
  %3693 = vmatpush1.bf16.msra.mxu0 %v2653
  %3694 = vmatprep.subr.bf16.mxu0 %v2662
  %3695 = vmatpush1.bf16.msra.mxu0 %v2661
  %3696 = vmatprep.subr.bf16.mxu0 %v2670
  %3697 = vmatpush1.bf16.msra.mxu0 %v2669
  %3698 = vmatprep.subr.bf16.mxu0 %v2678
  %3699 = vmatpush1.bf16.msra.mxu0 %v2677
  %3700 = vmatprep.subr.bf16.mxu0 %v2686
  %3701 = vmatpush1.bf16.msra.mxu0 %v2685
  %3702 = vmatprep.subr.bf16.mxu0 %v2694
  %3703 = vmatpush1.bf16.msra.mxu0 %v2693
  %3704 = vmatprep.mubr.bf16.mxu0 %v348
  %3705 = vmatmul.mubr.bf16.gmra.mrb[0].mxu0 %v347
  %v3706 = vpop.f32.mrb[0].mxu0
  %v3707 = vadd.f32 %v3666, %v3706
  %v3708 = vpop.f32.mrb[0].mxu0
  %v3709 = vadd.f32 %v3668, %v3708
  %v3710 = vpop.f32.mrb[0].mxu0
  %v3711 = vpop.f32.mrb[0].mxu0
  %3712 = vdwg.mxu0
  %3713 = vmatprep.subr.bf16.mxu0 %v2702
  %3714 = vmatpush1.bf16.msra.mxu0 %v2701
  %3715 = vmatprep.subr.bf16.mxu0 %v2710
  %3716 = vmatpush1.bf16.msra.mxu0 %v2709
  %3717 = vmatprep.subr.bf16.mxu0 %v2718
  %3718 = vmatpush1.bf16.msra.mxu0 %v2717
  %3719 = vmatprep.subr.bf16.mxu0 %v2726
  %3720 = vmatpush1.bf16.msra.mxu0 %v2725
  %3721 = vmatprep.subr.bf16.mxu0 %v2734
  %3722 = vmatpush1.bf16.msra.mxu0 %v2733
  %3723 = vmatprep.subr.bf16.mxu0 %v2742
  %3724 = vmatpush1.bf16.msra.mxu0 %v2741
  %3725 = vmatprep.subr.bf16.mxu0 %v2750
  %3726 = vmatpush1.bf16.msra.mxu0 %v2749
  %3727 = vmatprep.subr.bf16.mxu0 %v2758
  %3728 = vmatpush1.bf16.msra.mxu0 %v2757
  %3729 = vmatprep.subr.bf16.mxu0 %v2766
  %3730 = vmatpush1.bf16.msra.mxu0 %v2765
  %3731 = vmatprep.subr.bf16.mxu0 %v2774
  %3732 = vmatpush1.bf16.msra.mxu0 %v2773
  %3733 = vmatprep.subr.bf16.mxu0 %v2782
  %3734 = vmatpush1.bf16.msra.mxu0 %v2781
  %3735 = vmatprep.subr.bf16.mxu0 %v2790
  %3736 = vmatpush1.bf16.msra.mxu0 %v2789
  %3737 = vmatprep.subr.bf16.mxu0 %v2798
  %3738 = vmatpush1.bf16.msra.mxu0 %v2797
  %3739 = vmatprep.subr.bf16.mxu0 %v2806
  %3740 = vmatpush1.bf16.msra.mxu0 %v2805
  %3741 = vmatprep.subr.bf16.mxu0 %v2814
  %3742 = vmatpush1.bf16.msra.mxu0 %v2813
  %3743 = vmatprep.subr.bf16.mxu0 %v2822
  %3744 = vmatpush1.bf16.msra.mxu0 %v2821
  %3745 = vmatprep.mubr.bf16.mxu0 %v350
  %3746 = vmatmul.mubr.bf16.gmra.mrb[0].mxu0 %v349
  %v3747 = vpop.f32.mrb[0].mxu0
  %v3748 = vadd.f32 %v3707, %v3747
  %v3749 = vpop.f32.mrb[0].mxu0
  %v3750 = vadd.f32 %v3709, %v3749
  %v3751 = vpop.f32.mrb[0].mxu0
  %v3752 = vpop.f32.mrb[0].mxu0
  %3753 = vdwg.mxu0
  %3754 = vmatprep.subr.bf16.mxu0 %v2830
  %3755 = vmatpush1.bf16.msra.mxu0 %v2829
  %3756 = vmatprep.subr.bf16.mxu0 %v2838
  %3757 = vmatpush1.bf16.msra.mxu0 %v2837
  %3758 = vmatprep.subr.bf16.mxu0 %v2846
  %3759 = vmatpush1.bf16.msra.mxu0 %v2845
  %3760 = vmatprep.subr.bf16.mxu0 %v2854
  %3761 = vmatpush1.bf16.msra.mxu0 %v2853
  %3762 = vmatprep.subr.bf16.mxu0 %v2862
  %3763 = vmatpush1.bf16.msra.mxu0 %v2861
  %3764 = vmatprep.subr.bf16.mxu0 %v2870
  %3765 = vmatpush1.bf16.msra.mxu0 %v2869
  %3766 = vmatprep.subr.bf16.mxu0 %v2878
  %3767 = vmatpush1.bf16.msra.mxu0 %v2877
  %3768 = vmatprep.subr.bf16.mxu0 %v2886
  %3769 = vmatpush1.bf16.msra.mxu0 %v2885
  %3770 = vmatprep.subr.bf16.mxu0 %v2894
  %3771 = vmatpush1.bf16.msra.mxu0 %v2893
  %3772 = vmatprep.subr.bf16.mxu0 %v2902
  %3773 = vmatpush1.bf16.msra.mxu0 %v2901
  %3774 = vmatprep.subr.bf16.mxu0 %v2910
  %3775 = vmatpush1.bf16.msra.mxu0 %v2909
  %3776 = vmatprep.subr.bf16.mxu0 %v2918
  %3777 = vmatpush1.bf16.msra.mxu0 %v2917
  %3778 = vmatprep.subr.bf16.mxu0 %v2926
  %3779 = vmatpush1.bf16.msra.mxu0 %v2925
  %3780 = vmatprep.subr.bf16.mxu0 %v2934
  %3781 = vmatpush1.bf16.msra.mxu0 %v2933
  %3782 = vmatprep.subr.bf16.mxu0 %v2942
  %3783 = vmatpush1.bf16.msra.mxu0 %v2941
  %3784 = vmatprep.subr.bf16.mxu0 %v2950
  %3785 = vmatpush1.bf16.msra.mxu0 %v2949
  %3786 = vmatprep.mubr.bf16.mxu0 %v352
  %3787 = vmatmul.mubr.bf16.gmra.mrb[0].mxu0 %v351
  %v3788 = vpop.f32.mrb[0].mxu0
  %v3789 = vadd.f32 %v3748, %v3788
  %v3790 = vpop.f32.mrb[0].mxu0
  %v3791 = vadd.f32 %v3750, %v3790
  %v3792 = vpop.f32.mrb[0].mxu0
  %v3793 = vpop.f32.mrb[0].mxu0
  %3794 = vdwg.mxu0
  %3795 = vmatprep.subr.bf16.mxu0 %v2448
  %3796 = vmatpush1.bf16.msra.mxu0 %v2447
  %3797 = vmatprep.subr.bf16.mxu0 %v2456
  %3798 = vmatpush1.bf16.msra.mxu0 %v2455
  %3799 = vmatprep.subr.bf16.mxu0 %v2464
  %3800 = vmatpush1.bf16.msra.mxu0 %v2463
  %3801 = vmatprep.subr.bf16.mxu0 %v2472
  %3802 = vmatpush1.bf16.msra.mxu0 %v2471
  %3803 = vmatprep.subr.bf16.mxu0 %v2480
  %3804 = vmatpush1.bf16.msra.mxu0 %v2479
  %3805 = vmatprep.subr.bf16.mxu0 %v2488
  %3806 = vmatpush1.bf16.msra.mxu0 %v2487
  %3807 = vmatprep.subr.bf16.mxu0 %v2496
  %3808 = vmatpush1.bf16.msra.mxu0 %v2495
  %3809 = vmatprep.subr.bf16.mxu0 %v2504
  %3810 = vmatpush1.bf16.msra.mxu0 %v2503
  %3811 = vmatprep.subr.bf16.mxu0 %v2512
  %3812 = vmatpush1.bf16.msra.mxu0 %v2511
  %3813 = vmatprep.subr.bf16.mxu0 %v2520
  %3814 = vmatpush1.bf16.msra.mxu0 %v2519
  %3815 = vmatprep.subr.bf16.mxu0 %v2528
  %3816 = vmatpush1.bf16.msra.mxu0 %v2527
  %3817 = vmatprep.subr.bf16.mxu0 %v2536
  %3818 = vmatpush1.bf16.msra.mxu0 %v2535
  %3819 = vmatprep.subr.bf16.mxu0 %v2544
  %3820 = vmatpush1.bf16.msra.mxu0 %v2543
  %3821 = vmatprep.subr.bf16.mxu0 %v2552
  %3822 = vmatpush1.bf16.msra.mxu0 %v2551
  %3823 = vmatprep.subr.bf16.mxu0 %v2560
  %3824 = vmatpush1.bf16.msra.mxu0 %v2559
  %3825 = vmatprep.subr.bf16.mxu0 %v2568
  %3826 = vmatpush1.bf16.msra.mxu0 %v2567
  %3827 = vmatprep.mubr.bf16.mxu0 %v346
  %3828 = vmatmul.mubr.bf16.gmra.mrb[0].mxu0 %v345
  %v3829 = vpop.f32.mrb[0].mxu0
  %v3830 = vadd.f32 %v886, %v3829
  %v3831 = vpop.f32.mrb[0].mxu0
  %v3832 = vadd.f32 %v890, %v3831
  %v3833 = vpop.f32.mrb[0].mxu0
  %v3834 = vpop.f32.mrb[0].mxu0
  %3835 = vdwg.mxu0
  %3836 = vmatprep.subr.bf16.mxu0 %v2576
  %3837 = vmatpush1.bf16.msra.mxu0 %v2575
  %3838 = vmatprep.subr.bf16.mxu0 %v2584
  %3839 = vmatpush1.bf16.msra.mxu0 %v2583
  %3840 = vmatprep.subr.bf16.mxu0 %v2592
  %3841 = vmatpush1.bf16.msra.mxu0 %v2591
  %3842 = vmatprep.subr.bf16.mxu0 %v2600
  %3843 = vmatpush1.bf16.msra.mxu0 %v2599
  %3844 = vmatprep.subr.bf16.mxu0 %v2608
  %3845 = vmatpush1.bf16.msra.mxu0 %v2607
  %3846 = vmatprep.subr.bf16.mxu0 %v2616
  %3847 = vmatpush1.bf16.msra.mxu0 %v2615
  %3848 = vmatprep.subr.bf16.mxu0 %v2624
  %3849 = vmatpush1.bf16.msra.mxu0 %v2623
  %3850 = vmatprep.subr.bf16.mxu0 %v2632
  %3851 = vmatpush1.bf16.msra.mxu0 %v2631
  %3852 = vmatprep.subr.bf16.mxu0 %v2640
  %3853 = vmatpush1.bf16.msra.mxu0 %v2639
  %3854 = vmatprep.subr.bf16.mxu0 %v2648
  %3855 = vmatpush1.bf16.msra.mxu0 %v2647
  %3856 = vmatprep.subr.bf16.mxu0 %v2656
  %3857 = vmatpush1.bf16.msra.mxu0 %v2655
  %3858 = vmatprep.subr.bf16.mxu0 %v2664
  %3859 = vmatpush1.bf16.msra.mxu0 %v2663
  %3860 = vmatprep.subr.bf16.mxu0 %v2672
  %3861 = vmatpush1.bf16.msra.mxu0 %v2671
  %3862 = vmatprep.subr.bf16.mxu0 %v2680
  %3863 = vmatpush1.bf16.msra.mxu0 %v2679
  %3864 = vmatprep.subr.bf16.mxu0 %v2688
  %3865 = vmatpush1.bf16.msra.mxu0 %v2687
  %3866 = vmatprep.subr.bf16.mxu0 %v2696
  %3867 = vmatpush1.bf16.msra.mxu0 %v2695
  %3868 = vmatprep.mubr.bf16.mxu0 %v348
  %3869 = vmatmul.mubr.bf16.gmra.mrb[0].mxu0 %v347
  %v3870 = vpop.f32.mrb[0].mxu0
  %v3871 = vadd.f32 %v3830, %v3870
  %v3872 = vpop.f32.mrb[0].mxu0
  %v3873 = vadd.f32 %v3832, %v3872
  %v3874 = vpop.f32.mrb[0].mxu0
  %v3875 = vpop.f32.mrb[0].mxu0
  %3876 = vdwg.mxu0
  %3877 = vmatprep.subr.bf16.mxu0 %v2704
  %3878 = vmatpush1.bf16.msra.mxu0 %v2703
  %3879 = vmatprep.subr.bf16.mxu0 %v2712
  %3880 = vmatpush1.bf16.msra.mxu0 %v2711
  %3881 = vmatprep.subr.bf16.mxu0 %v2720
  %3882 = vmatpush1.bf16.msra.mxu0 %v2719
  %3883 = vmatprep.subr.bf16.mxu0 %v2728
  %3884 = vmatpush1.bf16.msra.mxu0 %v2727
  %3885 = vmatprep.subr.bf16.mxu0 %v2736
  %3886 = vmatpush1.bf16.msra.mxu0 %v2735
  %3887 = vmatprep.subr.bf16.mxu0 %v2744
  %3888 = vmatpush1.bf16.msra.mxu0 %v2743
  %3889 = vmatprep.subr.bf16.mxu0 %v2752
  %3890 = vmatpush1.bf16.msra.mxu0 %v2751
  %3891 = vmatprep.subr.bf16.mxu0 %v2760
  %3892 = vmatpush1.bf16.msra.mxu0 %v2759
  %3893 = vmatprep.subr.bf16.mxu0 %v2768
  %3894 = vmatpush1.bf16.msra.mxu0 %v2767
  %3895 = vmatprep.subr.bf16.mxu0 %v2776
  %3896 = vmatpush1.bf16.msra.mxu0 %v2775
  %3897 = vmatprep.subr.bf16.mxu0 %v2784
  %3898 = vmatpush1.bf16.msra.mxu0 %v2783
  %3899 = vmatprep.subr.bf16.mxu0 %v2792
  %3900 = vmatpush1.bf16.msra.mxu0 %v2791
  %3901 = vmatprep.subr.bf16.mxu0 %v2800
  %3902 = vmatpush1.bf16.msra.mxu0 %v2799
  %3903 = vmatprep.subr.bf16.mxu0 %v2808
  %3904 = vmatpush1.bf16.msra.mxu0 %v2807
  %3905 = vmatprep.subr.bf16.mxu0 %v2816
  %3906 = vmatpush1.bf16.msra.mxu0 %v2815
  %3907 = vmatprep.subr.bf16.mxu0 %v2824
  %3908 = vmatpush1.bf16.msra.mxu0 %v2823
  %3909 = vmatprep.mubr.bf16.mxu0 %v350
  %3910 = vmatmul.mubr.bf16.gmra.mrb[0].mxu0 %v349
  %v3911 = vpop.f32.mrb[0].mxu0
  %v3912 = vadd.f32 %v3871, %v3911
  %v3913 = vpop.f32.mrb[0].mxu0
  %v3914 = vadd.f32 %v3873, %v3913
  %v3915 = vpop.f32.mrb[0].mxu0
  %v3916 = vpop.f32.mrb[0].mxu0
  %3917 = vdwg.mxu0
  %3918 = vmatprep.subr.bf16.mxu0 %v2832
  %3919 = vmatpush1.bf16.msra.mxu0 %v2831
  %3920 = vmatprep.subr.bf16.mxu0 %v2840
  %3921 = vmatpush1.bf16.msra.mxu0 %v2839
  %3922 = vmatprep.subr.bf16.mxu0 %v2848
  %3923 = vmatpush1.bf16.msra.mxu0 %v2847
  %3924 = vmatprep.subr.bf16.mxu0 %v2856
  %3925 = vmatpush1.bf16.msra.mxu0 %v2855
  %3926 = vmatprep.subr.bf16.mxu0 %v2864
  %3927 = vmatpush1.bf16.msra.mxu0 %v2863
  %3928 = vmatprep.subr.bf16.mxu0 %v2872
  %3929 = vmatpush1.bf16.msra.mxu0 %v2871
  %3930 = vmatprep.subr.bf16.mxu0 %v2880
  %3931 = vmatpush1.bf16.msra.mxu0 %v2879
  %3932 = vmatprep.subr.bf16.mxu0 %v2888
  %3933 = vmatpush1.bf16.msra.mxu0 %v2887
  %3934 = vmatprep.subr.bf16.mxu0 %v2896
  %3935 = vmatpush1.bf16.msra.mxu0 %v2895
  %3936 = vmatprep.subr.bf16.mxu0 %v2904
  %3937 = vmatpush1.bf16.msra.mxu0 %v2903
  %3938 = vmatprep.subr.bf16.mxu0 %v2912
  %3939 = vmatpush1.bf16.msra.mxu0 %v2911
  %3940 = vmatprep.subr.bf16.mxu0 %v2920
  %3941 = vmatpush1.bf16.msra.mxu0 %v2919
  %3942 = vmatprep.subr.bf16.mxu0 %v2928
  %3943 = vmatpush1.bf16.msra.mxu0 %v2927
  %3944 = vmatprep.subr.bf16.mxu0 %v2936
  %3945 = vmatpush1.bf16.msra.mxu0 %v2935
  %3946 = vmatprep.subr.bf16.mxu0 %v2944
  %3947 = vmatpush1.bf16.msra.mxu0 %v2943
  %3948 = vmatprep.subr.bf16.mxu0 %v2952
  %3949 = vmatpush1.bf16.msra.mxu0 %v2951
  %3950 = vmatprep.mubr.bf16.mxu0 %v352
  %3951 = vmatmul.mubr.bf16.gmra.mrb[0].mxu0 %v351
  %v3952 = vpop.f32.mrb[0].mxu0
  %v3953 = vadd.f32 %v3912, %v3952
  %v3954 = vpop.f32.mrb[0].mxu0
  %v3955 = vadd.f32 %v3914, %v3954
  %v3956 = vpop.f32.mrb[0].mxu0
  %v3957 = vpop.f32.mrb[0].mxu0
  %3958 = vdwg.mxu0
  %3959 = vmatprep.subr.bf16.mxu0 %v2450
  %3960 = vmatpush1.bf16.msra.mxu0 %v2449
  %3961 = vmatprep.subr.bf16.mxu0 %v2458
  %3962 = vmatpush1.bf16.msra.mxu0 %v2457
  %3963 = vmatprep.subr.bf16.mxu0 %v2466
  %3964 = vmatpush1.bf16.msra.mxu0 %v2465
  %3965 = vmatprep.subr.bf16.mxu0 %v2474
  %3966 = vmatpush1.bf16.msra.mxu0 %v2473
  %3967 = vmatprep.subr.bf16.mxu0 %v2482
  %3968 = vmatpush1.bf16.msra.mxu0 %v2481
  %3969 = vmatprep.subr.bf16.mxu0 %v2490
  %3970 = vmatpush1.bf16.msra.mxu0 %v2489
  %3971 = vmatprep.subr.bf16.mxu0 %v2498
  %3972 = vmatpush1.bf16.msra.mxu0 %v2497
  %3973 = vmatprep.subr.bf16.mxu0 %v2506
  %3974 = vmatpush1.bf16.msra.mxu0 %v2505
  %3975 = vmatprep.subr.bf16.mxu0 %v2514
  %3976 = vmatpush1.bf16.msra.mxu0 %v2513
  %3977 = vmatprep.subr.bf16.mxu0 %v2522
  %3978 = vmatpush1.bf16.msra.mxu0 %v2521
  %3979 = vmatprep.subr.bf16.mxu0 %v2530
  %3980 = vmatpush1.bf16.msra.mxu0 %v2529
  %3981 = vmatprep.subr.bf16.mxu0 %v2538
  %3982 = vmatpush1.bf16.msra.mxu0 %v2537
  %3983 = vmatprep.subr.bf16.mxu0 %v2546
  %3984 = vmatpush1.bf16.msra.mxu0 %v2545
  %3985 = vmatprep.subr.bf16.mxu0 %v2554
  %3986 = vmatpush1.bf16.msra.mxu0 %v2553
  %3987 = vmatprep.subr.bf16.mxu0 %v2562
  %3988 = vmatpush1.bf16.msra.mxu0 %v2561
  %3989 = vmatprep.subr.bf16.mxu0 %v2570
  %3990 = vmatpush1.bf16.msra.mxu0 %v2569
  %3991 = vmatprep.mubr.bf16.mxu0 %v346
  %3992 = vmatmul.mubr.bf16.gmra.mrb[0].mxu0 %v345
  %v3993 = vpop.f32.mrb[0].mxu0
  %v3994 = vadd.f32 %v894, %v3993
  %v3995 = vpop.f32.mrb[0].mxu0
  %v3996 = vadd.f32 %v898, %v3995
  %v3997 = vpop.f32.mrb[0].mxu0
  %v3998 = vpop.f32.mrb[0].mxu0
  %3999 = vdwg.mxu0
  %4000 = vmatprep.subr.bf16.mxu0 %v2578
  %4001 = vmatpush1.bf16.msra.mxu0 %v2577
  %4002 = vmatprep.subr.bf16.mxu0 %v2586
  %4003 = vmatpush1.bf16.msra.mxu0 %v2585
  %4004 = vmatprep.subr.bf16.mxu0 %v2594
  %4005 = vmatpush1.bf16.msra.mxu0 %v2593
  %4006 = vmatprep.subr.bf16.mxu0 %v2602
  %4007 = vmatpush1.bf16.msra.mxu0 %v2601
  %4008 = vmatprep.subr.bf16.mxu0 %v2610
  %4009 = vmatpush1.bf16.msra.mxu0 %v2609
  %4010 = vmatprep.subr.bf16.mxu0 %v2618
  %4011 = vmatpush1.bf16.msra.mxu0 %v2617
  %4012 = vmatprep.subr.bf16.mxu0 %v2626
  %4013 = vmatpush1.bf16.msra.mxu0 %v2625
  %4014 = vmatprep.subr.bf16.mxu0 %v2634
  %4015 = vmatpush1.bf16.msra.mxu0 %v2633
  %4016 = vmatprep.subr.bf16.mxu0 %v2642
  %4017 = vmatpush1.bf16.msra.mxu0 %v2641
  %4018 = vmatprep.subr.bf16.mxu0 %v2650
  %4019 = vmatpush1.bf16.msra.mxu0 %v2649
  %4020 = vmatprep.subr.bf16.mxu0 %v2658
  %4021 = vmatpush1.bf16.msra.mxu0 %v2657
  %4022 = vmatprep.subr.bf16.mxu0 %v2666
  %4023 = vmatpush1.bf16.msra.mxu0 %v2665
  %4024 = vmatprep.subr.bf16.mxu0 %v2674
  %4025 = vmatpush1.bf16.msra.mxu0 %v2673
  %4026 = vmatprep.subr.bf16.mxu0 %v2682
  %4027 = vmatpush1.bf16.msra.mxu0 %v2681
  %4028 = vmatprep.subr.bf16.mxu0 %v2690
  %4029 = vmatpush1.bf16.msra.mxu0 %v2689
  %4030 = vmatprep.subr.bf16.mxu0 %v2698
  %4031 = vmatpush1.bf16.msra.mxu0 %v2697
  %4032 = vmatprep.mubr.bf16.mxu0 %v348
  %4033 = vmatmul.mubr.bf16.gmra.mrb[0].mxu0 %v347
  %v4034 = vpop.f32.mrb[0].mxu0
  %v4035 = vadd.f32 %v3994, %v4034
  %v4036 = vpop.f32.mrb[0].mxu0
  %v4037 = vadd.f32 %v3996, %v4036
  %v4038 = vpop.f32.mrb[0].mxu0
  %v4039 = vpop.f32.mrb[0].mxu0
  %4040 = vdwg.mxu0
  %4041 = vmatprep.subr.bf16.mxu0 %v2706
  %4042 = vmatpush1.bf16.msra.mxu0 %v2705
  %4043 = vmatprep.subr.bf16.mxu0 %v2714
  %4044 = vmatpush1.bf16.msra.mxu0 %v2713
  %4045 = vmatprep.subr.bf16.mxu0 %v2722
  %4046 = vmatpush1.bf16.msra.mxu0 %v2721
  %4047 = vmatprep.subr.bf16.mxu0 %v2730
  %4048 = vmatpush1.bf16.msra.mxu0 %v2729
  %4049 = vmatprep.subr.bf16.mxu0 %v2738
  %4050 = vmatpush1.bf16.msra.mxu0 %v2737
  %4051 = vmatprep.subr.bf16.mxu0 %v2746
  %4052 = vmatpush1.bf16.msra.mxu0 %v2745
  %4053 = vmatprep.subr.bf16.mxu0 %v2754
  %4054 = vmatpush1.bf16.msra.mxu0 %v2753
  %4055 = vmatprep.subr.bf16.mxu0 %v2762
  %4056 = vmatpush1.bf16.msra.mxu0 %v2761
  %4057 = vmatprep.subr.bf16.mxu0 %v2770
  %4058 = vmatpush1.bf16.msra.mxu0 %v2769
  %4059 = vmatprep.subr.bf16.mxu0 %v2778
  %4060 = vmatpush1.bf16.msra.mxu0 %v2777
  %4061 = vmatprep.subr.bf16.mxu0 %v2786
  %4062 = vmatpush1.bf16.msra.mxu0 %v2785
  %4063 = vmatprep.subr.bf16.mxu0 %v2794
  %4064 = vmatpush1.bf16.msra.mxu0 %v2793
  %4065 = vmatprep.subr.bf16.mxu0 %v2802
  %4066 = vmatpush1.bf16.msra.mxu0 %v2801
  %4067 = vmatprep.subr.bf16.mxu0 %v2810
  %4068 = vmatpush1.bf16.msra.mxu0 %v2809
  %4069 = vmatprep.subr.bf16.mxu0 %v2818
  %4070 = vmatpush1.bf16.msra.mxu0 %v2817
  %4071 = vmatprep.subr.bf16.mxu0 %v2826
  %4072 = vmatpush1.bf16.msra.mxu0 %v2825
  %4073 = vmatprep.mubr.bf16.mxu0 %v350
  %4074 = vmatmul.mubr.bf16.gmra.mrb[0].mxu0 %v349
  %v4075 = vpop.f32.mrb[0].mxu0
  %v4076 = vadd.f32 %v4035, %v4075
  %v4077 = vpop.f32.mrb[0].mxu0
  %v4078 = vadd.f32 %v4037, %v4077
  %v4079 = vpop.f32.mrb[0].mxu0
  %v4080 = vpop.f32.mrb[0].mxu0
  %4081 = vdwg.mxu0
  %4082 = vmatprep.subr.bf16.mxu0 %v2834
  %4083 = vmatpush1.bf16.msra.mxu0 %v2833
  %4084 = vmatprep.subr.bf16.mxu0 %v2842
  %4085 = vmatpush1.bf16.msra.mxu0 %v2841
  %4086 = vmatprep.subr.bf16.mxu0 %v2850
  %4087 = vmatpush1.bf16.msra.mxu0 %v2849
  %4088 = vmatprep.subr.bf16.mxu0 %v2858
  %4089 = vmatpush1.bf16.msra.mxu0 %v2857
  %4090 = vmatprep.subr.bf16.mxu0 %v2866
  %4091 = vmatpush1.bf16.msra.mxu0 %v2865
  %4092 = vmatprep.subr.bf16.mxu0 %v2874
  %4093 = vmatpush1.bf16.msra.mxu0 %v2873
  %4094 = vmatprep.subr.bf16.mxu0 %v2882
  %4095 = vmatpush1.bf16.msra.mxu0 %v2881
  %4096 = vmatprep.subr.bf16.mxu0 %v2890
  %4097 = vmatpush1.bf16.msra.mxu0 %v2889
  %4098 = vmatprep.subr.bf16.mxu0 %v2898
  %4099 = vmatpush1.bf16.msra.mxu0 %v2897
  %4100 = vmatprep.subr.bf16.mxu0 %v2906
  %4101 = vmatpush1.bf16.msra.mxu0 %v2905
  %4102 = vmatprep.subr.bf16.mxu0 %v2914
  %4103 = vmatpush1.bf16.msra.mxu0 %v2913
  %4104 = vmatprep.subr.bf16.mxu0 %v2922
  %4105 = vmatpush1.bf16.msra.mxu0 %v2921
  %4106 = vmatprep.subr.bf16.mxu0 %v2930
  %4107 = vmatpush1.bf16.msra.mxu0 %v2929
  %4108 = vmatprep.subr.bf16.mxu0 %v2938
  %4109 = vmatpush1.bf16.msra.mxu0 %v2937
  %4110 = vmatprep.subr.bf16.mxu0 %v2946
  %4111 = vmatpush1.bf16.msra.mxu0 %v2945
  %4112 = vmatprep.subr.bf16.mxu0 %v2954
  %4113 = vmatpush1.bf16.msra.mxu0 %v2953
  %4114 = vmatprep.mubr.bf16.mxu0 %v352
  %4115 = vmatmul.mubr.bf16.gmra.mrb[0].mxu0 %v351
  %v4116 = vpop.f32.mrb[0].mxu0
  %v4117 = vadd.f32 %v4076, %v4116
  %v4118 = vpop.f32.mrb[0].mxu0
  %v4119 = vadd.f32 %v4078, %v4118
  %v4120 = vpop.f32.mrb[0].mxu0
  %v4121 = vpop.f32.mrb[0].mxu0
  %4122 = vdwg.mxu0
  %v4123 = vmax.f32 %v3625, 0.0
  %v4124 = vmax.f32 %v3627, 0.0
  %v4125 = vmax.f32 %v3789, 0.0
  %v4126 = vmax.f32 %v3791, 0.0
  %v4127 = vmax.f32 %v3953, 0.0
  %v4128 = vmax.f32 %v3955, 0.0
  %v4129 = vmax.f32 %v4117, 0.0
  %v4130 = vmax.f32 %v4119, 0.0
  %v4131 = vld [vmem:[%s5] sm:$0xff]
  %v4133 = vlaneseq
  %v4134 = vshrl.u32 %v4133, 7
  %v4135 = vsub.s32 0, %v4134
  %v4136 = vrot.slane %v4131, %v4135
  %v4137 = vlaneseq
  %v4138 = vshrl.u32 %v4137, 7
  %v4139 = vsub.s32 1, %v4138
  %v4140 = vrot.slane %v4131, %v4139
  %v4141 = vlaneseq
  %v4142 = vshrl.u32 %v4141, 7
  %v4143 = vsub.s32 2, %v4142
  %v4144 = vrot.slane %v4131, %v4143
  %v4145 = vlaneseq
  %v4146 = vshrl.u32 %v4145, 7
  %v4147 = vsub.s32 3, %v4146
  %v4148 = vrot.slane %v4131, %v4147
  %v4149 = vlaneseq
  %v4150 = vshrl.u32 %v4149, 7
  %v4151 = vsub.s32 4, %v4150
  %v4152 = vrot.slane %v4131, %v4151
  %v4153 = vlaneseq
  %v4154 = vshrl.u32 %v4153, 7
  %v4155 = vsub.s32 5, %v4154
  %v4156 = vrot.slane %v4131, %v4155
  %v4157 = vlaneseq
  %v4158 = vshrl.u32 %v4157, 7
  %v4159 = vsub.s32 6, %v4158
  %v4160 = vrot.slane %v4131, %v4159
  %v4161 = vlaneseq
  %v4162 = vshrl.u32 %v4161, 7
  %v4163 = vsub.s32 7, %v4162
  %v4164 = vrot.slane %v4131, %v4163
  %v4173 = vmul.f32 %v4123, %v4136
  %v4174 = vmul.f32 %v4124, %v4140
  %v4175 = vmul.f32 %v4125, %v4144
  %v4176 = vmul.f32 %v4126, %v4148
  %v4177 = vmul.f32 %v4127, %v4152
  %v4178 = vmul.f32 %v4128, %v4156
  %v4179 = vmul.f32 %v4129, %v4160
  %v4180 = vmul.f32 %v4130, %v4164
  %v4181 = vadd.f32 %v4173, %v4174
  %v4182 = vadd.f32 %v4181, %v4175
  %v4183 = vadd.f32 %v4182, %v4176
  %v4184 = vadd.f32 %v4183, %v4177
  %v4185 = vadd.f32 %v4184, %v4178
  %v4186 = vadd.f32 %v4185, %v4179
  %v4187 = vadd.f32 %v4186, %v4180
  %4188 = vadd.xlane.f32.xlu0 %v4187
  %v4189 = vpop.xlane.xlu0 %4188
  %v4190 = vld [vmem:[#allocation2] sm:$0x1]
  %v4192 = vlaneseq
  %v4193 = vshrl.u32 %v4192, 7
  %v4194 = vsub.s32 0, %v4193
  %v4195 = vrot.slane %v4190, %v4194
  %v4197 = vadd.f32 %v4189, %v4195
  %v4198 = vxor.u32 %v4197, 2147483648
  %v4199 = vmul.f32 %v4198, 1.442695
  %v4200 = vpow.pop %v4199
  %v4201 = vadd.f32 %v4200, 1.0
  %v4202 = vrcp.pop %v4201
  %v4203 = vmul.f32 1.0, %v4202
  %vm4204 = vcmask 7168
  %4205 = vst.msk [vmem:[%s7] sm:$0xff] %vm4204, %v4203
  // Predicated region
  $region30: #{tfmlp_forward.1} parent=0 // pred_check
    _
  $region31: #{tfmlp_forward.1} parent=0 // pred_check_branch
    %4207 = sbr.rel (0) target = $region33
  $region32: #{tfmlp_forward.1} parent=0 // pred_region
    _
  $region33: #{tfmlp_forward.1} parent=0 // pred_fallthru
    _
  // Predicated region
  $region34: #{tfmlp_forward.1} parent=0 // pred_check
    _
  $region35: #{tfmlp_forward.1} parent=0 // pred_check_branch
    %4209 = sbr.rel (0) target = $region37
  $region36: #{tfmlp_forward.1} parent=0 // pred_region
    _
  $region37: #{tfmlp_forward.1} parent=0 // pred_fallthru
    _

</llo_original>
